<compile_context>
chip_gen: v7x
topology: tpu7x:2x2x1
jax: 0.10.0
libtpu: 0.0.40
codegen_flags: <defaults>
</compile_context>

<pallas_src>
import math
from functools import partial

import jax
import jax.numpy as jnp
from jax.experimental import pallas as pl
from jax.experimental.pallas import tpu as pltpu


# -----------------------------------------------------------------------------
# Config (small, consistent with the module: prefix -> P tokens of size D)
# -----------------------------------------------------------------------------
PREFIX_LEN  = 4      # prefix_length
PREFIX_SIZE = 16     # clip feature size (orig 512)
D_MODEL     = 32     # gpt_embedding_size (orig 768)
N_HEADS     = 4
HEAD_DIM    = D_MODEL // N_HEADS
N_LAYERS    = 2      # orig gpt2 has 12; synthetic small stack
VOCAB       = 128    # orig 50257
SEQ_LEN     = 8      # caption token length
MAX_POS     = 32
MAP_HIDDEN  = D_MODEL * PREFIX_LEN // 2   # clip_project hidden width

NEG_BIAS = -1e9      # single moderate mask sentinel (review: avoid mixed / fp-min)


def _ln(x, g, b, eps=1e-5):
    mu = jnp.mean(x, axis=-1, keepdims=True)
    var = jnp.mean(jnp.square(x - mu), axis=-1, keepdims=True)
    return (x - mu) * jax.lax.rsqrt(var + eps) * g + b


# -----------------------------------------------------------------------------
# Single Pallas kernel: clip_project MLP (step 0) + whole GPT-2 stack + LM head
#   grid = (N_LAYERS,), residual stream resident in VMEM scratch, per-layer
#   fused weights streamed via BlockSpecs.
# -----------------------------------------------------------------------------
def _gpt_stack_kernel(
    base_ref, bias_ref, prefix_ref, mw1_ref, mb1_ref, mw2_ref, mb2_ref,
    ln1_g, ln1_b, w_qkv, b_qkv, w_o, b_o,
    ln2_g, ln2_b, w_fc, b_fc, w_proj, b_proj,
    lnf_g, lnf_b, wte_t,
    logits_ref,
    x_scr,
    *, nheads, prefix_len,
):
    l = pl.program_id(0)
    last = pl.num_programs(0) - 1
    B, T, D = x_scr.shape
    BT = B * T
    hd = D // nheads
    V = wte_t.shape[1]
    scale = 1.0 / math.sqrt(hd)

    # ---- step 0: fused clip_project MLP + residual-stream init ----------------
    @pl.when(l == 0)
    def _init():
        h = jnp.tanh(
            jnp.dot(prefix_ref[...], mw1_ref[...],
                    preferred_element_type=jnp.float32) + mb1_ref[...]
        )                                                      # (B, HID)
        pos = jax.lax.broadcasted_iota(jnp.int32, (B, T, D), 1)
        x0 = base_ref[...].astype(jnp.float32)                 # tok emb + wpe (zeros at prefix)
        for p in range(prefix_len):                            # static unroll (P=4)
            pp = (jnp.dot(h, mw2_ref[p], preferred_element_type=jnp.float32)
                  + mb2_ref[p])                                # (B, D) prefix embedding p
            x0 = x0 + jnp.where(pos == p, pp[:, None, :], 0.0)
        x_scr[...] = x0

    # combined additive attention bias (causal + key mask), built once per step
    bias = bias_ref[...]                                       # (B, T, T)

    # ---- one transformer block per grid step (flattened (B*T, D) stream) ------
    x = x_scr[...].reshape(BT, D)

    # LN1 -> fused QKV (single lane-dense matmul) -------------------------------
    h1 = _ln(x, ln1_g[0], ln1_b[0])
    qkv = (jnp.dot(h1, w_qkv[0], preferred_element_type=jnp.float32)
           + b_qkv[0]).reshape(B, T, 3 * D)

    # causal multi-head attention: only the (T,T) matmuls are per-head ----------
    ctx = []
    for hh in range(nheads):                                   # static unroll (H=4)
        q = qkv[:, :, hh * hd:(hh + 1) * hd]                   # (B, T, hd)
        k = qkv[:, :, D + hh * hd:D + (hh + 1) * hd]
        v = qkv[:, :, 2 * D + hh * hd:2 * D + (hh + 1) * hd]
        s = jnp.einsum('bqd,bkd->bqk', q, k,
                       preferred_element_type=jnp.float32) * scale + bias
        s = s - jnp.max(s, axis=-1, keepdims=True)
        p = jnp.exp(s)
        p = p / jnp.sum(p, axis=-1, keepdims=True)             # exact div (parity)
        ctx.append(jnp.einsum('bqk,bkd->bqd', p, v,
                              preferred_element_type=jnp.float32))
    ctx = jnp.concatenate(ctx, axis=-1).reshape(BT, D)

    # single fused output projection + residual ---------------------------------
    x = x + jnp.dot(ctx, w_o[0], preferred_element_type=jnp.float32) + b_o[0]

    # LN2 -> FC -> GELU (tanh approx == GPT-2 gelu_new) -> proj -> residual ------
    h2 = _ln(x, ln2_g[0], ln2_b[0])
    f = jnp.dot(h2, w_fc[0], preferred_element_type=jnp.float32) + b_fc[0]
    f = jax.nn.gelu(f)
    x = x + jnp.dot(f, w_proj[0], preferred_element_type=jnp.float32) + b_proj[0]

    x_scr[...] = x.reshape(B, T, D)

    # ---- final LN + tied, bias-free LM head (last step only) ------------------
    @pl.when(l == last)
    def _head():
        xf = _ln(x, lnf_g[...], lnf_b[...])
        logits = jnp.dot(xf, wte_t[...], preferred_element_type=jnp.float32)
        logits_ref[...] = logits.reshape(B, T, V).astype(logits_ref.dtype)


def gpt_forward(params, base, prefix, bias):
    """base: (B, T, D) = [zeros | token embeds] + wpe; prefix: (B, PREFIX_SIZE);
    bias: (B, T, T) additive attention bias.  Returns (B, T, VOCAB) logits."""
    B, T, D = base.shape
    L = params["w_qkv"].shape[0]
    V = params["wte_t"].shape[1]
    PS = prefix.shape[1]
    HID = params["map_w1"].shape[1]
    P = params["map_w2"].shape[0]

    const2 = lambda l: (0, 0)
    const3 = lambda l: (0, 0, 0)
    lay3 = lambda l: (l, 0, 0)

    kern = partial(_gpt_stack_kernel, nheads=N_HEADS, prefix_len=P)
    return pl.pallas_call(
        kern,
        out_shape=jax.ShapeDtypeStruct((B, T, V), jnp.float32),
        grid=(L,),
        in_specs=[
            pl.BlockSpec((B, T, D), const3),      # base embeddings (+wpe)
            pl.BlockSpec((B, T, T), const3),      # combined additive attention bias
            pl.BlockSpec((B, PS), const2),        # clip prefix features
            pl.BlockSpec((PS, HID), const2),      # map_w1
            pl.BlockSpec((1, HID), const2),       # map_b1
            pl.BlockSpec((P, HID, D), const3),    # map_w2 (per prefix position)
            pl.BlockSpec((P, 1, D), const3),      # map_b2
            pl.BlockSpec((1, 1, D), lay3),        # ln1_g
            pl.BlockSpec((1, 1, D), lay3),        # ln1_b
            pl.BlockSpec((1, D, 3 * D), lay3),    # w_qkv (fused)
            pl.BlockSpec((1, 1, 3 * D), lay3),    # b_qkv
            pl.BlockSpec((1, D, D), lay3),        # w_o (fused out-proj)
            pl.BlockSpec((1, 1, D), lay3),        # b_o
            pl.BlockSpec((1, 1, D), lay3),        # ln2_g
            pl.BlockSpec((1, 1, D), lay3),        # ln2_b
            pl.BlockSpec((1, D, 4 * D), lay3),    # w_fc
            pl.BlockSpec((1, 1, 4 * D), lay3),    # b_fc
            pl.BlockSpec((1, 4 * D, D), lay3),    # w_proj
            pl.BlockSpec((1, 1, D), lay3),        # b_proj
            pl.BlockSpec((1, D), const2),         # lnf_g
            pl.BlockSpec((1, D), const2),         # lnf_b
            pl.BlockSpec((D, V), const2),         # wte^T (tied LM head)
        ],
        out_specs=pl.BlockSpec((B, T, V), const3),
        scratch_shapes=[pltpu.VMEM((B, T, D), jnp.float32)],   # residual stream
        compiler_params=pltpu.CompilerParams(dimension_semantics=("arbitrary",)),
    )(
        base, bias, prefix,
        params["map_w1"], params["map_b1"], params["map_w2"], params["map_b2"],
        params["ln1_g"], params["ln1_b"],
        params["w_qkv"], params["b_qkv"], params["w_o"], params["b_o"],
        params["ln2_g"], params["ln2_b"],
        params["w_fc"], params["b_fc"], params["w_proj"], params["b_proj"],
        params["lnf_g"], params["lnf_b"], params["wte_t"],
    )


# -----------------------------------------------------------------------------
# ClipCaptionModel.encode_forward
# -----------------------------------------------------------------------------
def encode_forward(params, tokens, prefix, mask=None, labels=None):
    B, S = tokens.shape
    D = D_MODEL
    T = PREFIX_LEN + S

    # token-embedding gather + positional add + prefix placeholder (XLA glue)
    embedding_text = params["wte"][tokens]                               # (B, S, D)
    base = jnp.concatenate(
        [jnp.zeros((B, PREFIX_LEN, D), jnp.float32), embedding_text], axis=1
    ) + params["wpe"][:T][None]                                          # (B, T, D)

    # combined additive attention bias: causal + optional key mask, one sentinel
    row = jnp.arange(T)[:, None]
    col = jnp.arange(T)[None, :]
    causal = col <= row                                                  # (T, T)
    if mask is None:
        keep = jnp.broadcast_to(causal[None], (B, T, T))
    else:
        key_valid = (mask > 0)[:, None, :]                               # (B, 1, T)
        keep = jnp.logical_and(causal[None], key_valid)
    bias = jnp.where(keep, 0.0, NEG_BIAS).astype(jnp.float32)

    logits = gpt_forward(params, base, prefix, bias)                     # (B, T, VOCAB)

    if labels is not None:
        dummy_token = jnp.zeros((B, PREFIX_LEN), dtype=jnp.int32)        # get_dummy_token
        full_labels = jnp.concatenate([dummy_token, tokens], axis=1)
        shift_logits = logits[:, :-1, :]
        shift_labels = full_labels[:, 1:]
        logp = jax.nn.log_softmax(shift_logits, axis=-1)
        nll = -jnp.take_along_axis(logp, shift_labels[..., None], axis=-1)[..., 0]
        # ignore_index=0 (ClipCap training CE): dummy prefix positions / token id 0
        # do not contribute to the loss.
        valid = (shift_labels != 0).astype(nll.dtype)
        loss = jnp.sum(nll * valid) / jnp.maximum(jnp.sum(valid), 1.0)
        return loss, logits
    return logits


# -----------------------------------------------------------------------------
# Deterministic parameter construction (fused QKV / out-proj weight layouts)
# -----------------------------------------------------------------------------
def init_params(key):
    def nrm(k, shape, sigma=0.02):
        return sigma * jax.random.normal(k, shape, dtype=jnp.float32)

    keys = jax.random.split(key, 12)
    wte = nrm(keys[2], (VOCAB, D_MODEL))
    params = {
        # clip_project MLP: Linear(PS -> HID) -> Tanh -> Linear(HID -> P*D)
        # second layer stored as (P, HID, D): exact reshape of the (HID, P*D)
        # weight matching .view(-1, prefix_length, gpt_embedding_size).
        "map_w1": nrm(keys[0], (PREFIX_SIZE, MAP_HIDDEN)),
        "map_b1": jnp.zeros((1, MAP_HIDDEN), jnp.float32),
        "map_w2": nrm(keys[1], (PREFIX_LEN, MAP_HIDDEN, D_MODEL)),
        "map_b2": jnp.zeros((PREFIX_LEN, 1, D_MODEL), jnp.float32),
        # gpt embeddings / final LN / tied LM head (pre-transposed once)
        "wte": wte,
        "wte_t": wte.T,
        "wpe": nrm(keys[3], (MAX_POS, D_MODEL)),
        "lnf_g": jnp.ones((1, D_MODEL), jnp.float32),
        "lnf_b": jnp.zeros((1, D_MODEL), jnp.float32),
        # stacked per-layer weights, streamed over the layer grid axis;
        # QKV fused into one (D, 3D) matrix, out-proj as one (D, D) matrix.
        "ln1_g": jnp.ones((N_LAYERS, 1, D_MODEL), jnp.float32),
        "ln1_b": jnp.zeros((N_LAYERS, 1, D_MODEL), jnp.float32),
        "w_qkv": nrm(keys[4], (N_LAYERS, D_MODEL, 3 * D_MODEL)),
        "b_qkv": jnp.zeros((N_LAYERS, 1, 3 * D_MODEL), jnp.float32),
        "w_o": nrm(keys[5], (N_LAYERS, D_MODEL, D_MODEL)),
        "b_o": jnp.zeros((N_LAYERS, 1, D_MODEL), jnp.float32),
        "ln2_g": jnp.ones((N_LAYERS, 1, D_MODEL), jnp.float32),
        "ln2_b": jnp.zeros((N_LAYERS, 1, D_MODEL), jnp.float32),
        "w_fc": nrm(keys[6], (N_LAYERS, D_MODEL, 4 * D_MODEL)),
        "b_fc": jnp.zeros((N_LAYERS, 1, 4 * D_MODEL), jnp.float32),
        "w_proj": nrm(keys[7], (N_LAYERS, 4 * D_MODEL, D_MODEL)),
        "b_proj": jnp.zeros((N_LAYERS, 1, D_MODEL), jnp.float32),
    }
    return params


# TODO(synk): generate_cap / generate (host-side autoregressive greedy/sampling
# loop with tokenizer + past_key_values) is control flow around the model, not a
# kernel; only the training-path encode_forward is implemented here.

if __name__ == "__main__":
    key = jax.random.PRNGKey(0)
    kp, kt, kf = jax.random.split(key, 3)

    params = init_params(kp)
    B = 2
    tokens = jax.random.randint(kt, (B, SEQ_LEN), 0, VOCAB, dtype=jnp.int32)
    prefix = jax.random.normal(kf, (B, PREFIX_SIZE), dtype=jnp.float32)

    fwd = jax.jit(partial(encode_forward, params))
    loss, logits = fwd(tokens, prefix, None, tokens)   # labels path
    jax.block_until_ready((loss, logits))

    assert logits.shape == (B, PREFIX_LEN + SEQ_LEN, VOCAB)
    assert bool(jnp.isfinite(loss))
    assert bool(jnp.all(jnp.isfinite(logits)))
    print("KERNEL_OK")
</pallas_src>

<mosaic_0001>
module attributes {stable_mosaic.version = 11 : i64} {
  func.func @_gpt_stack_kernel(%arg0: i32, %arg1: memref<2x12x32xf32, #tpu.memory_space<vmem>>, %arg2: memref<2x12x12xf32, #tpu.memory_space<vmem>>, %arg3: memref<2x16xf32, #tpu.memory_space<vmem>>, %arg4: memref<16x64xf32, #tpu.memory_space<vmem>>, %arg5: memref<1x64xf32, #tpu.memory_space<vmem>>, %arg6: memref<4x64x32xf32, #tpu.memory_space<vmem>>, %arg7: memref<4x1x32xf32, #tpu.memory_space<vmem>>, %arg8: memref<1x1x32xf32, #tpu.memory_space<vmem>>, %arg9: memref<1x1x32xf32, #tpu.memory_space<vmem>>, %arg10: memref<1x32x96xf32, #tpu.memory_space<vmem>>, %arg11: memref<1x1x96xf32, #tpu.memory_space<vmem>>, %arg12: memref<1x32x32xf32, #tpu.memory_space<vmem>>, %arg13: memref<1x1x32xf32, #tpu.memory_space<vmem>>, %arg14: memref<1x1x32xf32, #tpu.memory_space<vmem>>, %arg15: memref<1x1x32xf32, #tpu.memory_space<vmem>>, %arg16: memref<1x32x128xf32, #tpu.memory_space<vmem>>, %arg17: memref<1x1x128xf32, #tpu.memory_space<vmem>>, %arg18: memref<1x128x32xf32, #tpu.memory_space<vmem>>, %arg19: memref<1x1x32xf32, #tpu.memory_space<vmem>>, %arg20: memref<1x32xf32, #tpu.memory_space<vmem>>, %arg21: memref<1x32xf32, #tpu.memory_space<vmem>>, %arg22: memref<32x128xf32, #tpu.memory_space<vmem>>, %arg23: memref<2x12x128xf32, #tpu.memory_space<vmem>>, %arg24: memref<2x12x32xf32, #tpu.memory_space<vmem>>) attributes {dimension_semantics = [#tpu.dimension_semantics<arbitrary>], iteration_bounds = array<i64: 2>, scalar_prefetch = 0 : i64, scratch_operands = 1 : i64, tpu.core_type = #tpu.core_type<tc>, window_params = [{pipeline_mode = #tpu.pipeline_mode<synchronous>, transform_indices = @transform_0, window_bounds = array<i64: 2, 12, 32>}, {pipeline_mode = #tpu.pipeline_mode<synchronous>, transform_indices = @transform_1, window_bounds = array<i64: 2, 12, 12>}, {pipeline_mode = #tpu.pipeline_mode<synchronous>, transform_indices = @transform_2, window_bounds = array<i64: 2, 16>}, {pipeline_mode = #tpu.pipeline_mode<synchronous>, transform_indices = @transform_3, window_bounds = array<i64: 16, 64>}, {pipeline_mode = #tpu.pipeline_mode<synchronous>, transform_indices = @transform_4, window_bounds = array<i64: 1, 64>}, {pipeline_mode = #tpu.pipeline_mode<synchronous>, transform_indices = @transform_5, window_bounds = array<i64: 4, 64, 32>}, {pipeline_mode = #tpu.pipeline_mode<synchronous>, transform_indices = @transform_6, window_bounds = array<i64: 4, 1, 32>}, {transform_indices = @transform_7, window_bounds = array<i64: 1, 1, 32>}, {transform_indices = @transform_8, window_bounds = array<i64: 1, 1, 32>}, {transform_indices = @transform_9, window_bounds = array<i64: 1, 32, 96>}, {transform_indices = @transform_10, window_bounds = array<i64: 1, 1, 96>}, {transform_indices = @transform_11, window_bounds = array<i64: 1, 32, 32>}, {transform_indices = @transform_12, window_bounds = array<i64: 1, 1, 32>}, {transform_indices = @transform_13, window_bounds = array<i64: 1, 1, 32>}, {transform_indices = @transform_14, window_bounds = array<i64: 1, 1, 32>}, {transform_indices = @transform_15, window_bounds = array<i64: 1, 32, 128>}, {transform_indices = @transform_16, window_bounds = array<i64: 1, 1, 128>}, {transform_indices = @transform_17, window_bounds = array<i64: 1, 128, 32>}, {transform_indices = @transform_18, window_bounds = array<i64: 1, 1, 32>}, {pipeline_mode = #tpu.pipeline_mode<synchronous>, transform_indices = @transform_19, window_bounds = array<i64: 1, 32>}, {pipeline_mode = #tpu.pipeline_mode<synchronous>, transform_indices = @transform_20, window_bounds = array<i64: 1, 32>}, {pipeline_mode = #tpu.pipeline_mode<synchronous>, transform_indices = @transform_21, window_bounds = array<i64: 32, 128>}, {pipeline_mode = #tpu.pipeline_mode<synchronous>, transform_indices = @transform_22, window_bounds = array<i64: 2, 12, 128>}]} {
    %c0_i32 = arith.constant 0 : i32
    %0 = arith.cmpi eq, %arg0, %c0_i32 : i32
    %1 = arith.extui %0 : i1 to i32
    %c0_i32_0 = arith.constant 0 : i32
    %2 = arith.cmpi ne, %1, %c0_i32_0 : i32
    scf.if %2 {
      %c0_83 = arith.constant 0 : index
      %c0_84 = arith.constant 0 : index
      %177 = vector.load %arg3[%c0_83, %c0_84] : memref<2x16xf32, #tpu.memory_space<vmem>>, vector<2x16xf32>
      %c0_85 = arith.constant 0 : index
      %c0_86 = arith.constant 0 : index
      %178 = vector.load %arg4[%c0_85, %c0_86] : memref<16x64xf32, #tpu.memory_space<vmem>>, vector<16x64xf32>
      %cst_87 = arith.constant dense<0.000000e+00> : vector<2x64xf32>
      %179 = tpu.matmul %177, %178, %cst_87 {dimension_numbers = #tpu.dot_dimension_numbers<[1], [0], [0], [1], [0, 0, 1, 1], [], []>} : vector<2x16xf32>, vector<16x64xf32>, vector<2x64xf32> -> vector<2x64xf32>
      %c0_88 = arith.constant 0 : index
      %c0_89 = arith.constant 0 : index
      %180 = vector.load %arg5[%c0_88, %c0_89] : memref<1x64xf32, #tpu.memory_space<vmem>>, vector<1x64xf32>
      %181 = vector.broadcast %180 : vector<1x64xf32> to vector<2x64xf32>
      %182 = arith.addf %179, %181 : vector<2x64xf32>
      %183 = math.tanh %182 : vector<2x64xf32>
      %184 = tpu.iota {dimensions = array<i32: 1>} : vector<2x12x32xi32>
      %c0_90 = arith.constant 0 : index
      %c0_91 = arith.constant 0 : index
      %c0_92 = arith.constant 0 : index
      %185 = vector.load %arg1[%c0_90, %c0_91, %c0_92] : memref<2x12x32xf32, #tpu.memory_space<vmem>>, vector<2x12x32xf32>
      %c0_93 = arith.constant 0 : index
      %c0_94 = arith.constant 0 : index
      %c0_95 = arith.constant 0 : index
      %186 = vector.load %arg6[%c0_93, %c0_94, %c0_95] : memref<4x64x32xf32, #tpu.memory_space<vmem>>, vector<1x64x32xf32>
      %187 = vector.shape_cast %186 : vector<1x64x32xf32> to vector<64x32xf32>
      %cst_96 = arith.constant dense<0.000000e+00> : vector<2x32xf32>
      %188 = tpu.matmul %183, %187, %cst_96 {dimension_numbers = #tpu.dot_dimension_numbers<[1], [0], [0], [1], [0, 0, 1, 1], [], []>} : vector<2x64xf32>, vector<64x32xf32>, vector<2x32xf32> -> vector<2x32xf32>
      %c0_97 = arith.constant 0 : index
      %c0_98 = arith.constant 0 : index
      %c0_99 = arith.constant 0 : index
      %189 = vector.load %arg7[%c0_97, %c0_98, %c0_99] : memref<4x1x32xf32, #tpu.memory_space<vmem>>, vector<1x1x32xf32>
      %190 = vector.shape_cast %189 : vector<1x1x32xf32> to vector<1x32xf32>
      %191 = vector.broadcast %190 : vector<1x32xf32> to vector<2x32xf32>
      %192 = arith.addf %188, %191 : vector<2x32xf32>
      %c0_i32_100 = arith.constant 0 : i32
      %193 = vector.broadcast %c0_i32_100 : i32 to vector<2x12x32xi32>
      %194 = arith.cmpi eq, %184, %193 : vector<2x12x32xi32>
      %195 = vector.shape_cast %192 : vector<2x32xf32> to vector<2x1x32xf32>
      %cst_101 = arith.constant 0.000000e+00 : f32
      %196 = vector.shape_cast %195 : vector<2x1x32xf32> to vector<2x1x32xf32>
      %197 = vector.broadcast %196 : vector<2x1x32xf32> to vector<2x12x32xf32>
      %198 = vector.broadcast %cst_101 : f32 to vector<2x12x32xf32>
      %199 = arith.select %194, %197, %198 : vector<2x12x32xi1>, vector<2x12x32xf32>
      %200 = arith.addf %185, %199 : vector<2x12x32xf32>
      %c1 = arith.constant 1 : index
      %c0_102 = arith.constant 0 : index
      %c0_103 = arith.constant 0 : index
      %201 = vector.load %arg6[%c1, %c0_102, %c0_103] : memref<4x64x32xf32, #tpu.memory_space<vmem>>, vector<1x64x32xf32>
      %202 = vector.shape_cast %201 : vector<1x64x32xf32> to vector<64x32xf32>
      %cst_104 = arith.constant dense<0.000000e+00> : vector<2x32xf32>
      %203 = tpu.matmul %183, %202, %cst_104 {dimension_numbers = #tpu.dot_dimension_numbers<[1], [0], [0], [1], [0, 0, 1, 1], [], []>} : vector<2x64xf32>, vector<64x32xf32>, vector<2x32xf32> -> vector<2x32xf32>
      %c1_105 = arith.constant 1 : index
      %c0_106 = arith.constant 0 : index
      %c0_107 = arith.constant 0 : index
      %204 = vector.load %arg7[%c1_105, %c0_106, %c0_107] : memref<4x1x32xf32, #tpu.memory_space<vmem>>, vector<1x1x32xf32>
      %205 = vector.shape_cast %204 : vector<1x1x32xf32> to vector<1x32xf32>
      %206 = vector.broadcast %205 : vector<1x32xf32> to vector<2x32xf32>
      %207 = arith.addf %203, %206 : vector<2x32xf32>
      %c1_i32_108 = arith.constant 1 : i32
      %208 = vector.broadcast %c1_i32_108 : i32 to vector<2x12x32xi32>
      %209 = arith.cmpi eq, %184, %208 : vector<2x12x32xi32>
      %210 = vector.shape_cast %207 : vector<2x32xf32> to vector<2x1x32xf32>
      %cst_109 = arith.constant 0.000000e+00 : f32
      %211 = vector.shape_cast %210 : vector<2x1x32xf32> to vector<2x1x32xf32>
      %212 = vector.broadcast %211 : vector<2x1x32xf32> to vector<2x12x32xf32>
      %213 = vector.broadcast %cst_109 : f32 to vector<2x12x32xf32>
      %214 = arith.select %209, %212, %213 : vector<2x12x32xi1>, vector<2x12x32xf32>
      %215 = arith.addf %200, %214 : vector<2x12x32xf32>
      %c2 = arith.constant 2 : index
      %c0_110 = arith.constant 0 : index
      %c0_111 = arith.constant 0 : index
      %216 = vector.load %arg6[%c2, %c0_110, %c0_111] : memref<4x64x32xf32, #tpu.memory_space<vmem>>, vector<1x64x32xf32>
      %217 = vector.shape_cast %216 : vector<1x64x32xf32> to vector<64x32xf32>
      %cst_112 = arith.constant dense<0.000000e+00> : vector<2x32xf32>
      %218 = tpu.matmul %183, %217, %cst_112 {dimension_numbers = #tpu.dot_dimension_numbers<[1], [0], [0], [1], [0, 0, 1, 1], [], []>} : vector<2x64xf32>, vector<64x32xf32>, vector<2x32xf32> -> vector<2x32xf32>
      %c2_113 = arith.constant 2 : index
      %c0_114 = arith.constant 0 : index
      %c0_115 = arith.constant 0 : index
      %219 = vector.load %arg7[%c2_113, %c0_114, %c0_115] : memref<4x1x32xf32, #tpu.memory_space<vmem>>, vector<1x1x32xf32>
      %220 = vector.shape_cast %219 : vector<1x1x32xf32> to vector<1x32xf32>
      %221 = vector.broadcast %220 : vector<1x32xf32> to vector<2x32xf32>
      %222 = arith.addf %218, %221 : vector<2x32xf32>
      %c2_i32 = arith.constant 2 : i32
      %223 = vector.broadcast %c2_i32 : i32 to vector<2x12x32xi32>
      %224 = arith.cmpi eq, %184, %223 : vector<2x12x32xi32>
      %225 = vector.shape_cast %222 : vector<2x32xf32> to vector<2x1x32xf32>
      %cst_116 = arith.constant 0.000000e+00 : f32
      %226 = vector.shape_cast %225 : vector<2x1x32xf32> to vector<2x1x32xf32>
      %227 = vector.broadcast %226 : vector<2x1x32xf32> to vector<2x12x32xf32>
      %228 = vector.broadcast %cst_116 : f32 to vector<2x12x32xf32>
      %229 = arith.select %224, %227, %228 : vector<2x12x32xi1>, vector<2x12x32xf32>
      %230 = arith.addf %215, %229 : vector<2x12x32xf32>
      %c3 = arith.constant 3 : index
      %c0_117 = arith.constant 0 : index
      %c0_118 = arith.constant 0 : index
      %231 = vector.load %arg6[%c3, %c0_117, %c0_118] : memref<4x64x32xf32, #tpu.memory_space<vmem>>, vector<1x64x32xf32>
      %232 = vector.shape_cast %231 : vector<1x64x32xf32> to vector<64x32xf32>
      %cst_119 = arith.constant dense<0.000000e+00> : vector<2x32xf32>
      %233 = tpu.matmul %183, %232, %cst_119 {dimension_numbers = #tpu.dot_dimension_numbers<[1], [0], [0], [1], [0, 0, 1, 1], [], []>} : vector<2x64xf32>, vector<64x32xf32>, vector<2x32xf32> -> vector<2x32xf32>
      %c3_120 = arith.constant 3 : index
      %c0_121 = arith.constant 0 : index
      %c0_122 = arith.constant 0 : index
      %234 = vector.load %arg7[%c3_120, %c0_121, %c0_122] : memref<4x1x32xf32, #tpu.memory_space<vmem>>, vector<1x1x32xf32>
      %235 = vector.shape_cast %234 : vector<1x1x32xf32> to vector<1x32xf32>
      %236 = vector.broadcast %235 : vector<1x32xf32> to vector<2x32xf32>
      %237 = arith.addf %233, %236 : vector<2x32xf32>
      %c3_i32 = arith.constant 3 : i32
      %238 = vector.broadcast %c3_i32 : i32 to vector<2x12x32xi32>
      %239 = arith.cmpi eq, %184, %238 : vector<2x12x32xi32>
      %240 = vector.shape_cast %237 : vector<2x32xf32> to vector<2x1x32xf32>
      %cst_123 = arith.constant 0.000000e+00 : f32
      %241 = vector.shape_cast %240 : vector<2x1x32xf32> to vector<2x1x32xf32>
      %242 = vector.broadcast %241 : vector<2x1x32xf32> to vector<2x12x32xf32>
      %243 = vector.broadcast %cst_123 : f32 to vector<2x12x32xf32>
      %244 = arith.select %239, %242, %243 : vector<2x12x32xi1>, vector<2x12x32xf32>
      %245 = arith.addf %230, %244 : vector<2x12x32xf32>
      %c0_124 = arith.constant 0 : index
      %c0_125 = arith.constant 0 : index
      %c0_126 = arith.constant 0 : index
      %246 = vector.load %arg24[%c0_124, %c0_125, %c0_126] : memref<2x12x32xf32, #tpu.memory_space<vmem>>, vector<2x12x32xf32>
      tpu.vector_store %arg24[%c0_124, %c0_125, %c0_126], %245 {strides = array<i32>} : memref<2x12x32xf32, #tpu.memory_space<vmem>>, vector<2x12x32xf32>,
    } else {
    }
    %c0 = arith.constant 0 : index
    %c0_1 = arith.constant 0 : index
    %c0_2 = arith.constant 0 : index
    %3 = vector.load %arg2[%c0, %c0_1, %c0_2] : memref<2x12x12xf32, #tpu.memory_space<vmem>>, vector<2x12x12xf32>
    %c0_3 = arith.constant 0 : index
    %c0_4 = arith.constant 0 : index
    %c0_5 = arith.constant 0 : index
    %4 = vector.load %arg24[%c0_3, %c0_4, %c0_5] : memref<2x12x32xf32, #tpu.memory_space<vmem>>, vector<2x12x32xf32>
    %5 = vector.shape_cast %4 : vector<2x12x32xf32> to vector<24x32xf32>
    %c0_6 = arith.constant 0 : index
    %c0_7 = arith.constant 0 : index
    %c0_8 = arith.constant 0 : index
    %6 = vector.load %arg8[%c0_6, %c0_7, %c0_8] : memref<1x1x32xf32, #tpu.memory_space<vmem>>, vector<1x1x32xf32>
    %7 = vector.shape_cast %6 : vector<1x1x32xf32> to vector<1x32xf32>
    %c0_9 = arith.constant 0 : index
    %c0_10 = arith.constant 0 : index
    %c0_11 = arith.constant 0 : index
    %8 = vector.load %arg9[%c0_9, %c0_10, %c0_11] : memref<1x1x32xf32, #tpu.memory_space<vmem>>, vector<1x1x32xf32>
    %9 = vector.shape_cast %8 : vector<1x1x32xf32> to vector<1x32xf32>
    %cst = arith.constant dense<0.000000e+00> : vector<24xf32>
    %10 = vector.multi_reduction <add>, %5, %cst [1] : vector<24x32xf32> to vector<24xf32>
    %11 = vector.shape_cast %10 : vector<24xf32> to vector<24x1xf32>
    %cst_12 = arith.constant 3.200000e+01 : f32
    %12 = vector.broadcast %cst_12 : f32 to vector<24x1xf32>
    %13 = arith.divf %11, %12 : vector<24x1xf32>
    %14 = vector.broadcast %13 : vector<24x1xf32> to vector<24x32xf32>
    %15 = arith.subf %5, %14 : vector<24x32xf32>
    %16 = arith.mulf %15, %15 : vector<24x32xf32>
    %cst_13 = arith.constant dense<0.000000e+00> : vector<24xf32>
    %17 = vector.multi_reduction <add>, %16, %cst_13 [1] : vector<24x32xf32> to vector<24xf32>
    %18 = vector.shape_cast %17 : vector<24xf32> to vector<24x1xf32>
    %cst_14 = arith.constant 3.200000e+01 : f32
    %19 = vector.broadcast %cst_14 : f32 to vector<24x1xf32>
    %20 = arith.divf %18, %19 : vector<24x1xf32>
    %21 = vector.broadcast %13 : vector<24x1xf32> to vector<24x32xf32>
    %22 = arith.subf %5, %21 : vector<24x32xf32>
    %cst_15 = arith.constant 9.99999974E-6 : f32
    %23 = vector.broadcast %cst_15 : f32 to vector<24x1xf32>
    %24 = arith.addf %20, %23 : vector<24x1xf32>
    %25 = math.rsqrt %24 : vector<24x1xf32>
    %26 = vector.broadcast %25 : vector<24x1xf32> to vector<24x32xf32>
    %27 = arith.mulf %22, %26 : vector<24x32xf32>
    %28 = vector.broadcast %7 : vector<1x32xf32> to vector<24x32xf32>
    %29 = arith.mulf %27, %28 : vector<24x32xf32>
    %30 = vector.broadcast %9 : vector<1x32xf32> to vector<24x32xf32>
    %31 = arith.addf %29, %30 : vector<24x32xf32>
    %c0_16 = arith.constant 0 : index
    %c0_17 = arith.constant 0 : index
    %c0_18 = arith.constant 0 : index
    %32 = vector.load %arg10[%c0_16, %c0_17, %c0_18] : memref<1x32x96xf32, #tpu.memory_space<vmem>>, vector<1x32x96xf32>
    %33 = vector.shape_cast %32 : vector<1x32x96xf32> to vector<32x96xf32>
    %cst_19 = arith.constant dense<0.000000e+00> : vector<24x96xf32>
    %34 = tpu.matmul %31, %33, %cst_19 {dimension_numbers = #tpu.dot_dimension_numbers<[1], [0], [0], [1], [0, 0, 1, 1], [], []>} : vector<24x32xf32>, vector<32x96xf32>, vector<24x96xf32> -> vector<24x96xf32>
    %c0_20 = arith.constant 0 : index
    %c0_21 = arith.constant 0 : index
    %c0_22 = arith.constant 0 : index
    %35 = vector.load %arg11[%c0_20, %c0_21, %c0_22] : memref<1x1x96xf32, #tpu.memory_space<vmem>>, vector<1x1x96xf32>
    %36 = vector.shape_cast %35 : vector<1x1x96xf32> to vector<1x96xf32>
    %37 = vector.broadcast %36 : vector<1x96xf32> to vector<24x96xf32>
    %38 = arith.addf %34, %37 : vector<24x96xf32>
    %39 = vector.shape_cast %38 : vector<24x96xf32> to vector<2x12x96xf32>
    %40 = vector.extract_strided_slice %39 {offsets = [0, 0, 0], sizes = [2, 12, 8], strides = [1, 1, 1]} : vector<2x12x96xf32> to vector<2x12x8xf32>
    %41 = vector.extract_strided_slice %39 {offsets = [0, 0, 32], sizes = [2, 12, 8], strides = [1, 1, 1]} : vector<2x12x96xf32> to vector<2x12x8xf32>
    %42 = vector.extract_strided_slice %39 {offsets = [0, 0, 64], sizes = [2, 12, 8], strides = [1, 1, 1]} : vector<2x12x96xf32> to vector<2x12x8xf32>
    "tpu.trace_start"() <{level = 10 : i32, message = "bqd,bkd->bqk"}> : () -> ()
    %cst_23 = arith.constant dense<0.000000e+00> : vector<2x12x12xf32>
    %43 = tpu.matmul %40, %41, %cst_23 {dimension_numbers = #tpu.dot_dimension_numbers<[2], [2], [1], [1], [0, 0, 0, 1, 1, 1], [0], [0]>} : vector<2x12x8xf32>, vector<2x12x8xf32>, vector<2x12x12xf32> -> vector<2x12x12xf32>
    "tpu.trace_stop"() : () -> ()
    %cst_24 = arith.constant 0.353553385 : f32
    %44 = vector.broadcast %cst_24 : f32 to vector<2x12x12xf32>
    %45 = arith.mulf %43, %44 : vector<2x12x12xf32>
    %46 = arith.addf %45, %3 : vector<2x12x12xf32>
    %cst_25 = arith.constant dense<0xFF800000> : vector<2x12xf32>
    %47 = vector.multi_reduction <maximumf>, %46, %cst_25 [2] : vector<2x12x12xf32> to vector<2x12xf32>
    %48 = vector.shape_cast %47 : vector<2x12xf32> to vector<2x12x1xf32>
    %49 = vector.broadcast %48 : vector<2x12x1xf32> to vector<2x12x12xf32>
    %50 = arith.subf %46, %49 : vector<2x12x12xf32>
    %51 = math.exp %50 : vector<2x12x12xf32>
    %cst_26 = arith.constant dense<0.000000e+00> : vector<2x12xf32>
    %52 = vector.multi_reduction <add>, %51, %cst_26 [2] : vector<2x12x12xf32> to vector<2x12xf32>
    %53 = vector.shape_cast %52 : vector<2x12xf32> to vector<2x12x1xf32>
    %54 = vector.broadcast %53 : vector<2x12x1xf32> to vector<2x12x12xf32>
    %55 = arith.divf %51, %54 : vector<2x12x12xf32>
    "tpu.trace_start"() <{level = 10 : i32, message = "bqk,bkd->bqd"}> : () -> ()
    %cst_27 = arith.constant dense<0.000000e+00> : vector<2x12x8xf32>
    %56 = tpu.matmul %55, %42, %cst_27 {dimension_numbers = #tpu.dot_dimension_numbers<[2], [1], [1], [2], [0, 0, 0, 1, 1, 2], [0], [0]>} : vector<2x12x12xf32>, vector<2x12x8xf32>, vector<2x12x8xf32> -> vector<2x12x8xf32>
    "tpu.trace_stop"() : () -> ()
    %57 = vector.extract_strided_slice %39 {offsets = [0, 0, 8], sizes = [2, 12, 8], strides = [1, 1, 1]} : vector<2x12x96xf32> to vector<2x12x8xf32>
    %58 = vector.extract_strided_slice %39 {offsets = [0, 0, 40], sizes = [2, 12, 8], strides = [1, 1, 1]} : vector<2x12x96xf32> to vector<2x12x8xf32>
    %59 = vector.extract_strided_slice %39 {offsets = [0, 0, 72], sizes = [2, 12, 8], strides = [1, 1, 1]} : vector<2x12x96xf32> to vector<2x12x8xf32>
    "tpu.trace_start"() <{level = 10 : i32, message = "bqd,bkd->bqk"}> : () -> ()
    %cst_28 = arith.constant dense<0.000000e+00> : vector<2x12x12xf32>
    %60 = tpu.matmul %57, %58, %cst_28 {dimension_numbers = #tpu.dot_dimension_numbers<[2], [2], [1], [1], [0, 0, 0, 1, 1, 1], [0], [0]>} : vector<2x12x8xf32>, vector<2x12x8xf32>, vector<2x12x12xf32> -> vector<2x12x12xf32>
    "tpu.trace_stop"() : () -> ()
    %cst_29 = arith.constant 0.353553385 : f32
    %61 = vector.broadcast %cst_29 : f32 to vector<2x12x12xf32>
    %62 = arith.mulf %60, %61 : vector<2x12x12xf32>
    %63 = arith.addf %62, %3 : vector<2x12x12xf32>
    %cst_30 = arith.constant dense<0xFF800000> : vector<2x12xf32>
    %64 = vector.multi_reduction <maximumf>, %63, %cst_30 [2] : vector<2x12x12xf32> to vector<2x12xf32>
    %65 = vector.shape_cast %64 : vector<2x12xf32> to vector<2x12x1xf32>
    %66 = vector.broadcast %65 : vector<2x12x1xf32> to vector<2x12x12xf32>
    %67 = arith.subf %63, %66 : vector<2x12x12xf32>
    %68 = math.exp %67 : vector<2x12x12xf32>
    %cst_31 = arith.constant dense<0.000000e+00> : vector<2x12xf32>
    %69 = vector.multi_reduction <add>, %68, %cst_31 [2] : vector<2x12x12xf32> to vector<2x12xf32>
    %70 = vector.shape_cast %69 : vector<2x12xf32> to vector<2x12x1xf32>
    %71 = vector.broadcast %70 : vector<2x12x1xf32> to vector<2x12x12xf32>
    %72 = arith.divf %68, %71 : vector<2x12x12xf32>
    "tpu.trace_start"() <{level = 10 : i32, message = "bqk,bkd->bqd"}> : () -> ()
    %cst_32 = arith.constant dense<0.000000e+00> : vector<2x12x8xf32>
    %73 = tpu.matmul %72, %59, %cst_32 {dimension_numbers = #tpu.dot_dimension_numbers<[2], [1], [1], [2], [0, 0, 0, 1, 1, 2], [0], [0]>} : vector<2x12x12xf32>, vector<2x12x8xf32>, vector<2x12x8xf32> -> vector<2x12x8xf32>
    "tpu.trace_stop"() : () -> ()
    %74 = vector.extract_strided_slice %39 {offsets = [0, 0, 16], sizes = [2, 12, 8], strides = [1, 1, 1]} : vector<2x12x96xf32> to vector<2x12x8xf32>
    %75 = vector.extract_strided_slice %39 {offsets = [0, 0, 48], sizes = [2, 12, 8], strides = [1, 1, 1]} : vector<2x12x96xf32> to vector<2x12x8xf32>
    %76 = vector.extract_strided_slice %39 {offsets = [0, 0, 80], sizes = [2, 12, 8], strides = [1, 1, 1]} : vector<2x12x96xf32> to vector<2x12x8xf32>
    "tpu.trace_start"() <{level = 10 : i32, message = "bqd,bkd->bqk"}> : () -> ()
    %cst_33 = arith.constant dense<0.000000e+00> : vector<2x12x12xf32>
    %77 = tpu.matmul %74, %75, %cst_33 {dimension_numbers = #tpu.dot_dimension_numbers<[2], [2], [1], [1], [0, 0, 0, 1, 1, 1], [0], [0]>} : vector<2x12x8xf32>, vector<2x12x8xf32>, vector<2x12x12xf32> -> vector<2x12x12xf32>
    "tpu.trace_stop"() : () -> ()
    %cst_34 = arith.constant 0.353553385 : f32
    %78 = vector.broadcast %cst_34 : f32 to vector<2x12x12xf32>
    %79 = arith.mulf %77, %78 : vector<2x12x12xf32>
    %80 = arith.addf %79, %3 : vector<2x12x12xf32>
    %cst_35 = arith.constant dense<0xFF800000> : vector<2x12xf32>
    %81 = vector.multi_reduction <maximumf>, %80, %cst_35 [2] : vector<2x12x12xf32> to vector<2x12xf32>
    %82 = vector.shape_cast %81 : vector<2x12xf32> to vector<2x12x1xf32>
    %83 = vector.broadcast %82 : vector<2x12x1xf32> to vector<2x12x12xf32>
    %84 = arith.subf %80, %83 : vector<2x12x12xf32>
    %85 = math.exp %84 : vector<2x12x12xf32>
    %cst_36 = arith.constant dense<0.000000e+00> : vector<2x12xf32>
    %86 = vector.multi_reduction <add>, %85, %cst_36 [2] : vector<2x12x12xf32> to vector<2x12xf32>
    %87 = vector.shape_cast %86 : vector<2x12xf32> to vector<2x12x1xf32>
    %88 = vector.broadcast %87 : vector<2x12x1xf32> to vector<2x12x12xf32>
    %89 = arith.divf %85, %88 : vector<2x12x12xf32>
    "tpu.trace_start"() <{level = 10 : i32, message = "bqk,bkd->bqd"}> : () -> ()
    %cst_37 = arith.constant dense<0.000000e+00> : vector<2x12x8xf32>
    %90 = tpu.matmul %89, %76, %cst_37 {dimension_numbers = #tpu.dot_dimension_numbers<[2], [1], [1], [2], [0, 0, 0, 1, 1, 2], [0], [0]>} : vector<2x12x12xf32>, vector<2x12x8xf32>, vector<2x12x8xf32> -> vector<2x12x8xf32>
    "tpu.trace_stop"() : () -> ()
    %91 = vector.extract_strided_slice %39 {offsets = [0, 0, 24], sizes = [2, 12, 8], strides = [1, 1, 1]} : vector<2x12x96xf32> to vector<2x12x8xf32>
    %92 = vector.extract_strided_slice %39 {offsets = [0, 0, 56], sizes = [2, 12, 8], strides = [1, 1, 1]} : vector<2x12x96xf32> to vector<2x12x8xf32>
    %93 = vector.extract_strided_slice %39 {offsets = [0, 0, 88], sizes = [2, 12, 8], strides = [1, 1, 1]} : vector<2x12x96xf32> to vector<2x12x8xf32>
    "tpu.trace_start"() <{level = 10 : i32, message = "bqd,bkd->bqk"}> : () -> ()
    %cst_38 = arith.constant dense<0.000000e+00> : vector<2x12x12xf32>
    %94 = tpu.matmul %91, %92, %cst_38 {dimension_numbers = #tpu.dot_dimension_numbers<[2], [2], [1], [1], [0, 0, 0, 1, 1, 1], [0], [0]>} : vector<2x12x8xf32>, vector<2x12x8xf32>, vector<2x12x12xf32> -> vector<2x12x12xf32>
    "tpu.trace_stop"() : () -> ()
    %cst_39 = arith.constant 0.353553385 : f32
    %95 = vector.broadcast %cst_39 : f32 to vector<2x12x12xf32>
    %96 = arith.mulf %94, %95 : vector<2x12x12xf32>
    %97 = arith.addf %96, %3 : vector<2x12x12xf32>
    %cst_40 = arith.constant dense<0xFF800000> : vector<2x12xf32>
    %98 = vector.multi_reduction <maximumf>, %97, %cst_40 [2] : vector<2x12x12xf32> to vector<2x12xf32>
    %99 = vector.shape_cast %98 : vector<2x12xf32> to vector<2x12x1xf32>
    %100 = vector.broadcast %99 : vector<2x12x1xf32> to vector<2x12x12xf32>
    %101 = arith.subf %97, %100 : vector<2x12x12xf32>
    %102 = math.exp %101 : vector<2x12x12xf32>
    %cst_41 = arith.constant dense<0.000000e+00> : vector<2x12xf32>
    %103 = vector.multi_reduction <add>, %102, %cst_41 [2] : vector<2x12x12xf32> to vector<2x12xf32>
    %104 = vector.shape_cast %103 : vector<2x12xf32> to vector<2x12x1xf32>
    %105 = vector.broadcast %104 : vector<2x12x1xf32> to vector<2x12x12xf32>
    %106 = arith.divf %102, %105 : vector<2x12x12xf32>
    "tpu.trace_start"() <{level = 10 : i32, message = "bqk,bkd->bqd"}> : () -> ()
    %cst_42 = arith.constant dense<0.000000e+00> : vector<2x12x8xf32>
    %107 = tpu.matmul %106, %93, %cst_42 {dimension_numbers = #tpu.dot_dimension_numbers<[2], [1], [1], [2], [0, 0, 0, 1, 1, 2], [0], [0]>} : vector<2x12x12xf32>, vector<2x12x8xf32>, vector<2x12x8xf32> -> vector<2x12x8xf32>
    "tpu.trace_stop"() : () -> ()
    %108 = tpu.concatenate %56, %73, %90, %107 in 2 : vector<2x12x8xf32>, vector<2x12x8xf32>, vector<2x12x8xf32>, vector<2x12x8xf32> -> vector<2x12x32xf32>
    %109 = vector.shape_cast %108 : vector<2x12x32xf32> to vector<24x32xf32>
    %c0_43 = arith.constant 0 : index
    %c0_44 = arith.constant 0 : index
    %c0_45 = arith.constant 0 : index
    %110 = vector.load %arg12[%c0_43, %c0_44, %c0_45] : memref<1x32x32xf32, #tpu.memory_space<vmem>>, vector<1x32x32xf32>
    %111 = vector.shape_cast %110 : vector<1x32x32xf32> to vector<32x32xf32>
    %cst_46 = arith.constant dense<0.000000e+00> : vector<24x32xf32>
    %112 = tpu.matmul %109, %111, %cst_46 {dimension_numbers = #tpu.dot_dimension_numbers<[1], [0], [0], [1], [0, 0, 1, 1], [], []>} : vector<24x32xf32>, vector<32x32xf32>, vector<24x32xf32> -> vector<24x32xf32>
    %113 = arith.addf %5, %112 : vector<24x32xf32>
    %c0_47 = arith.constant 0 : index
    %c0_48 = arith.constant 0 : index
    %c0_49 = arith.constant 0 : index
    %114 = vector.load %arg13[%c0_47, %c0_48, %c0_49] : memref<1x1x32xf32, #tpu.memory_space<vmem>>, vector<1x1x32xf32>
    %115 = vector.shape_cast %114 : vector<1x1x32xf32> to vector<1x32xf32>
    %116 = vector.broadcast %115 : vector<1x32xf32> to vector<24x32xf32>
    %117 = arith.addf %113, %116 : vector<24x32xf32>
    %c0_50 = arith.constant 0 : index
    %c0_51 = arith.constant 0 : index
    %c0_52 = arith.constant 0 : index
    %118 = vector.load %arg14[%c0_50, %c0_51, %c0_52] : memref<1x1x32xf32, #tpu.memory_space<vmem>>, vector<1x1x32xf32>
    %119 = vector.shape_cast %118 : vector<1x1x32xf32> to vector<1x32xf32>
    %c0_53 = arith.constant 0 : index
    %c0_54 = arith.constant 0 : index
    %c0_55 = arith.constant 0 : index
    %120 = vector.load %arg15[%c0_53, %c0_54, %c0_55] : memref<1x1x32xf32, #tpu.memory_space<vmem>>, vector<1x1x32xf32>
    %121 = vector.shape_cast %120 : vector<1x1x32xf32> to vector<1x32xf32>
    %cst_56 = arith.constant dense<0.000000e+00> : vector<24xf32>
    %122 = vector.multi_reduction <add>, %117, %cst_56 [1] : vector<24x32xf32> to vector<24xf32>
    %123 = vector.shape_cast %122 : vector<24xf32> to vector<24x1xf32>
    %cst_57 = arith.constant 3.200000e+01 : f32
    %124 = vector.broadcast %cst_57 : f32 to vector<24x1xf32>
    %125 = arith.divf %123, %124 : vector<24x1xf32>
    %126 = vector.broadcast %125 : vector<24x1xf32> to vector<24x32xf32>
    %127 = arith.subf %117, %126 : vector<24x32xf32>
    %128 = arith.mulf %127, %127 : vector<24x32xf32>
    %cst_58 = arith.constant dense<0.000000e+00> : vector<24xf32>
    %129 = vector.multi_reduction <add>, %128, %cst_58 [1] : vector<24x32xf32> to vector<24xf32>
    %130 = vector.shape_cast %129 : vector<24xf32> to vector<24x1xf32>
    %cst_59 = arith.constant 3.200000e+01 : f32
    %131 = vector.broadcast %cst_59 : f32 to vector<24x1xf32>
    %132 = arith.divf %130, %131 : vector<24x1xf32>
    %133 = vector.broadcast %125 : vector<24x1xf32> to vector<24x32xf32>
    %134 = arith.subf %117, %133 : vector<24x32xf32>
    %cst_60 = arith.constant 9.99999974E-6 : f32
    %135 = vector.broadcast %cst_60 : f32 to vector<24x1xf32>
    %136 = arith.addf %132, %135 : vector<24x1xf32>
    %137 = math.rsqrt %136 : vector<24x1xf32>
    %138 = vector.broadcast %137 : vector<24x1xf32> to vector<24x32xf32>
    %139 = arith.mulf %134, %138 : vector<24x32xf32>
    %140 = vector.broadcast %119 : vector<1x32xf32> to vector<24x32xf32>
    %141 = arith.mulf %139, %140 : vector<24x32xf32>
    %142 = vector.broadcast %121 : vector<1x32xf32> to vector<24x32xf32>
    %143 = arith.addf %141, %142 : vector<24x32xf32>
    %c0_61 = arith.constant 0 : index
    %c0_62 = arith.constant 0 : index
    %c0_63 = arith.constant 0 : index
    %144 = vector.load %arg16[%c0_61, %c0_62, %c0_63] : memref<1x32x128xf32, #tpu.memory_space<vmem>>, vector<1x32x128xf32>
    %145 = vector.shape_cast %144 : vector<1x32x128xf32> to vector<32x128xf32>
    %cst_64 = arith.constant dense<0.000000e+00> : vector<24x128xf32>
    %146 = tpu.matmul %143, %145, %cst_64 {dimension_numbers = #tpu.dot_dimension_numbers<[1], [0], [0], [1], [0, 0, 1, 1], [], []>} : vector<24x32xf32>, vector<32x128xf32>, vector<24x128xf32> -> vector<24x128xf32>
    %c0_65 = arith.constant 0 : index
    %c0_66 = arith.constant 0 : index
    %c0_67 = arith.constant 0 : index
    %147 = vector.load %arg17[%c0_65, %c0_66, %c0_67] : memref<1x1x128xf32, #tpu.memory_space<vmem>>, vector<1x1x128xf32>
    %148 = vector.shape_cast %147 : vector<1x1x128xf32> to vector<1x128xf32>
    %149 = vector.broadcast %148 : vector<1x128xf32> to vector<24x128xf32>
    %150 = arith.addf %146, %149 : vector<24x128xf32>
    %151 = arith.mulf %150, %150 : vector<24x128xf32>
    %152 = arith.mulf %150, %151 : vector<24x128xf32>
    %cst_68 = arith.constant 4.471500e-02 : f32
    %153 = vector.broadcast %cst_68 : f32 to vector<24x128xf32>
    %154 = arith.mulf %153, %152 : vector<24x128xf32>
    %155 = arith.addf %150, %154 : vector<24x128xf32>
    %cst_69 = arith.constant 0.797884583 : f32
    %156 = vector.broadcast %cst_69 : f32 to vector<24x128xf32>
    %157 = arith.mulf %156, %155 : vector<24x128xf32>
    %158 = math.tanh %157 : vector<24x128xf32>
    %cst_70 = arith.constant 1.000000e+00 : f32
    %159 = vector.broadcast %cst_70 : f32 to vector<24x128xf32>
    %160 = arith.addf %159, %158 : vector<24x128xf32>
    %cst_71 = arith.constant 5.000000e-01 : f32
    %161 = vector.broadcast %cst_71 : f32 to vector<24x128xf32>
    %162 = arith.mulf %161, %160 : vector<24x128xf32>
    %163 = arith.mulf %150, %162 : vector<24x128xf32>
    %c0_72 = arith.constant 0 : index
    %c0_73 = arith.constant 0 : index
    %c0_74 = arith.constant 0 : index
    %164 = vector.load %arg18[%c0_72, %c0_73, %c0_74] : memref<1x128x32xf32, #tpu.memory_space<vmem>>, vector<1x128x32xf32>
    %165 = vector.shape_cast %164 : vector<1x128x32xf32> to vector<128x32xf32>
    %cst_75 = arith.constant dense<0.000000e+00> : vector<24x32xf32>
    %166 = tpu.matmul %163, %165, %cst_75 {dimension_numbers = #tpu.dot_dimension_numbers<[1], [0], [0], [1], [0, 0, 1, 1], [], []>} : vector<24x128xf32>, vector<128x32xf32>, vector<24x32xf32> -> vector<24x32xf32>
    %167 = arith.addf %117, %166 : vector<24x32xf32>
    %c0_76 = arith.constant 0 : index
    %c0_77 = arith.constant 0 : index
    %c0_78 = arith.constant 0 : index
    %168 = vector.load %arg19[%c0_76, %c0_77, %c0_78] : memref<1x1x32xf32, #tpu.memory_space<vmem>>, vector<1x1x32xf32>
    %169 = vector.shape_cast %168 : vector<1x1x32xf32> to vector<1x32xf32>
    %170 = vector.broadcast %169 : vector<1x32xf32> to vector<24x32xf32>
    %171 = arith.addf %167, %170 : vector<24x32xf32>
    %172 = vector.shape_cast %171 : vector<24x32xf32> to vector<2x12x32xf32>
    %c0_79 = arith.constant 0 : index
    %c0_80 = arith.constant 0 : index
    %c0_81 = arith.constant 0 : index
    %173 = vector.load %arg24[%c0_79, %c0_80, %c0_81] : memref<2x12x32xf32, #tpu.memory_space<vmem>>, vector<2x12x32xf32>
    tpu.vector_store %arg24[%c0_79, %c0_80, %c0_81], %172 {strides = array<i32>} : memref<2x12x32xf32, #tpu.memory_space<vmem>>, vector<2x12x32xf32>,
    %c1_i32 = arith.constant 1 : i32
    %174 = arith.cmpi eq, %arg0, %c1_i32 : i32
    %175 = arith.extui %174 : i1 to i32
    %c0_i32_82 = arith.constant 0 : i32
    %176 = arith.cmpi ne, %175, %c0_i32_82 : i32
    scf.if %176 {
      %c0_83 = arith.constant 0 : index
      %c0_84 = arith.constant 0 : index
      %177 = vector.load %arg20[%c0_83, %c0_84] : memref<1x32xf32, #tpu.memory_space<vmem>>, vector<1x32xf32>
      %c0_85 = arith.constant 0 : index
      %c0_86 = arith.constant 0 : index
      %178 = vector.load %arg21[%c0_85, %c0_86] : memref<1x32xf32, #tpu.memory_space<vmem>>, vector<1x32xf32>
      %cst_87 = arith.constant dense<0.000000e+00> : vector<24xf32>
      %179 = vector.multi_reduction <add>, %171, %cst_87 [1] : vector<24x32xf32> to vector<24xf32>
      %180 = vector.shape_cast %179 : vector<24xf32> to vector<24x1xf32>
      %cst_88 = arith.constant 3.200000e+01 : f32
      %181 = vector.broadcast %cst_88 : f32 to vector<24x1xf32>
      %182 = arith.divf %180, %181 : vector<24x1xf32>
      %183 = vector.broadcast %182 : vector<24x1xf32> to vector<24x32xf32>
      %184 = arith.subf %171, %183 : vector<24x32xf32>
      %185 = arith.mulf %184, %184 : vector<24x32xf32>
      %cst_89 = arith.constant dense<0.000000e+00> : vector<24xf32>
      %186 = vector.multi_reduction <add>, %185, %cst_89 [1] : vector<24x32xf32> to vector<24xf32>
      %187 = vector.shape_cast %186 : vector<24xf32> to vector<24x1xf32>
      %cst_90 = arith.constant 3.200000e+01 : f32
      %188 = vector.broadcast %cst_90 : f32 to vector<24x1xf32>
      %189 = arith.divf %187, %188 : vector<24x1xf32>
      %190 = vector.broadcast %182 : vector<24x1xf32> to vector<24x32xf32>
      %191 = arith.subf %171, %190 : vector<24x32xf32>
      %cst_91 = arith.constant 9.99999974E-6 : f32
      %192 = vector.broadcast %cst_91 : f32 to vector<24x1xf32>
      %193 = arith.addf %189, %192 : vector<24x1xf32>
      %194 = math.rsqrt %193 : vector<24x1xf32>
      %195 = vector.broadcast %194 : vector<24x1xf32> to vector<24x32xf32>
      %196 = arith.mulf %191, %195 : vector<24x32xf32>
      %197 = vector.broadcast %177 : vector<1x32xf32> to vector<24x32xf32>
      %198 = arith.mulf %196, %197 : vector<24x32xf32>
      %199 = vector.broadcast %178 : vector<1x32xf32> to vector<24x32xf32>
      %200 = arith.addf %198, %199 : vector<24x32xf32>
      %c0_92 = arith.constant 0 : index
      %c0_93 = arith.constant 0 : index
      %201 = vector.load %arg22[%c0_92, %c0_93] : memref<32x128xf32, #tpu.memory_space<vmem>>, vector<32x128xf32>
      %cst_94 = arith.constant dense<0.000000e+00> : vector<24x128xf32>
      %202 = tpu.matmul %200, %201, %cst_94 {dimension_numbers = #tpu.dot_dimension_numbers<[1], [0], [0], [1], [0, 0, 1, 1], [], []>} : vector<24x32xf32>, vector<32x128xf32>, vector<24x128xf32> -> vector<24x128xf32>
      %203 = vector.shape_cast %202 : vector<24x128xf32> to vector<2x12x128xf32>
      %c0_95 = arith.constant 0 : index
      %c0_96 = arith.constant 0 : index
      %c0_97 = arith.constant 0 : index
      %204 = vector.load %arg23[%c0_95, %c0_96, %c0_97] : memref<2x12x128xf32, #tpu.memory_space<vmem>>, vector<2x12x128xf32>
      tpu.vector_store %arg23[%c0_95, %c0_96, %c0_97], %203 {strides = array<i32>} : memref<2x12x128xf32, #tpu.memory_space<vmem>>, vector<2x12x128xf32>,
    } else {
    }
    return
  }
  func.func @transform_0(%arg0: i32) -> (i32, i32, i32) {
    %c0_i32 = arith.constant 0 : i32
    %c0_i32_0 = arith.constant 0 : i32
    %c0_i32_1 = arith.constant 0 : i32
    %c0_i32_2 = arith.constant 0 : i32
    return %c0_i32, %c0_i32_0, %c0_i32_1 : i32, i32, i32
  }
  func.func @transform_1(%arg0: i32) -> (i32, i32, i32) {
    %c0_i32 = arith.constant 0 : i32
    %c0_i32_0 = arith.constant 0 : i32
    %c0_i32_1 = arith.constant 0 : i32
    %c0_i32_2 = arith.constant 0 : i32
    return %c0_i32, %c0_i32_0, %c0_i32_1 : i32, i32, i32
  }
  func.func @transform_2(%arg0: i32) -> (i32, i32) {
    %c0_i32 = arith.constant 0 : i32
    %c0_i32_0 = arith.constant 0 : i32
    %c0_i32_1 = arith.constant 0 : i32
    return %c0_i32, %c0_i32_0 : i32, i32
  }
  func.func @transform_3(%arg0: i32) -> (i32, i32) {
    %c0_i32 = arith.constant 0 : i32
    %c0_i32_0 = arith.constant 0 : i32
    %c0_i32_1 = arith.constant 0 : i32
    return %c0_i32, %c0_i32_0 : i32, i32
  }
  func.func @transform_4(%arg0: i32) -> (i32, i32) {
    %c0_i32 = arith.constant 0 : i32
    %c0_i32_0 = arith.constant 0 : i32
    %c0_i32_1 = arith.constant 0 : i32
    return %c0_i32, %c0_i32_0 : i32, i32
  }
  func.func @transform_5(%arg0: i32) -> (i32, i32, i32) {
    %c0_i32 = arith.constant 0 : i32
    %c0_i32_0 = arith.constant 0 : i32
    %c0_i32_1 = arith.constant 0 : i32
    %c0_i32_2 = arith.constant 0 : i32
    return %c0_i32, %c0_i32_0, %c0_i32_1 : i32, i32, i32
  }
  func.func @transform_6(%arg0: i32) -> (i32, i32, i32) {
    %c0_i32 = arith.constant 0 : i32
    %c0_i32_0 = arith.constant 0 : i32
    %c0_i32_1 = arith.constant 0 : i32
    %c0_i32_2 = arith.constant 0 : i32
    return %c0_i32, %c0_i32_0, %c0_i32_1 : i32, i32, i32
  }
  func.func @transform_7(%arg0: i32) -> (i32, i32, i32) {
    %c0_i32 = arith.constant 0 : i32
    %c0_i32_0 = arith.constant 0 : i32
    %c0_i32_1 = arith.constant 0 : i32
    return %arg0, %c0_i32, %c0_i32_0 : i32, i32, i32
  }
  func.func @transform_8(%arg0: i32) -> (i32, i32, i32) {
    %c0_i32 = arith.constant 0 : i32
    %c0_i32_0 = arith.constant 0 : i32
    %c0_i32_1 = arith.constant 0 : i32
    return %arg0, %c0_i32, %c0_i32_0 : i32, i32, i32
  }
  func.func @transform_9(%arg0: i32) -> (i32, i32, i32) {
    %c0_i32 = arith.constant 0 : i32
    %c0_i32_0 = arith.constant 0 : i32
    %c0_i32_1 = arith.constant 0 : i32
    return %arg0, %c0_i32, %c0_i32_0 : i32, i32, i32
  }
  func.func @transform_10(%arg0: i32) -> (i32, i32, i32) {
    %c0_i32 = arith.constant 0 : i32
    %c0_i32_0 = arith.constant 0 : i32
    %c0_i32_1 = arith.constant 0 : i32
    return %arg0, %c0_i32, %c0_i32_0 : i32, i32, i32
  }
  func.func @transform_11(%arg0: i32) -> (i32, i32, i32) {
    %c0_i32 = arith.constant 0 : i32
    %c0_i32_0 = arith.constant 0 : i32
    %c0_i32_1 = arith.constant 0 : i32
    return %arg0, %c0_i32, %c0_i32_0 : i32, i32, i32
  }
  func.func @transform_12(%arg0: i32) -> (i32, i32, i32) {
    %c0_i32 = arith.constant 0 : i32
    %c0_i32_0 = arith.constant 0 : i32
    %c0_i32_1 = arith.constant 0 : i32
    return %arg0, %c0_i32, %c0_i32_0 : i32, i32, i32
  }
  func.func @transform_13(%arg0: i32) -> (i32, i32, i32) {
    %c0_i32 = arith.constant 0 : i32
    %c0_i32_0 = arith.constant 0 : i32
    %c0_i32_1 = arith.constant 0 : i32
    return %arg0, %c0_i32, %c0_i32_0 : i32, i32, i32
  }
  func.func @transform_14(%arg0: i32) -> (i32, i32, i32) {
    %c0_i32 = arith.constant 0 : i32
    %c0_i32_0 = arith.constant 0 : i32
    %c0_i32_1 = arith.constant 0 : i32
    return %arg0, %c0_i32, %c0_i32_0 : i32, i32, i32
  }
  func.func @transform_15(%arg0: i32) -> (i32, i32, i32) {
    %c0_i32 = arith.constant 0 : i32
    %c0_i32_0 = arith.constant 0 : i32
    %c0_i32_1 = arith.constant 0 : i32
    return %arg0, %c0_i32, %c0_i32_0 : i32, i32, i32
  }
  func.func @transform_16(%arg0: i32) -> (i32, i32, i32) {
    %c0_i32 = arith.constant 0 : i32
    %c0_i32_0 = arith.constant 0 : i32
    %c0_i32_1 = arith.constant 0 : i32
    return %arg0, %c0_i32, %c0_i32_0 : i32, i32, i32
  }
  func.func @transform_17(%arg0: i32) -> (i32, i32, i32) {
    %c0_i32 = arith.constant 0 : i32
    %c0_i32_0 = arith.constant 0 : i32
    %c0_i32_1 = arith.constant 0 : i32
    return %arg0, %c0_i32, %c0_i32_0 : i32, i32, i32
  }
  func.func @transform_18(%arg0: i32) -> (i32, i32, i32) {
    %c0_i32 = arith.constant 0 : i32
    %c0_i32_0 = arith.constant 0 : i32
    %c0_i32_1 = arith.constant 0 : i32
    return %arg0, %c0_i32, %c0_i32_0 : i32, i32, i32
  }
  func.func @transform_19(%arg0: i32) -> (i32, i32) {
    %c0_i32 = arith.constant 0 : i32
    %c0_i32_0 = arith.constant 0 : i32
    %c0_i32_1 = arith.constant 0 : i32
    return %c0_i32, %c0_i32_0 : i32, i32
  }
  func.func @transform_20(%arg0: i32) -> (i32, i32) {
    %c0_i32 = arith.constant 0 : i32
    %c0_i32_0 = arith.constant 0 : i32
    %c0_i32_1 = arith.constant 0 : i32
    return %c0_i32, %c0_i32_0 : i32, i32
  }
  func.func @transform_21(%arg0: i32) -> (i32, i32) {
    %c0_i32 = arith.constant 0 : i32
    %c0_i32_0 = arith.constant 0 : i32
    %c0_i32_1 = arith.constant 0 : i32
    return %c0_i32, %c0_i32_0 : i32, i32
  }
  func.func @transform_22(%arg0: i32) -> (i32, i32, i32) {
    %c0_i32 = arith.constant 0 : i32
    %c0_i32_0 = arith.constant 0 : i32
    %c0_i32_1 = arith.constant 0 : i32
    %c0_i32_2 = arith.constant 0 : i32
    return %c0_i32, %c0_i32_0, %c0_i32_1 : i32, i32, i32
  }
}

</mosaic_0001>

<llo_original>
// kernel: encode_forward.1
$region0: #{encode_forward.1}
  #allocation0 [shape = 'u32[]', space=smem, size = 0x4, offset = 0x4, fixed_abs, tag = 'smem constant byte address 0x4 - core index']
  #allocation1 [shape = 'u32[144,128]{1,0:T(1,128)}', space=vmem, size = 0x12000, scoped, tag = 'internal scratch']
  #allocation2 [shape = 'f32[2,12,32]{2,1,0:T(8,128)}', space=vmem, size = 0x4000, scoped, tag = 'scratch operand']
  %s0 = inlined_call_operand.vmem [shape: f32[2,12,32], index: 0, kind: input, shape index: {}]
  %s1 = inlined_call_operand.vmem [shape: f32[2,12,12], index: 1, kind: input, shape index: {}]
  %s2 = inlined_call_operand.hbm [shape: f32[2,16], index: 2, kind: input, shape index: {}]
  %s3 = inlined_call_operand.hbm [shape: f32[16,64], index: 3, kind: input, shape index: {}]
  %s4 = inlined_call_operand.vmem [shape: f32[1,64], index: 4, kind: input, shape index: {}]
  %s5 = inlined_call_operand.vmem [shape: f32[4,64,32], index: 5, kind: input, shape index: {}]
  %s6 = inlined_call_operand.vmem [shape: f32[4,1,32], index: 6, kind: input, shape index: {}]
  %s7 = inlined_call_operand.vmem [shape: f32[2,1,32], index: 7, kind: input, shape index: {}, may-alias: {7,13}]
  %s8 = inlined_call_operand.vmem [shape: f32[2,1,32], index: 8, kind: input, shape index: {}, may-alias: {8,12,14,18}]
  %s9 = inlined_call_operand.vmem [shape: f32[2,32,96], index: 9, kind: input, shape index: {}]
  %s10 = inlined_call_operand.vmem [shape: f32[2,1,96], index: 10, kind: input, shape index: {}]
  %s11 = inlined_call_operand.hbm [shape: f32[2,32,32], index: 11, kind: input, shape index: {}]
  %s12 = inlined_call_operand.vmem [shape: f32[2,1,32], index: 12, kind: input, shape index: {}, may-alias: {8,12,14,18}]
  %s13 = inlined_call_operand.vmem [shape: f32[2,1,32], index: 13, kind: input, shape index: {}, may-alias: {7,13}]
  %s14 = inlined_call_operand.vmem [shape: f32[2,1,32], index: 14, kind: input, shape index: {}, may-alias: {8,12,14,18}]
  %s15 = inlined_call_operand.hbm [shape: f32[2,32,128], index: 15, kind: input, shape index: {}]
  %s16 = inlined_call_operand.vmem [shape: f32[2,1,128], index: 16, kind: input, shape index: {}]
  %s17 = inlined_call_operand.hbm [shape: f32[2,128,32], index: 17, kind: input, shape index: {}]
  %s18 = inlined_call_operand.vmem [shape: f32[2,1,32], index: 18, kind: input, shape index: {}, may-alias: {8,12,14,18}]
  %s19 = inlined_call_operand.vmem [shape: f32[1,32], index: 19, kind: input, shape index: {}]
  %s20 = inlined_call_operand.vmem [shape: f32[1,32], index: 20, kind: input, shape index: {}]
  %s21 = inlined_call_operand.vmem [shape: f32[32,128], index: 21, kind: input, shape index: {}]
  %s22 = inlined_call_operand.vmem [shape: f32[2,12,128], index: 22, kind: output, shape index: {}]
  %s23 = sld [smem:[#allocation0]]
  $region149: #{encode_forward.1} parent=0
    _
  %s25 = ssub.s32 1, %s23
  %s26 = scalar_select 0, %s25, %s23
  $region1: #{encode_forward.1} parent=0
    #allocation3 [shape = 'u8[1024]{0}', space=vmem, size = 0x400, scoped, tag = 'input window, operand 2, single buffered']
    #allocation4 [shape = 's32[2]{0}', space=sflag, size = 0x8, scoped, tag = 'scoped memory for encode_forward.1']
    #allocation5 [shape = 'u8[8192]{0}', space=vmem, size = 0x2000, scoped, tag = 'input window, operand 3, single buffered']
    #allocation6 [shape = 's32[1]{0}', space=sflag, size = 0x4, scoped, tag = 'scoped memory for encode_forward.1']
    #allocation7 [shape = 'u8[32768]{0}', space=vmem, size = 0x8000, scoped, tag = 'input window, operand 11']
    #allocation8 [shape = 'u8[32768]{0}', space=vmem, size = 0x8000, scoped, tag = 'input window, operand 15']
    #allocation9 [shape = 'u8[131072]{0}', space=vmem, size = 0x20000, scoped, tag = 'input window, operand 17']
    %27 = vsyncpa [#allocation4], 0
    %28 = vsyncpa [#allocation6], 0
    loop: start=0, step=1, limit=4
    $region2: #{encode_forward.1} parent=1 // loop_pre_header
      _
    $region3: #{encode_forward.1} parent=1 // loop_header
      %s30 = sphi 0, %s34
      %p31 = scmp.ge.s32.totalorder %s30, 4
      %s38 = sphi 0, %s38
      %s40 = sphi 0, %s38
      %s41 = sphi 0, %s40
      %s55 = sphi 0, %s41
      %s59 = sphi 0, %s59
      %s61 = sphi 0, %s59
      %s62 = sphi 0, %s61
      %s76 = sphi 0, %s62
      %s80 = sphi 0, %s80
      %s82 = sphi 0, %s80
      %s83 = sphi 0, %s82
      %s97 = sphi 0, %s83
      %s101 = sphi 0, %s101
      %s103 = sphi 0, %s101
      %s104 = sphi 0, %s103
      %s118 = sphi 0, %s104
      %s122 = sphi 0, %s122
      %s124 = sphi 0, %s122
      %s125 = sphi 0, %s124
      %s139 = sphi 0, %s125
      %s143 = sphi 0, %s143
      %s145 = sphi 0, %s143
      %s146 = sphi 0, %s145
      %s160 = sphi 0, %s146
      %s164 = sphi 0, %s164
      %s166 = sphi 0, %s164
      %s167 = sphi 0, %s166
      %s181 = sphi 0, %s167
      %s187 = sphi 0, %s189
      %s190 = sphi 0, %s187
      %s191 = sphi 0, %s190
      %s207 = sphi 0, %s191
      %s213 = sphi 0, %s215
      %s216 = sphi 0, %s213
      %s217 = sphi 0, %s216
      %s233 = sphi 0, %s217
      %s239 = sphi 0, %s241
      %s242 = sphi 0, %s239
      %s243 = sphi 0, %s242
      %s259 = sphi 0, %s243
      %s265 = sphi 0, %s267
      %s268 = sphi 0, %s265
      %s269 = sphi 0, %s268
      %s285 = sphi 0, %s269
      %s291 = sphi 0, %s293
      %s294 = sphi 0, %s291
      %s295 = sphi 0, %s294
      %s311 = sphi 0, %s295
      %s317 = sphi 0, %s319
      %s320 = sphi 0, %s317
      %s321 = sphi 0, %s320
      %s337 = sphi 0, %s321
      %s343 = sphi 0, %s345
      %s346 = sphi 0, %s343
      %s347 = sphi 0, %s346
      %s363 = sphi 0, %s347
      %s369 = sphi 0, %s371
      %s372 = sphi 0, %s369
      %s373 = sphi 0, %s372
      %s389 = sphi 0, %s373
      %s395 = sphi 0, %s397
      %s398 = sphi 0, %s395
      %s399 = sphi 0, %s398
      %s415 = sphi 0, %s399
      %s421 = sphi 0, %s423
      %s424 = sphi 0, %s421
      %s425 = sphi 0, %s424
      %s441 = sphi 0, %s425
      %s447 = sphi 0, %s449
      %s450 = sphi 0, %s447
      %s451 = sphi 0, %s450
      %s467 = sphi 0, %s451
      %s473 = sphi 0, %s475
      %s476 = sphi 0, %s473
      %s477 = sphi 0, %s476
      %s493 = sphi 0, %s477
      %s497 = sphi 0, %s497
      %s499 = sphi 0, %s497
      %s500 = sphi 0, %s499
      %s514 = sphi 0, %s500
      %s518 = sphi 0, %s518
      %s520 = sphi 0, %s518
      %s521 = sphi 0, %s520
      %s535 = sphi 0, %s521
      %s539 = sphi 0, %s539
      %s541 = sphi 0, %s539
      %s542 = sphi 0, %s541
      %s556 = sphi 0, %s542
      %s560 = sphi 0, %s560
      %s562 = sphi 0, %s560
      %s563 = sphi 0, %s562
      %s577 = sphi 0, %s563
    $region4: #{encode_forward.1} parent=1 // loop_header_branch
      %33 = sbr.rel (%p31) target = $region8
    $region5: #{encode_forward.1} parent=1 // loop_body
      %s35 = ssub.s32 %s30, 1
      %s36 = ssub.s32 %s30, 2
      %s37 = sadd.s32 %s30, 1
      %s39 = sadd.s32 %s38, 1
      %p42 = scmp.eq.s32.totalorder %s30, 1
      %p43 = scmp.ne.s32.totalorder %s38, %s40
      %p44 = scmp.eq.s32.totalorder %s30, 0
      %p45 = por %p43, %p44
      %p46 = scmp.ne.s32.totalorder %s38, %s40
      %p47 = scmp.eq.s32.totalorder %s35, 1
      %p48 = por %p46, %p47
      %p49 = scmp.ne.s32.totalorder %s40, %s41
      %p50 = scmp.eq.s32.totalorder %s35, 0
      %p51 = por %p49, %p50
      %p52 = scmp.ne.s32.totalorder %s40, %s41
      %p53 = scmp.eq.s32.totalorder %s36, 1
      %p54 = por %p52, %p53
      %p56 = scmp.ne.s32.totalorder %s41, %s55
      %p57 = scmp.eq.s32.totalorder %s36, 0
      %p58 = por %p56, %p57
      %s60 = sadd.s32 %s59, 1
      %p63 = scmp.eq.s32.totalorder %s30, 1
      %p64 = scmp.ne.s32.totalorder %s59, %s61
      %p65 = scmp.eq.s32.totalorder %s30, 0
      %p66 = por %p64, %p65
      %p67 = scmp.ne.s32.totalorder %s59, %s61
      %p68 = scmp.eq.s32.totalorder %s35, 1
      %p69 = por %p67, %p68
      %p70 = scmp.ne.s32.totalorder %s61, %s62
      %p71 = scmp.eq.s32.totalorder %s35, 0
      %p72 = por %p70, %p71
      %p73 = scmp.ne.s32.totalorder %s61, %s62
      %p74 = scmp.eq.s32.totalorder %s36, 1
      %p75 = por %p73, %p74
      %p77 = scmp.ne.s32.totalorder %s62, %s76
      %p78 = scmp.eq.s32.totalorder %s36, 0
      %p79 = por %p77, %p78
      %s81 = sadd.s32 %s80, 1
      %p84 = scmp.eq.s32.totalorder %s30, 1
      %p85 = scmp.ne.s32.totalorder %s80, %s82
      %p86 = scmp.eq.s32.totalorder %s30, 0
      %p87 = por %p85, %p86
      %p88 = scmp.ne.s32.totalorder %s80, %s82
      %p89 = scmp.eq.s32.totalorder %s35, 1
      %p90 = por %p88, %p89
      %p91 = scmp.ne.s32.totalorder %s82, %s83
      %p92 = scmp.eq.s32.totalorder %s35, 0
      %p93 = por %p91, %p92
      %p94 = scmp.ne.s32.totalorder %s82, %s83
      %p95 = scmp.eq.s32.totalorder %s36, 1
      %p96 = por %p94, %p95
      %p98 = scmp.ne.s32.totalorder %s83, %s97
      %p99 = scmp.eq.s32.totalorder %s36, 0
      %p100 = por %p98, %p99
      %s102 = sadd.s32 %s101, 1
      %p105 = scmp.eq.s32.totalorder %s30, 1
      %p106 = scmp.ne.s32.totalorder %s101, %s103
      %p107 = scmp.eq.s32.totalorder %s30, 0
      %p108 = por %p106, %p107
      %p109 = scmp.ne.s32.totalorder %s101, %s103
      %p110 = scmp.eq.s32.totalorder %s35, 1
      %p111 = por %p109, %p110
      %p112 = scmp.ne.s32.totalorder %s103, %s104
      %p113 = scmp.eq.s32.totalorder %s35, 0
      %p114 = por %p112, %p113
      %p115 = scmp.ne.s32.totalorder %s103, %s104
      %p116 = scmp.eq.s32.totalorder %s36, 1
      %p117 = por %p115, %p116
      %p119 = scmp.ne.s32.totalorder %s104, %s118
      %p120 = scmp.eq.s32.totalorder %s36, 0
      %p121 = por %p119, %p120
      %s123 = sadd.s32 %s122, 1
      %p126 = scmp.eq.s32.totalorder %s30, 1
      %p127 = scmp.ne.s32.totalorder %s122, %s124
      %p128 = scmp.eq.s32.totalorder %s30, 0
      %p129 = por %p127, %p128
      %p130 = scmp.ne.s32.totalorder %s122, %s124
      %p131 = scmp.eq.s32.totalorder %s35, 1
      %p132 = por %p130, %p131
      %p133 = scmp.ne.s32.totalorder %s124, %s125
      %p134 = scmp.eq.s32.totalorder %s35, 0
      %p135 = por %p133, %p134
      %p136 = scmp.ne.s32.totalorder %s124, %s125
      %p137 = scmp.eq.s32.totalorder %s36, 1
      %p138 = por %p136, %p137
      %p140 = scmp.ne.s32.totalorder %s125, %s139
      %p141 = scmp.eq.s32.totalorder %s36, 0
      %p142 = por %p140, %p141
      %s144 = sadd.s32 %s143, 1
      %p147 = scmp.eq.s32.totalorder %s30, 1
      %p148 = scmp.ne.s32.totalorder %s143, %s145
      %p149 = scmp.eq.s32.totalorder %s30, 0
      %p150 = por %p148, %p149
      %p151 = scmp.ne.s32.totalorder %s143, %s145
      %p152 = scmp.eq.s32.totalorder %s35, 1
      %p153 = por %p151, %p152
      %p154 = scmp.ne.s32.totalorder %s145, %s146
      %p155 = scmp.eq.s32.totalorder %s35, 0
      %p156 = por %p154, %p155
      %p157 = scmp.ne.s32.totalorder %s145, %s146
      %p158 = scmp.eq.s32.totalorder %s36, 1
      %p159 = por %p157, %p158
      %p161 = scmp.ne.s32.totalorder %s146, %s160
      %p162 = scmp.eq.s32.totalorder %s36, 0
      %p163 = por %p161, %p162
      %s165 = sadd.s32 %s164, 1
      %p168 = scmp.eq.s32.totalorder %s30, 1
      %p169 = scmp.ne.s32.totalorder %s164, %s166
      %p170 = scmp.eq.s32.totalorder %s30, 0
      %p171 = por %p169, %p170
      %p172 = scmp.ne.s32.totalorder %s164, %s166
      %p173 = scmp.eq.s32.totalorder %s35, 1
      %p174 = por %p172, %p173
      %p175 = scmp.ne.s32.totalorder %s166, %s167
      %p176 = scmp.eq.s32.totalorder %s35, 0
      %p177 = por %p175, %p176
      %p178 = scmp.ne.s32.totalorder %s166, %s167
      %p179 = scmp.eq.s32.totalorder %s36, 1
      %p180 = por %p178, %p179
      %p182 = scmp.ne.s32.totalorder %s167, %s181
      %p183 = scmp.eq.s32.totalorder %s36, 0
      %p184 = por %p182, %p183
      %s185 = ssub.s32 %s30, %s37
      %p186 = scmp.eq.s32.totalorder %s185, 0
      %s188 = sadd.s32 %s187, 1
      %s189 = scalar_select %p186, %s187, %s188
      %p192 = pneg %p186
      %p193 = scmp.eq.s32.totalorder %s30, 1
      %p194 = por %p192, %p193
      %p195 = scmp.ne.s32.totalorder %s187, %s190
      %p196 = scmp.eq.s32.totalorder %s30, 0
      %p197 = por %p195, %p196
      %p198 = scmp.ne.s32.totalorder %s187, %s190
      %p199 = scmp.eq.s32.totalorder %s35, 1
      %p200 = por %p198, %p199
      %p201 = scmp.ne.s32.totalorder %s190, %s191
      %p202 = scmp.eq.s32.totalorder %s35, 0
      %p203 = por %p201, %p202
      %p204 = scmp.ne.s32.totalorder %s190, %s191
      %p205 = scmp.eq.s32.totalorder %s36, 1
      %p206 = por %p204, %p205
      %p208 = scmp.ne.s32.totalorder %s191, %s207
      %p209 = scmp.eq.s32.totalorder %s36, 0
      %p210 = por %p208, %p209
      %s211 = ssub.s32 %s30, %s37
      %p212 = scmp.eq.s32.totalorder %s211, 0
      %s214 = sadd.s32 %s213, 1
      %s215 = scalar_select %p212, %s213, %s214
      %p218 = pneg %p212
      %p219 = scmp.eq.s32.totalorder %s30, 1
      %p220 = por %p218, %p219
      %p221 = scmp.ne.s32.totalorder %s213, %s216
      %p222 = scmp.eq.s32.totalorder %s30, 0
      %p223 = por %p221, %p222
      %p224 = scmp.ne.s32.totalorder %s213, %s216
      %p225 = scmp.eq.s32.totalorder %s35, 1
      %p226 = por %p224, %p225
      %p227 = scmp.ne.s32.totalorder %s216, %s217
      %p228 = scmp.eq.s32.totalorder %s35, 0
      %p229 = por %p227, %p228
      %p230 = scmp.ne.s32.totalorder %s216, %s217
      %p231 = scmp.eq.s32.totalorder %s36, 1
      %p232 = por %p230, %p231
      %p234 = scmp.ne.s32.totalorder %s217, %s233
      %p235 = scmp.eq.s32.totalorder %s36, 0
      %p236 = por %p234, %p235
      %s237 = ssub.s32 %s30, %s37
      %p238 = scmp.eq.s32.totalorder %s237, 0
      %s240 = sadd.s32 %s239, 1
      %s241 = scalar_select %p238, %s239, %s240
      %p244 = pneg %p238
      %p245 = scmp.eq.s32.totalorder %s30, 1
      %p246 = por %p244, %p245
      %p247 = scmp.ne.s32.totalorder %s239, %s242
      %p248 = scmp.eq.s32.totalorder %s30, 0
      %p249 = por %p247, %p248
      %p250 = scmp.ne.s32.totalorder %s239, %s242
      %p251 = scmp.eq.s32.totalorder %s35, 1
      %p252 = por %p250, %p251
      %p253 = scmp.ne.s32.totalorder %s242, %s243
      %p254 = scmp.eq.s32.totalorder %s35, 0
      %p255 = por %p253, %p254
      %p256 = scmp.ne.s32.totalorder %s242, %s243
      %p257 = scmp.eq.s32.totalorder %s36, 1
      %p258 = por %p256, %p257
      %p260 = scmp.ne.s32.totalorder %s243, %s259
      %p261 = scmp.eq.s32.totalorder %s36, 0
      %p262 = por %p260, %p261
      %s263 = ssub.s32 %s30, %s37
      %p264 = scmp.eq.s32.totalorder %s263, 0
      %s266 = sadd.s32 %s265, 1
      %s267 = scalar_select %p264, %s265, %s266
      %p270 = pneg %p264
      %p271 = scmp.eq.s32.totalorder %s30, 1
      %p272 = por %p270, %p271
      %p273 = scmp.ne.s32.totalorder %s265, %s268
      %p274 = scmp.eq.s32.totalorder %s30, 0
      %p275 = por %p273, %p274
      %p276 = scmp.ne.s32.totalorder %s265, %s268
      %p277 = scmp.eq.s32.totalorder %s35, 1
      %p278 = por %p276, %p277
      %p279 = scmp.ne.s32.totalorder %s268, %s269
      %p280 = scmp.eq.s32.totalorder %s35, 0
      %p281 = por %p279, %p280
      %p282 = scmp.ne.s32.totalorder %s268, %s269
      %p283 = scmp.eq.s32.totalorder %s36, 1
      %p284 = por %p282, %p283
      %p286 = scmp.ne.s32.totalorder %s269, %s285
      %p287 = scmp.eq.s32.totalorder %s36, 0
      %p288 = por %p286, %p287
      %s289 = ssub.s32 %s30, %s37
      %p290 = scmp.eq.s32.totalorder %s289, 0
      %s292 = sadd.s32 %s291, 1
      %s293 = scalar_select %p290, %s291, %s292
      %p296 = pneg %p290
      %p297 = scmp.eq.s32.totalorder %s30, 1
      %p298 = por %p296, %p297
      %p299 = scmp.ne.s32.totalorder %s291, %s294
      %p300 = scmp.eq.s32.totalorder %s30, 0
      %p301 = por %p299, %p300
      %p302 = scmp.ne.s32.totalorder %s291, %s294
      %p303 = scmp.eq.s32.totalorder %s35, 1
      %p304 = por %p302, %p303
      %p305 = scmp.ne.s32.totalorder %s294, %s295
      %p306 = scmp.eq.s32.totalorder %s35, 0
      %p307 = por %p305, %p306
      %p308 = scmp.ne.s32.totalorder %s294, %s295
      %p309 = scmp.eq.s32.totalorder %s36, 1
      %p310 = por %p308, %p309
      %p312 = scmp.ne.s32.totalorder %s295, %s311
      %p313 = scmp.eq.s32.totalorder %s36, 0
      %p314 = por %p312, %p313
      %s315 = ssub.s32 %s30, %s37
      %p316 = scmp.eq.s32.totalorder %s315, 0
      %s318 = sadd.s32 %s317, 1
      %s319 = scalar_select %p316, %s317, %s318
      %p322 = pneg %p316
      %p323 = scmp.eq.s32.totalorder %s30, 1
      %p324 = por %p322, %p323
      %p325 = scmp.ne.s32.totalorder %s317, %s320
      %p326 = scmp.eq.s32.totalorder %s30, 0
      %p327 = por %p325, %p326
      %p328 = scmp.ne.s32.totalorder %s317, %s320
      %p329 = scmp.eq.s32.totalorder %s35, 1
      %p330 = por %p328, %p329
      %p331 = scmp.ne.s32.totalorder %s320, %s321
      %p332 = scmp.eq.s32.totalorder %s35, 0
      %p333 = por %p331, %p332
      %p334 = scmp.ne.s32.totalorder %s320, %s321
      %p335 = scmp.eq.s32.totalorder %s36, 1
      %p336 = por %p334, %p335
      %p338 = scmp.ne.s32.totalorder %s321, %s337
      %p339 = scmp.eq.s32.totalorder %s36, 0
      %p340 = por %p338, %p339
      %s341 = ssub.s32 %s30, %s37
      %p342 = scmp.eq.s32.totalorder %s341, 0
      %s344 = sadd.s32 %s343, 1
      %s345 = scalar_select %p342, %s343, %s344
      %p348 = pneg %p342
      %p349 = scmp.eq.s32.totalorder %s30, 1
      %p350 = por %p348, %p349
      %p351 = scmp.ne.s32.totalorder %s343, %s346
      %p352 = scmp.eq.s32.totalorder %s30, 0
      %p353 = por %p351, %p352
      %p354 = scmp.ne.s32.totalorder %s343, %s346
      %p355 = scmp.eq.s32.totalorder %s35, 1
      %p356 = por %p354, %p355
      %p357 = scmp.ne.s32.totalorder %s346, %s347
      %p358 = scmp.eq.s32.totalorder %s35, 0
      %p359 = por %p357, %p358
      %p360 = scmp.ne.s32.totalorder %s346, %s347
      %p361 = scmp.eq.s32.totalorder %s36, 1
      %p362 = por %p360, %p361
      %p364 = scmp.ne.s32.totalorder %s347, %s363
      %p365 = scmp.eq.s32.totalorder %s36, 0
      %p366 = por %p364, %p365
      %s367 = ssub.s32 %s30, %s37
      %p368 = scmp.eq.s32.totalorder %s367, 0
      %s370 = sadd.s32 %s369, 1
      %s371 = scalar_select %p368, %s369, %s370
      %p374 = pneg %p368
      %p375 = scmp.eq.s32.totalorder %s30, 1
      %p376 = por %p374, %p375
      %p377 = scmp.ne.s32.totalorder %s369, %s372
      %p378 = scmp.eq.s32.totalorder %s30, 0
      %p379 = por %p377, %p378
      %p380 = scmp.ne.s32.totalorder %s369, %s372
      %p381 = scmp.eq.s32.totalorder %s35, 1
      %p382 = por %p380, %p381
      %p383 = scmp.ne.s32.totalorder %s372, %s373
      %p384 = scmp.eq.s32.totalorder %s35, 0
      %p385 = por %p383, %p384
      %p386 = scmp.ne.s32.totalorder %s372, %s373
      %p387 = scmp.eq.s32.totalorder %s36, 1
      %p388 = por %p386, %p387
      %p390 = scmp.ne.s32.totalorder %s373, %s389
      %p391 = scmp.eq.s32.totalorder %s36, 0
      %p392 = por %p390, %p391
      %s393 = ssub.s32 %s30, %s37
      %p394 = scmp.eq.s32.totalorder %s393, 0
      %s396 = sadd.s32 %s395, 1
      %s397 = scalar_select %p394, %s395, %s396
      %p400 = pneg %p394
      %p401 = scmp.eq.s32.totalorder %s30, 1
      %p402 = por %p400, %p401
      %p403 = scmp.ne.s32.totalorder %s395, %s398
      %p404 = scmp.eq.s32.totalorder %s30, 0
      %p405 = por %p403, %p404
      %p406 = scmp.ne.s32.totalorder %s395, %s398
      %p407 = scmp.eq.s32.totalorder %s35, 1
      %p408 = por %p406, %p407
      %p409 = scmp.ne.s32.totalorder %s398, %s399
      %p410 = scmp.eq.s32.totalorder %s35, 0
      %p411 = por %p409, %p410
      %p412 = scmp.ne.s32.totalorder %s398, %s399
      %p413 = scmp.eq.s32.totalorder %s36, 1
      %p414 = por %p412, %p413
      %p416 = scmp.ne.s32.totalorder %s399, %s415
      %p417 = scmp.eq.s32.totalorder %s36, 0
      %p418 = por %p416, %p417
      %s419 = ssub.s32 %s30, %s37
      %p420 = scmp.eq.s32.totalorder %s419, 0
      %s422 = sadd.s32 %s421, 1
      %s423 = scalar_select %p420, %s421, %s422
      %p426 = pneg %p420
      %p427 = scmp.eq.s32.totalorder %s30, 1
      %p428 = por %p426, %p427
      %p429 = scmp.ne.s32.totalorder %s421, %s424
      %p430 = scmp.eq.s32.totalorder %s30, 0
      %p431 = por %p429, %p430
      %p432 = scmp.ne.s32.totalorder %s421, %s424
      %p433 = scmp.eq.s32.totalorder %s35, 1
      %p434 = por %p432, %p433
      %p435 = scmp.ne.s32.totalorder %s424, %s425
      %p436 = scmp.eq.s32.totalorder %s35, 0
      %p437 = por %p435, %p436
      %p438 = scmp.ne.s32.totalorder %s424, %s425
      %p439 = scmp.eq.s32.totalorder %s36, 1
      %p440 = por %p438, %p439
      %p442 = scmp.ne.s32.totalorder %s425, %s441
      %p443 = scmp.eq.s32.totalorder %s36, 0
      %p444 = por %p442, %p443
      %s445 = ssub.s32 %s30, %s37
      %p446 = scmp.eq.s32.totalorder %s445, 0
      %s448 = sadd.s32 %s447, 1
      %s449 = scalar_select %p446, %s447, %s448
      %p452 = pneg %p446
      %p453 = scmp.eq.s32.totalorder %s30, 1
      %p454 = por %p452, %p453
      %p455 = scmp.ne.s32.totalorder %s447, %s450
      %p456 = scmp.eq.s32.totalorder %s30, 0
      %p457 = por %p455, %p456
      %p458 = scmp.ne.s32.totalorder %s447, %s450
      %p459 = scmp.eq.s32.totalorder %s35, 1
      %p460 = por %p458, %p459
      %p461 = scmp.ne.s32.totalorder %s450, %s451
      %p462 = scmp.eq.s32.totalorder %s35, 0
      %p463 = por %p461, %p462
      %p464 = scmp.ne.s32.totalorder %s450, %s451
      %p465 = scmp.eq.s32.totalorder %s36, 1
      %p466 = por %p464, %p465
      %p468 = scmp.ne.s32.totalorder %s451, %s467
      %p469 = scmp.eq.s32.totalorder %s36, 0
      %p470 = por %p468, %p469
      %s471 = ssub.s32 %s30, %s37
      %p472 = scmp.eq.s32.totalorder %s471, 0
      %s474 = sadd.s32 %s473, 1
      %s475 = scalar_select %p472, %s473, %s474
      %p478 = pneg %p472
      %p479 = scmp.eq.s32.totalorder %s30, 1
      %p480 = por %p478, %p479
      %p481 = scmp.ne.s32.totalorder %s473, %s476
      %p482 = scmp.eq.s32.totalorder %s30, 0
      %p483 = por %p481, %p482
      %p484 = scmp.ne.s32.totalorder %s473, %s476
      %p485 = scmp.eq.s32.totalorder %s35, 1
      %p486 = por %p484, %p485
      %p487 = scmp.ne.s32.totalorder %s476, %s477
      %p488 = scmp.eq.s32.totalorder %s35, 0
      %p489 = por %p487, %p488
      %p490 = scmp.ne.s32.totalorder %s476, %s477
      %p491 = scmp.eq.s32.totalorder %s36, 1
      %p492 = por %p490, %p491
      %p494 = scmp.ne.s32.totalorder %s477, %s493
      %p495 = scmp.eq.s32.totalorder %s36, 0
      %p496 = por %p494, %p495
      %s498 = sadd.s32 %s497, 1
      %p501 = scmp.eq.s32.totalorder %s30, 1
      %p502 = scmp.ne.s32.totalorder %s497, %s499
      %p503 = scmp.eq.s32.totalorder %s30, 0
      %p504 = por %p502, %p503
      %p505 = scmp.ne.s32.totalorder %s497, %s499
      %p506 = scmp.eq.s32.totalorder %s35, 1
      %p507 = por %p505, %p506
      %p508 = scmp.ne.s32.totalorder %s499, %s500
      %p509 = scmp.eq.s32.totalorder %s35, 0
      %p510 = por %p508, %p509
      %p511 = scmp.ne.s32.totalorder %s499, %s500
      %p512 = scmp.eq.s32.totalorder %s36, 1
      %p513 = por %p511, %p512
      %p515 = scmp.ne.s32.totalorder %s500, %s514
      %p516 = scmp.eq.s32.totalorder %s36, 0
      %p517 = por %p515, %p516
      %s519 = sadd.s32 %s518, 1
      %p522 = scmp.eq.s32.totalorder %s30, 1
      %p523 = scmp.ne.s32.totalorder %s518, %s520
      %p524 = scmp.eq.s32.totalorder %s30, 0
      %p525 = por %p523, %p524
      %p526 = scmp.ne.s32.totalorder %s518, %s520
      %p527 = scmp.eq.s32.totalorder %s35, 1
      %p528 = por %p526, %p527
      %p529 = scmp.ne.s32.totalorder %s520, %s521
      %p530 = scmp.eq.s32.totalorder %s35, 0
      %p531 = por %p529, %p530
      %p532 = scmp.ne.s32.totalorder %s520, %s521
      %p533 = scmp.eq.s32.totalorder %s36, 1
      %p534 = por %p532, %p533
      %p536 = scmp.ne.s32.totalorder %s521, %s535
      %p537 = scmp.eq.s32.totalorder %s36, 0
      %p538 = por %p536, %p537
      %s540 = sadd.s32 %s539, 1
      %p543 = scmp.eq.s32.totalorder %s30, 1
      %p544 = scmp.ne.s32.totalorder %s539, %s541
      %p545 = scmp.eq.s32.totalorder %s30, 0
      %p546 = por %p544, %p545
      %p547 = scmp.ne.s32.totalorder %s539, %s541
      %p548 = scmp.eq.s32.totalorder %s35, 1
      %p549 = por %p547, %p548
      %p550 = scmp.ne.s32.totalorder %s541, %s542
      %p551 = scmp.eq.s32.totalorder %s35, 0
      %p552 = por %p550, %p551
      %p553 = scmp.ne.s32.totalorder %s541, %s542
      %p554 = scmp.eq.s32.totalorder %s36, 1
      %p555 = por %p553, %p554
      %p557 = scmp.ne.s32.totalorder %s542, %s556
      %p558 = scmp.eq.s32.totalorder %s36, 0
      %p559 = por %p557, %p558
      %s561 = sadd.s32 %s560, 1
      %p564 = scmp.eq.s32.totalorder %s30, 1
      %p565 = scmp.ne.s32.totalorder %s560, %s562
      %p566 = scmp.eq.s32.totalorder %s30, 0
      %p567 = por %p565, %p566
      %p568 = scmp.ne.s32.totalorder %s560, %s562
      %p569 = scmp.eq.s32.totalorder %s35, 1
      %p570 = por %p568, %p569
      %p571 = scmp.ne.s32.totalorder %s562, %s563
      %p572 = scmp.eq.s32.totalorder %s35, 0
      %p573 = por %p571, %p572
      %p574 = scmp.ne.s32.totalorder %s562, %s563
      %p575 = scmp.eq.s32.totalorder %s36, 1
      %p576 = por %p574, %p575
      %p578 = scmp.ne.s32.totalorder %s563, %s577
      %p579 = scmp.eq.s32.totalorder %s36, 0
      %p580 = por %p578, %p579
      %p581 = scmp.le.s32.totalorder 1, %s30
      %p582 = scmp.lt.s32.totalorder %s30, 3
      %p583 = pnand %p581, %p582
      %p584 = pneg %p583
      // Predicated region
      $region9: #{encode_forward.1} parent=5 // pred_check
        _
      $region10: #{encode_forward.1} parent=5 // pred_check_branch
        %586 = sbr.rel (%p583) target = $region12
      $region11: #{encode_forward.1} parent=5 // pred_region
        %s587 = ssub.s32 %s30, 1
        // Predicated region
        $region13: #{encode_forward.1} parent=11 // pred_check
          %p588 = pneg %p51
        $region14: #{encode_forward.1} parent=11 // pred_check_branch
          %590 = sbr.rel (%p588) target = $region16
        $region15: #{encode_forward.1} parent=11 // pred_region
          _
        $region16: #{encode_forward.1} parent=11 // pred_fallthru
          _
        // Predicated region
        $region17: #{encode_forward.1} parent=11 // pred_check
          %p591 = pneg %p72
        $region18: #{encode_forward.1} parent=11 // pred_check_branch
          %593 = sbr.rel (%p591) target = $region20
        $region19: #{encode_forward.1} parent=11 // pred_region
          _
        $region20: #{encode_forward.1} parent=11 // pred_fallthru
          _
        // Predicated region
        $region21: #{encode_forward.1} parent=11 // pred_check
          %p594 = pneg %p93
        $region22: #{encode_forward.1} parent=11 // pred_check_branch
          %596 = sbr.rel (%p594) target = $region24
        $region23: #{encode_forward.1} parent=11 // pred_region
          %s598 = ssub.s32 32, 32
          %599 = vsyncadd [#allocation4], %s598
          %s601 = sshll.u32 [#allocation3], 4
          %s602 = int_to_ptr.vmem [resolvable:$true] %s601
          %604 = dma.hbm_to_vmem [thread:$0]  %s2, 32, %s602, [#allocation4]
        $region24: #{encode_forward.1} parent=11 // pred_fallthru
          _
        // Predicated region
        $region25: #{encode_forward.1} parent=11 // pred_check
          %p605 = pneg %p114
        $region26: #{encode_forward.1} parent=11 // pred_check_branch
          %607 = sbr.rel (%p605) target = $region28
        $region27: #{encode_forward.1} parent=11 // pred_region
          %s609 = ssub.s32 256, 256
          %610 = vsyncadd [#allocation6], %s609
          %s611 = sshll.u32 [#allocation5], 4
          %s612 = int_to_ptr.vmem [resolvable:$true] %s611
          %617 = dma.hbm_to_vmem [thread:$0]  %s3, 256, %s612, [#allocation6], 128, 128, 8
        $region28: #{encode_forward.1} parent=11 // pred_fallthru
          _
        // Predicated region
        $region29: #{encode_forward.1} parent=11 // pred_check
          %p618 = pneg %p135
        $region30: #{encode_forward.1} parent=11 // pred_check_branch
          %620 = sbr.rel (%p618) target = $region32
        $region31: #{encode_forward.1} parent=11 // pred_region
          _
        $region32: #{encode_forward.1} parent=11 // pred_fallthru
          _
        // Predicated region
        $region33: #{encode_forward.1} parent=11 // pred_check
          %p621 = pneg %p156
        $region34: #{encode_forward.1} parent=11 // pred_check_branch
          %623 = sbr.rel (%p621) target = $region36
        $region35: #{encode_forward.1} parent=11 // pred_region
          _
        $region36: #{encode_forward.1} parent=11 // pred_fallthru
          _
        // Predicated region
        $region37: #{encode_forward.1} parent=11 // pred_check
          %p624 = pneg %p177
        $region38: #{encode_forward.1} parent=11 // pred_check_branch
          %626 = sbr.rel (%p624) target = $region40
        $region39: #{encode_forward.1} parent=11 // pred_region
          _
        $region40: #{encode_forward.1} parent=11 // pred_fallthru
          _
        // Predicated region
        $region41: #{encode_forward.1} parent=11 // pred_check
          %p627 = pneg %p510
        $region42: #{encode_forward.1} parent=11 // pred_check_branch
          %629 = sbr.rel (%p627) target = $region44
        $region43: #{encode_forward.1} parent=11 // pred_region
          _
        $region44: #{encode_forward.1} parent=11 // pred_fallthru
          _
        // Predicated region
        $region45: #{encode_forward.1} parent=11 // pred_check
          %p630 = pneg %p531
        $region46: #{encode_forward.1} parent=11 // pred_check_branch
          %632 = sbr.rel (%p630) target = $region48
        $region47: #{encode_forward.1} parent=11 // pred_region
          _
        $region48: #{encode_forward.1} parent=11 // pred_fallthru
          _
        // Predicated region
        $region49: #{encode_forward.1} parent=11 // pred_check
          %p633 = pneg %p552
        $region50: #{encode_forward.1} parent=11 // pred_check_branch
          %635 = sbr.rel (%p633) target = $region52
        $region51: #{encode_forward.1} parent=11 // pred_region
          _
        $region52: #{encode_forward.1} parent=11 // pred_fallthru
          _
      $region12: #{encode_forward.1} parent=5 // pred_fallthru
        _
      %p636 = scmp.lt.s32.totalorder %s30, 2
      // Predicated region
      $region53: #{encode_forward.1} parent=5 // pred_check
        %p637 = pneg %p636
      $region54: #{encode_forward.1} parent=5 // pred_check_branch
        %639 = sbr.rel (%p637) target = $region56
      $region55: #{encode_forward.1} parent=5 // pred_region
        // Predicated region
        $region57: #{encode_forward.1} parent=55 // pred_check
          %p640 = pneg %p197
        $region58: #{encode_forward.1} parent=55 // pred_check_branch
          %642 = sbr.rel (%p640) target = $region60
        $region59: #{encode_forward.1} parent=55 // pred_region
          %p643 = scmp.lt.s32.totalorder %s30, 1
          %s644 = scalar_select %p643, %s30, 1
          %s645 = scalar_lea.vmem %s7, %s644
        $region60: #{encode_forward.1} parent=55 // pred_fallthru
          _
        // Predicated region
        $region61: #{encode_forward.1} parent=55 // pred_check
          %p646 = pneg %p223
        $region62: #{encode_forward.1} parent=55 // pred_check_branch
          %648 = sbr.rel (%p646) target = $region64
        $region63: #{encode_forward.1} parent=55 // pred_region
          %p649 = scmp.lt.s32.totalorder %s30, 1
          %s650 = scalar_select %p649, %s30, 1
          %s651 = scalar_lea.vmem %s8, %s650
        $region64: #{encode_forward.1} parent=55 // pred_fallthru
          _
        // Predicated region
        $region65: #{encode_forward.1} parent=55 // pred_check
          %p652 = pneg %p249
        $region66: #{encode_forward.1} parent=55 // pred_check_branch
          %654 = sbr.rel (%p652) target = $region68
        $region67: #{encode_forward.1} parent=55 // pred_region
          %p655 = scmp.lt.s32.totalorder %s30, 1
          %s656 = scalar_select %p655, %s30, 1
          %s657 = smul.addr %s656, 4
          %s658 = smul.addr %s657, 8
          %s659 = scalar_lea.vmem %s9, %s658
        $region68: #{encode_forward.1} parent=55 // pred_fallthru
          _
        // Predicated region
        $region69: #{encode_forward.1} parent=55 // pred_check
          %p660 = pneg %p275
        $region70: #{encode_forward.1} parent=55 // pred_check_branch
          %662 = sbr.rel (%p660) target = $region72
        $region71: #{encode_forward.1} parent=55 // pred_region
          %p663 = scmp.lt.s32.totalorder %s30, 1
          %s664 = scalar_select %p663, %s30, 1
          %s665 = scalar_lea.vmem %s10, %s664
        $region72: #{encode_forward.1} parent=55 // pred_fallthru
          _
        // Predicated region
        $region73: #{encode_forward.1} parent=55 // pred_check
          %p666 = pneg %p301
        $region74: #{encode_forward.1} parent=55 // pred_check_branch
          %668 = sbr.rel (%p666) target = $region76
        $region75: #{encode_forward.1} parent=55 // pred_region
          %s669 = sand.u32 %s30, 1
          %s670 = scalar_lea.sflag [#allocation4], %s669
          %s671 = sand.u32 %s291, 1
          %s672 = smul.addr %s671, 32
          %s673 = scalar_lea.vmem [#allocation7], %s672
          %s675 = ssub.s32 512, 512
          %676 = vsyncadd %s670, %s675
          %s677 = smul.addr %s30, 4
          %s678 = smul.addr %s677, 128
          %s679 = scalar_lea.hbm %s11, %s678
          %s680 = sshll.u32 %s673, 4
          %s681 = int_to_ptr.vmem [resolvable:$true] %s680
          %686 = dma.hbm_to_vmem [thread:$0]  %s679, 512, %s681, %s670, 128, 128, 8
        $region76: #{encode_forward.1} parent=55 // pred_fallthru
          _
        // Predicated region
        $region77: #{encode_forward.1} parent=55 // pred_check
          %p687 = pneg %p327
        $region78: #{encode_forward.1} parent=55 // pred_check_branch
          %689 = sbr.rel (%p687) target = $region80
        $region79: #{encode_forward.1} parent=55 // pred_region
          %p690 = scmp.lt.s32.totalorder %s30, 1
          %s691 = scalar_select %p690, %s30, 1
          %s692 = scalar_lea.vmem %s12, %s691
        $region80: #{encode_forward.1} parent=55 // pred_fallthru
          _
        // Predicated region
        $region81: #{encode_forward.1} parent=55 // pred_check
          %p693 = pneg %p353
        $region82: #{encode_forward.1} parent=55 // pred_check_branch
          %695 = sbr.rel (%p693) target = $region84
        $region83: #{encode_forward.1} parent=55 // pred_region
          %p696 = scmp.lt.s32.totalorder %s30, 1
          %s697 = scalar_select %p696, %s30, 1
          %s698 = scalar_lea.vmem %s13, %s697
        $region84: #{encode_forward.1} parent=55 // pred_fallthru
          _
        // Predicated region
        $region85: #{encode_forward.1} parent=55 // pred_check
          %p699 = pneg %p379
        $region86: #{encode_forward.1} parent=55 // pred_check_branch
          %701 = sbr.rel (%p699) target = $region88
        $region87: #{encode_forward.1} parent=55 // pred_region
          %p702 = scmp.lt.s32.totalorder %s30, 1
          %s703 = scalar_select %p702, %s30, 1
          %s704 = scalar_lea.vmem %s14, %s703
        $region88: #{encode_forward.1} parent=55 // pred_fallthru
          _
        // Predicated region
        $region89: #{encode_forward.1} parent=55 // pred_check
          %p705 = pneg %p405
        $region90: #{encode_forward.1} parent=55 // pred_check_branch
          %707 = sbr.rel (%p705) target = $region92
        $region91: #{encode_forward.1} parent=55 // pred_region
          %s708 = sand.u32 %s30, 1
          %s709 = scalar_lea.sflag [#allocation4], %s708
          %s710 = sand.u32 %s395, 1
          %s711 = smul.addr %s710, 32
          %s712 = scalar_lea.vmem [#allocation8], %s711
          %s714 = ssub.s32 512, 512
          %715 = vsyncadd %s709, %s714
          %s716 = smul.addr %s30, 4
          %s717 = smul.addr %s716, 128
          %s718 = scalar_lea.hbm %s15, %s717
          %s719 = sshll.u32 %s712, 4
          %s720 = int_to_ptr.vmem [resolvable:$true] %s719
          %725 = dma.hbm_to_vmem [thread:$0]  %s718, 512, %s720, %s709, 128, 128, 8
        $region92: #{encode_forward.1} parent=55 // pred_fallthru
          _
        // Predicated region
        $region93: #{encode_forward.1} parent=55 // pred_check
          %p726 = pneg %p431
        $region94: #{encode_forward.1} parent=55 // pred_check_branch
          %728 = sbr.rel (%p726) target = $region96
        $region95: #{encode_forward.1} parent=55 // pred_region
          %p729 = scmp.lt.s32.totalorder %s30, 1
          %s730 = scalar_select %p729, %s30, 1
          %s731 = scalar_lea.vmem %s16, %s730
        $region96: #{encode_forward.1} parent=55 // pred_fallthru
          _
        // Predicated region
        $region97: #{encode_forward.1} parent=55 // pred_check
          %p732 = pneg %p457
        $region98: #{encode_forward.1} parent=55 // pred_check_branch
          %734 = sbr.rel (%p732) target = $region100
        $region99: #{encode_forward.1} parent=55 // pred_region
          %s735 = sand.u32 %s30, 1
          %s736 = scalar_lea.sflag [#allocation4], %s735
          %s737 = sand.u32 %s447, 1
          %s738 = smul.addr %s737, 128
          %s739 = scalar_lea.vmem [#allocation9], %s738
          %s741 = ssub.s32 2048, 2048
          %742 = vsyncadd %s736, %s741
          %s743 = smul.addr %s30, 16
          %s744 = smul.addr %s743, 128
          %s745 = scalar_lea.hbm %s17, %s744
          %s746 = sshll.u32 %s739, 4
          %s747 = int_to_ptr.vmem [resolvable:$true] %s746
          %752 = dma.hbm_to_vmem [thread:$0]  %s745, 2048, %s747, %s736, 128, 128, 8
        $region100: #{encode_forward.1} parent=55 // pred_fallthru
          _
        // Predicated region
        $region101: #{encode_forward.1} parent=55 // pred_check
          %p753 = pneg %p483
        $region102: #{encode_forward.1} parent=55 // pred_check_branch
          %755 = sbr.rel (%p753) target = $region104
        $region103: #{encode_forward.1} parent=55 // pred_region
          %p756 = scmp.lt.s32.totalorder %s30, 1
          %s757 = scalar_select %p756, %s30, 1
          %s758 = scalar_lea.vmem %s18, %s757
        $region104: #{encode_forward.1} parent=55 // pred_fallthru
          _
      $region56: #{encode_forward.1} parent=5 // pred_fallthru
        _
      %p759 = scmp.le.s32.totalorder 1, %s30
      %p760 = scmp.lt.s32.totalorder %s30, 3
      %p761 = pnand %p759, %p760
      %p762 = pneg %p761
      // Predicated region
      $region105: #{encode_forward.1} parent=5 // pred_check
        _
      $region106: #{encode_forward.1} parent=5 // pred_check_branch
        %764 = sbr.rel (%p761) target = $region108
      $region107: #{encode_forward.1} parent=5 // pred_region
        %s765 = ssub.s32 %s30, 1
        // Predicated region
        $region109: #{encode_forward.1} parent=107 // pred_check
          %p766 = pneg %p93
        $region110: #{encode_forward.1} parent=107 // pred_check_branch
          %768 = sbr.rel (%p766) target = $region112
        $region111: #{encode_forward.1} parent=107 // pred_region
          %769 = dma.done [#allocation4], 32
        $region112: #{encode_forward.1} parent=107 // pred_fallthru
          _
        // Predicated region
        $region113: #{encode_forward.1} parent=107 // pred_check
          %p770 = pneg %p114
        $region114: #{encode_forward.1} parent=107 // pred_check_branch
          %772 = sbr.rel (%p770) target = $region116
        $region115: #{encode_forward.1} parent=107 // pred_region
          %773 = dma.done [#allocation6], 256
        $region116: #{encode_forward.1} parent=107 // pred_fallthru
          _
        %s774 = sand.u32 %s35, 1
        %s775 = scalar_lea.sflag [#allocation4], %s774
        %s776 = sand.u32 %s294, 1
        %s777 = smul.addr %s776, 32
        %s778 = scalar_lea.vmem [#allocation7], %s777
        // Predicated region
        $region117: #{encode_forward.1} parent=107 // pred_check
          %p779 = pneg %p307
        $region118: #{encode_forward.1} parent=107 // pred_check_branch
          %781 = sbr.rel (%p779) target = $region120
        $region119: #{encode_forward.1} parent=107 // pred_region
          %782 = dma.done %s775, 512
        $region120: #{encode_forward.1} parent=107 // pred_fallthru
          _
        %s783 = sand.u32 %s35, 1
        %s784 = scalar_lea.sflag [#allocation4], %s783
        %s785 = sand.u32 %s398, 1
        %s786 = smul.addr %s785, 32
        %s787 = scalar_lea.vmem [#allocation8], %s786
        // Predicated region
        $region121: #{encode_forward.1} parent=107 // pred_check
          %p788 = pneg %p411
        $region122: #{encode_forward.1} parent=107 // pred_check_branch
          %790 = sbr.rel (%p788) target = $region124
        $region123: #{encode_forward.1} parent=107 // pred_region
          %791 = dma.done %s784, 512
        $region124: #{encode_forward.1} parent=107 // pred_fallthru
          _
        %s792 = sand.u32 %s35, 1
        %s793 = scalar_lea.sflag [#allocation4], %s792
        %s794 = sand.u32 %s450, 1
        %s795 = smul.addr %s794, 128
        %s796 = scalar_lea.vmem [#allocation9], %s795
        // Predicated region
        $region125: #{encode_forward.1} parent=107 // pred_check
          %p797 = pneg %p463
        $region126: #{encode_forward.1} parent=107 // pred_check_branch
          %799 = sbr.rel (%p797) target = $region128
        $region127: #{encode_forward.1} parent=107 // pred_region
          %800 = dma.done %s793, 2048
        $region128: #{encode_forward.1} parent=107 // pred_fallthru
          _
        %p801 = pneg %p51
        %p802 = pneg %p48
        %p803 = pneg %p72
        %p804 = pneg %p69
        %p805 = pneg %p93
        %p806 = pneg %p90
        %p807 = pneg %p114
        %p808 = pneg %p111
        %p809 = pneg %p135
        %p810 = pneg %p132
        %p811 = pneg %p156
        %p812 = pneg %p153
        %p813 = pneg %p177
        %p814 = pneg %p174
        %p815 = scmp.lt.s32.totalorder %s35, 1
        %s816 = scalar_select %p815, %s35, 1
        %s817 = scalar_lea.vmem %s7, %s816
        %p818 = pneg %p203
        %p819 = pneg %p200
        %p820 = scmp.lt.s32.totalorder %s35, 1
        %s821 = scalar_select %p820, %s35, 1
        %s822 = scalar_lea.vmem %s8, %s821
        %p823 = pneg %p229
        %p824 = pneg %p226
        %p825 = scmp.lt.s32.totalorder %s35, 1
        %s826 = scalar_select %p825, %s35, 1
        %s827 = smul.addr %s826, 4
        %s828 = smul.addr %s827, 8
        %s829 = scalar_lea.vmem %s9, %s828
        %p830 = pneg %p255
        %p831 = pneg %p252
        %p832 = scmp.lt.s32.totalorder %s35, 1
        %s833 = scalar_select %p832, %s35, 1
        %s834 = scalar_lea.vmem %s10, %s833
        %p835 = pneg %p281
        %p836 = pneg %p278
        %s837 = sand.u32 %s35, 1
        %s838 = scalar_lea.sflag [#allocation4], %s837
        %s839 = sand.u32 %s294, 1
        %s840 = smul.addr %s839, 32
        %s841 = scalar_lea.vmem [#allocation7], %s840
        %p842 = pneg %p307
        %p843 = pneg %p304
        %p844 = scmp.lt.s32.totalorder %s35, 1
        %s845 = scalar_select %p844, %s35, 1
        %s846 = scalar_lea.vmem %s12, %s845
        %p847 = pneg %p333
        %p848 = pneg %p330
        %p849 = scmp.lt.s32.totalorder %s35, 1
        %s850 = scalar_select %p849, %s35, 1
        %s851 = scalar_lea.vmem %s13, %s850
        %p852 = pneg %p359
        %p853 = pneg %p356
        %p854 = scmp.lt.s32.totalorder %s35, 1
        %s855 = scalar_select %p854, %s35, 1
        %s856 = scalar_lea.vmem %s14, %s855
        %p857 = pneg %p385
        %p858 = pneg %p382
        %s859 = sand.u32 %s35, 1
        %s860 = scalar_lea.sflag [#allocation4], %s859
        %s861 = sand.u32 %s398, 1
        %s862 = smul.addr %s861, 32
        %s863 = scalar_lea.vmem [#allocation8], %s862
        %p864 = pneg %p411
        %p865 = pneg %p408
        %p866 = scmp.lt.s32.totalorder %s35, 1
        %s867 = scalar_select %p866, %s35, 1
        %s868 = scalar_lea.vmem %s16, %s867
        %p869 = pneg %p437
        %p870 = pneg %p434
        %s871 = sand.u32 %s35, 1
        %s872 = scalar_lea.sflag [#allocation4], %s871
        %s873 = sand.u32 %s450, 1
        %s874 = smul.addr %s873, 128
        %s875 = scalar_lea.vmem [#allocation9], %s874
        %p876 = pneg %p463
        %p877 = pneg %p460
        %p878 = scmp.lt.s32.totalorder %s35, 1
        %s879 = scalar_select %p878, %s35, 1
        %s880 = scalar_lea.vmem %s18, %s879
        %p881 = pneg %p489
        %p882 = pneg %p486
        %p883 = pneg %p510
        %p884 = pneg %p507
        %p885 = pneg %p531
        %p886 = pneg %p528
        %p887 = pneg %p552
        %p888 = pneg %p549
        %p889 = pneg %p573
        %p890 = pneg %p570
        %p891 = scmp.lt.s32.totalorder %s35, 1
        %s892 = scalar_select %p891, %s35, 1
        %s893 = scalar_lea.vmem %s7, %s892
        %p894 = scmp.lt.s32.totalorder %s35, 1
        %s895 = scalar_select %p894, %s35, 1
        %s896 = scalar_lea.vmem %s8, %s895
        %p897 = scmp.lt.s32.totalorder %s35, 1
        %s898 = scalar_select %p897, %s35, 1
        %s899 = smul.addr %s898, 4
        %s900 = smul.addr %s899, 8
        %s901 = scalar_lea.vmem %s9, %s900
        %p902 = scmp.lt.s32.totalorder %s35, 1
        %s903 = scalar_select %p902, %s35, 1
        %s904 = scalar_lea.vmem %s10, %s903
        %p905 = scmp.lt.s32.totalorder %s35, 1
        %s906 = scalar_select %p905, %s35, 1
        %s907 = scalar_lea.vmem %s12, %s906
        %p908 = scmp.lt.s32.totalorder %s35, 1
        %s909 = scalar_select %p908, %s35, 1
        %s910 = scalar_lea.vmem %s13, %s909
        %p911 = scmp.lt.s32.totalorder %s35, 1
        %s912 = scalar_select %p911, %s35, 1
        %s913 = scalar_lea.vmem %s14, %s912
        %p914 = scmp.lt.s32.totalorder %s35, 1
        %s915 = scalar_select %p914, %s35, 1
        %s916 = scalar_lea.vmem %s16, %s915
        %p917 = scmp.lt.s32.totalorder %s35, 1
        %s918 = scalar_select %p917, %s35, 1
        %s919 = scalar_lea.vmem %s18, %s918
        %p920 = scmp.eq.s32.totalorder %s35, 0
        // Predicated region
        $region129: #{encode_forward.1} parent=107 // pred_check
          %p921 = pneg %p920
        $region130: #{encode_forward.1} parent=107 // pred_check_branch
          %923 = sbr.rel (%p921) target = $region132
        $region131: #{encode_forward.1} parent=107 // pred_region
          %v924 = vld [vmem:[#allocation3] sm:$0x3]
          %v925 = vld [vmem:[#allocation5] sm:$0xff]
          %v926 = vld [vmem:[#allocation5 + $0x8] sm:$0xff]
          %v927 = vld [vmem:[%s4] sm:$0x1]
          %v929 = vlaneseq
          %v930 = vshrl.u32 %v929, 7
          %v931 = vsub.s32 0, %v930
          %v932 = vrot.slane %v927, %v931
          %vm934 = vcmask 130048
          %v936 = vsel %vm934, %v924, 0
          %938 = vmatprep.subr.mxu0 0.0
          %939 = vmatpush1.msra.mxu0 %v925
          %940 = vmatprep.subr.mxu0 0.0
          %941 = vmatpush1.msra.mxu0 %v926
          %942 = vmatprep.subr.mxu0 0.0
          %943 = vmatpush1.msra.mxu0 0.0
          %944 = vmatprep.subr.mxu0 0.0
          %945 = vmatpush1.msra.mxu0 0.0
          %946 = vmatprep.subr.mxu0 0.0
          %947 = vmatpush1.msra.mxu0 0.0
          %948 = vmatprep.subr.mxu0 0.0
          %949 = vmatpush1.msra.mxu0 0.0
          %950 = vmatprep.subr.mxu0 0.0
          %951 = vmatpush1.msra.mxu0 0.0
          %952 = vmatprep.subr.mxu0 0.0
          %953 = vmatpush1.msra.mxu0 0.0
          %954 = vmatprep.subr.mxu0 0.0
          %955 = vmatpush1.msra.mxu0 0.0
          %956 = vmatprep.subr.mxu0 0.0
          %957 = vmatpush1.msra.mxu0 0.0
          %958 = vmatprep.subr.mxu0 0.0
          %959 = vmatpush1.msra.mxu0 0.0
          %960 = vmatprep.subr.mxu0 0.0
          %961 = vmatpush1.msra.mxu0 0.0
          %962 = vmatprep.subr.mxu0 0.0
          %963 = vmatpush1.msra.mxu0 0.0
          %964 = vmatprep.subr.mxu0 0.0
          %965 = vmatpush1.msra.mxu0 0.0
          %966 = vmatprep.subr.mxu0 0.0
          %967 = vmatpush1.msra.mxu0 0.0
          %968 = vmatprep.subr.mxu0 0.0
          %969 = vmatpush1.msra.mxu0 0.0
          %970 = vmatprep.subr.mxu0 0.0
          %971 = vmatpush1.msra.mxu0 0.0
          %972 = vmatprep.subr.mxu0 0.0
          %973 = vmatpush1.msra.mxu0 0.0
          %974 = vmatprep.subr.mxu0 0.0
          %975 = vmatpush1.msra.mxu0 0.0
          %976 = vmatprep.subr.mxu0 0.0
          %977 = vmatpush1.msra.mxu0 0.0
          %978 = vmatprep.subr.mxu0 0.0
          %979 = vmatpush1.msra.mxu0 0.0
          %980 = vmatprep.subr.mxu0 0.0
          %981 = vmatpush1.msra.mxu0 0.0
          %982 = vmatprep.subr.mxu0 0.0
          %983 = vmatpush1.msra.mxu0 0.0
          %984 = vmatprep.subr.mxu0 0.0
          %985 = vmatpush1.msra.mxu0 0.0
          %986 = vmatprep.subr.mxu0 0.0
          %987 = vmatpush1.msra.mxu0 0.0
          %988 = vmatprep.subr.mxu0 0.0
          %989 = vmatpush1.msra.mxu0 0.0
          %990 = vmatprep.subr.mxu0 0.0
          %991 = vmatpush1.msra.mxu0 0.0
          %992 = vmatprep.subr.mxu0 0.0
          %993 = vmatpush1.msra.mxu0 0.0
          %994 = vmatprep.subr.mxu0 0.0
          %995 = vmatpush1.msra.mxu0 0.0
          %996 = vmatprep.subr.mxu0 0.0
          %997 = vmatpush1.msra.mxu0 0.0
          %998 = vmatprep.subr.mxu0 0.0
          %999 = vmatpush1.msra.mxu0 0.0
          %1000 = vmatprep.subr.mxu0 0.0
          %1001 = vmatpush1.msra.mxu0 0.0
          %1002 = vmatprep.mubr.f32.mxu0 0.0
          %1003 = vmatmul.mubr.f32.gmra.mrb[0].mxu0 %v936
          %v1004 = vpop.f32.mrb[0].mxu0
          %v1005 = vadd.f32 %v932, %v1004
          %v1006 = vpop.f32.mrb[0].mxu0
          %1007 = vdwg.mxu0
          %v1008 = vtanh.pop %v1005
          %v1009 = vlaneseq
          %v1010 = vshrl.u32 %v1009, 7
          %v1011 = vadd.s32 %v1010, 8
          %v1012 = vld [vmem:[%s0] sm:$0xff]
          %v1013 = vld [vmem:[%s0 + $0x8] sm:$0xf]
          %v1014 = vld [vmem:[%s0 + $0x10] sm:$0xff]
          %v1015 = vld [vmem:[%s0 + $0x18] sm:$0xf]
          %v1016 = vld [vmem:[%s5] sm:$0xff]
          %v1017 = vld [vmem:[%s5 + $0x8] sm:$0xff]
          %v1018 = vld [vmem:[%s5 + $0x10] sm:$0xff]
          %v1019 = vld [vmem:[%s5 + $0x18] sm:$0xff]
          %v1020 = vld [vmem:[%s5 + $0x20] sm:$0xff]
          %v1021 = vld [vmem:[%s5 + $0x28] sm:$0xff]
          %v1022 = vld [vmem:[%s5 + $0x30] sm:$0xff]
          %v1023 = vld [vmem:[%s5 + $0x38] sm:$0xff]
          %v1024 = vld [vmem:[%s6] sm:$0x1]
          %v1026 = vlaneseq
          %v1027 = vshrl.u32 %v1026, 7
          %v1028 = vsub.s32 0, %v1027
          %v1029 = vrot.slane %v1024, %v1028
          %vm1031 = vcmask 523264
          %v1033 = vsel %vm1031, %v1008, 0
          %1035 = vmatprep.subr.mxu0 0.0
          %1036 = vmatpush1.msra.mxu0 %v1016
          %1037 = vmatprep.subr.mxu0 0.0
          %1038 = vmatpush1.msra.mxu0 %v1017
          %1039 = vmatprep.subr.mxu0 0.0
          %1040 = vmatpush1.msra.mxu0 %v1018
          %1041 = vmatprep.subr.mxu0 0.0
          %1042 = vmatpush1.msra.mxu0 %v1019
          %1043 = vmatprep.subr.mxu0 0.0
          %1044 = vmatpush1.msra.mxu0 %v1020
          %1045 = vmatprep.subr.mxu0 0.0
          %1046 = vmatpush1.msra.mxu0 %v1021
          %1047 = vmatprep.subr.mxu0 0.0
          %1048 = vmatpush1.msra.mxu0 %v1022
          %1049 = vmatprep.subr.mxu0 0.0
          %1050 = vmatpush1.msra.mxu0 %v1023
          %1051 = vmatprep.subr.mxu0 0.0
          %1052 = vmatpush1.msra.mxu0 0.0
          %1053 = vmatprep.subr.mxu0 0.0
          %1054 = vmatpush1.msra.mxu0 0.0
          %1055 = vmatprep.subr.mxu0 0.0
          %1056 = vmatpush1.msra.mxu0 0.0
          %1057 = vmatprep.subr.mxu0 0.0
          %1058 = vmatpush1.msra.mxu0 0.0
          %1059 = vmatprep.subr.mxu0 0.0
          %1060 = vmatpush1.msra.mxu0 0.0
          %1061 = vmatprep.subr.mxu0 0.0
          %1062 = vmatpush1.msra.mxu0 0.0
          %1063 = vmatprep.subr.mxu0 0.0
          %1064 = vmatpush1.msra.mxu0 0.0
          %1065 = vmatprep.subr.mxu0 0.0
          %1066 = vmatpush1.msra.mxu0 0.0
          %1067 = vmatprep.subr.mxu0 0.0
          %1068 = vmatpush1.msra.mxu0 0.0
          %1069 = vmatprep.subr.mxu0 0.0
          %1070 = vmatpush1.msra.mxu0 0.0
          %1071 = vmatprep.subr.mxu0 0.0
          %1072 = vmatpush1.msra.mxu0 0.0
          %1073 = vmatprep.subr.mxu0 0.0
          %1074 = vmatpush1.msra.mxu0 0.0
          %1075 = vmatprep.subr.mxu0 0.0
          %1076 = vmatpush1.msra.mxu0 0.0
          %1077 = vmatprep.subr.mxu0 0.0
          %1078 = vmatpush1.msra.mxu0 0.0
          %1079 = vmatprep.subr.mxu0 0.0
          %1080 = vmatpush1.msra.mxu0 0.0
          %1081 = vmatprep.subr.mxu0 0.0
          %1082 = vmatpush1.msra.mxu0 0.0
          %1083 = vmatprep.subr.mxu0 0.0
          %1084 = vmatpush1.msra.mxu0 0.0
          %1085 = vmatprep.subr.mxu0 0.0
          %1086 = vmatpush1.msra.mxu0 0.0
          %1087 = vmatprep.subr.mxu0 0.0
          %1088 = vmatpush1.msra.mxu0 0.0
          %1089 = vmatprep.subr.mxu0 0.0
          %1090 = vmatpush1.msra.mxu0 0.0
          %1091 = vmatprep.subr.mxu0 0.0
          %1092 = vmatpush1.msra.mxu0 0.0
          %1093 = vmatprep.subr.mxu0 0.0
          %1094 = vmatpush1.msra.mxu0 0.0
          %1095 = vmatprep.subr.mxu0 0.0
          %1096 = vmatpush1.msra.mxu0 0.0
          %1097 = vmatprep.subr.mxu0 0.0
          %1098 = vmatpush1.msra.mxu0 0.0
          %1099 = vmatprep.mubr.f32.mxu0 0.0
          %1100 = vmatmul.mubr.f32.gmra.mrb[0].mxu0 %v1033
          %v1101 = vpop.f32.mrb[0].mxu0
          %v1102 = vadd.f32 %v1029, %v1101
          %v1103 = vpop.f32.mrb[0].mxu0
          %1104 = vdwg.mxu0
          %vm1105 = vcmp.eq.s32.totalorder %v1010, 0
          %vm1106 = vcmp.eq.s32.totalorder %v1011, 0
          %v1109 = vunpack.c.l.s4 1966171168
          %v1110 = vunpack.c.0.s8 %v1109
          %v1111 = vlaneseq
          %v1112 = vshrl.u32 %v1111, 7
          %v1113 = vsub.s32 %v1110, %v1112
          %v1114 = vrot.slane %v1102, %v1113
          %v1115 = vcombine.high %v1114, %v1114
          %v1117 = vunpack.c.l.s4 1966171168
          %v1118 = vunpack.c.0.s8 %v1117
          %v1119 = vlaneseq
          %v1120 = vshrl.u32 %v1119, 7
          %v1121 = vsub.s32 %v1118, %v1120
          %v1122 = vrot.slane %v1114, %v1121
          %v1124 = vunpack.c.l.s4 1966171168
          %v1125 = vunpack.c.0.s8 %v1124
          %v1126 = vlaneseq
          %v1127 = vshrl.u32 %v1126, 7
          %v1128 = vsub.s32 %v1125, %v1127
          %v1129 = vrot.slane %v1115, %v1128
          %v1130 = vlaneseq
          %v1131 = vshrl.u32 %v1130, 7
          %v1132 = vsub.s32 0, %v1131
          %v1133 = vrot.slane %v1122, %v1132
          %v1134 = vlaneseq
          %v1135 = vshrl.u32 %v1134, 7
          %v1136 = vsub.s32 0, %v1135
          %v1137 = vrot.slane %v1129, %v1136
          %v1140 = vsel %vm1105, %v1133, 0.0
          %v1141 = vsel %vm1106, %v1133, 0.0
          %v1142 = vsel %vm1105, %v1137, 0.0
          %v1143 = vsel %vm1106, %v1137, 0.0
          %v1144 = vadd.f32 %v1012, %v1140
          %v1145 = vadd.f32 %v1013, %v1141
          %v1146 = vadd.f32 %v1014, %v1142
          %v1147 = vadd.f32 %v1015, %v1143
          %s1148 = scalar_lea.vmem %s5, 64
          %v1149 = vld [vmem:[%s1148] sm:$0xff]
          %v1150 = vld [vmem:[%s1148 + $0x8] sm:$0xff]
          %v1151 = vld [vmem:[%s1148 + $0x10] sm:$0xff]
          %v1152 = vld [vmem:[%s1148 + $0x18] sm:$0xff]
          %v1153 = vld [vmem:[%s1148 + $0x20] sm:$0xff]
          %v1154 = vld [vmem:[%s1148 + $0x28] sm:$0xff]
          %v1155 = vld [vmem:[%s1148 + $0x30] sm:$0xff]
          %v1156 = vld [vmem:[%s1148 + $0x38] sm:$0xff]
          %s1157 = scalar_lea.vmem %s6, 1
          %v1158 = vld [vmem:[%s1157] sm:$0x1]
          %v1160 = vlaneseq
          %v1161 = vshrl.u32 %v1160, 7
          %v1162 = vsub.s32 0, %v1161
          %v1163 = vrot.slane %v1158, %v1162
          %1165 = vmatprep.subr.mxu0 0.0
          %1166 = vmatpush1.msra.mxu0 %v1149
          %1167 = vmatprep.subr.mxu0 0.0
          %1168 = vmatpush1.msra.mxu0 %v1150
          %1169 = vmatprep.subr.mxu0 0.0
          %1170 = vmatpush1.msra.mxu0 %v1151
          %1171 = vmatprep.subr.mxu0 0.0
          %1172 = vmatpush1.msra.mxu0 %v1152
          %1173 = vmatprep.subr.mxu0 0.0
          %1174 = vmatpush1.msra.mxu0 %v1153
          %1175 = vmatprep.subr.mxu0 0.0
          %1176 = vmatpush1.msra.mxu0 %v1154
          %1177 = vmatprep.subr.mxu0 0.0
          %1178 = vmatpush1.msra.mxu0 %v1155
          %1179 = vmatprep.subr.mxu0 0.0
          %1180 = vmatpush1.msra.mxu0 %v1156
          %1181 = vmatprep.subr.mxu0 0.0
          %1182 = vmatpush1.msra.mxu0 0.0
          %1183 = vmatprep.subr.mxu0 0.0
          %1184 = vmatpush1.msra.mxu0 0.0
          %1185 = vmatprep.subr.mxu0 0.0
          %1186 = vmatpush1.msra.mxu0 0.0
          %1187 = vmatprep.subr.mxu0 0.0
          %1188 = vmatpush1.msra.mxu0 0.0
          %1189 = vmatprep.subr.mxu0 0.0
          %1190 = vmatpush1.msra.mxu0 0.0
          %1191 = vmatprep.subr.mxu0 0.0
          %1192 = vmatpush1.msra.mxu0 0.0
          %1193 = vmatprep.subr.mxu0 0.0
          %1194 = vmatpush1.msra.mxu0 0.0
          %1195 = vmatprep.subr.mxu0 0.0
          %1196 = vmatpush1.msra.mxu0 0.0
          %1197 = vmatprep.subr.mxu0 0.0
          %1198 = vmatpush1.msra.mxu0 0.0
          %1199 = vmatprep.subr.mxu0 0.0
          %1200 = vmatpush1.msra.mxu0 0.0
          %1201 = vmatprep.subr.mxu0 0.0
          %1202 = vmatpush1.msra.mxu0 0.0
          %1203 = vmatprep.subr.mxu0 0.0
          %1204 = vmatpush1.msra.mxu0 0.0
          %1205 = vmatprep.subr.mxu0 0.0
          %1206 = vmatpush1.msra.mxu0 0.0
          %1207 = vmatprep.subr.mxu0 0.0
          %1208 = vmatpush1.msra.mxu0 0.0
          %1209 = vmatprep.subr.mxu0 0.0
          %1210 = vmatpush1.msra.mxu0 0.0
          %1211 = vmatprep.subr.mxu0 0.0
          %1212 = vmatpush1.msra.mxu0 0.0
          %1213 = vmatprep.subr.mxu0 0.0
          %1214 = vmatpush1.msra.mxu0 0.0
          %1215 = vmatprep.subr.mxu0 0.0
          %1216 = vmatpush1.msra.mxu0 0.0
          %1217 = vmatprep.subr.mxu0 0.0
          %1218 = vmatpush1.msra.mxu0 0.0
          %1219 = vmatprep.subr.mxu0 0.0
          %1220 = vmatpush1.msra.mxu0 0.0
          %1221 = vmatprep.subr.mxu0 0.0
          %1222 = vmatpush1.msra.mxu0 0.0
          %1223 = vmatprep.subr.mxu0 0.0
          %1224 = vmatpush1.msra.mxu0 0.0
          %1225 = vmatprep.subr.mxu0 0.0
          %1226 = vmatpush1.msra.mxu0 0.0
          %1227 = vmatprep.subr.mxu0 0.0
          %1228 = vmatpush1.msra.mxu0 0.0
          %1229 = vmatprep.mubr.f32.mxu0 0.0
          %1230 = vmatmul.mubr.f32.gmra.mrb[0].mxu0 %v1033
          %v1231 = vpop.f32.mrb[0].mxu0
          %v1232 = vadd.f32 %v1163, %v1231
          %v1233 = vpop.f32.mrb[0].mxu0
          %1234 = vdwg.mxu0
          %vm1235 = vcmp.eq.s32.totalorder %v1010, 1
          %vm1236 = vcmp.eq.s32.totalorder %v1011, 1
          %v1239 = vunpack.c.l.s4 1966171168
          %v1240 = vunpack.c.0.s8 %v1239
          %v1241 = vlaneseq
          %v1242 = vshrl.u32 %v1241, 7
          %v1243 = vsub.s32 %v1240, %v1242
          %v1244 = vrot.slane %v1232, %v1243
          %v1245 = vcombine.high %v1244, %v1244
          %v1247 = vunpack.c.l.s4 1966171168
          %v1248 = vunpack.c.0.s8 %v1247
          %v1249 = vlaneseq
          %v1250 = vshrl.u32 %v1249, 7
          %v1251 = vsub.s32 %v1248, %v1250
          %v1252 = vrot.slane %v1244, %v1251
          %v1254 = vunpack.c.l.s4 1966171168
          %v1255 = vunpack.c.0.s8 %v1254
          %v1256 = vlaneseq
          %v1257 = vshrl.u32 %v1256, 7
          %v1258 = vsub.s32 %v1255, %v1257
          %v1259 = vrot.slane %v1245, %v1258
          %v1260 = vlaneseq
          %v1261 = vshrl.u32 %v1260, 7
          %v1262 = vsub.s32 0, %v1261
          %v1263 = vrot.slane %v1252, %v1262
          %v1264 = vlaneseq
          %v1265 = vshrl.u32 %v1264, 7
          %v1266 = vsub.s32 0, %v1265
          %v1267 = vrot.slane %v1259, %v1266
          %v1270 = vsel %vm1235, %v1263, 0.0
          %v1271 = vsel %vm1236, %v1263, 0.0
          %v1272 = vsel %vm1235, %v1267, 0.0
          %v1273 = vsel %vm1236, %v1267, 0.0
          %v1274 = vadd.f32 %v1144, %v1270
          %v1275 = vadd.f32 %v1145, %v1271
          %v1276 = vadd.f32 %v1146, %v1272
          %v1277 = vadd.f32 %v1147, %v1273
          %s1278 = scalar_lea.vmem %s5, 128
          %v1279 = vld [vmem:[%s1278] sm:$0xff]
          %v1280 = vld [vmem:[%s1278 + $0x8] sm:$0xff]
          %v1281 = vld [vmem:[%s1278 + $0x10] sm:$0xff]
          %v1282 = vld [vmem:[%s1278 + $0x18] sm:$0xff]
          %v1283 = vld [vmem:[%s1278 + $0x20] sm:$0xff]
          %v1284 = vld [vmem:[%s1278 + $0x28] sm:$0xff]
          %v1285 = vld [vmem:[%s1278 + $0x30] sm:$0xff]
          %v1286 = vld [vmem:[%s1278 + $0x38] sm:$0xff]
          %s1287 = scalar_lea.vmem %s6, 2
          %v1288 = vld [vmem:[%s1287] sm:$0x1]
          %v1290 = vlaneseq
          %v1291 = vshrl.u32 %v1290, 7
          %v1292 = vsub.s32 0, %v1291
          %v1293 = vrot.slane %v1288, %v1292
          %1295 = vmatprep.subr.mxu0 0.0
          %1296 = vmatpush1.msra.mxu0 %v1279
          %1297 = vmatprep.subr.mxu0 0.0
          %1298 = vmatpush1.msra.mxu0 %v1280
          %1299 = vmatprep.subr.mxu0 0.0
          %1300 = vmatpush1.msra.mxu0 %v1281
          %1301 = vmatprep.subr.mxu0 0.0
          %1302 = vmatpush1.msra.mxu0 %v1282
          %1303 = vmatprep.subr.mxu0 0.0
          %1304 = vmatpush1.msra.mxu0 %v1283
          %1305 = vmatprep.subr.mxu0 0.0
          %1306 = vmatpush1.msra.mxu0 %v1284
          %1307 = vmatprep.subr.mxu0 0.0
          %1308 = vmatpush1.msra.mxu0 %v1285
          %1309 = vmatprep.subr.mxu0 0.0
          %1310 = vmatpush1.msra.mxu0 %v1286
          %1311 = vmatprep.subr.mxu0 0.0
          %1312 = vmatpush1.msra.mxu0 0.0
          %1313 = vmatprep.subr.mxu0 0.0
          %1314 = vmatpush1.msra.mxu0 0.0
          %1315 = vmatprep.subr.mxu0 0.0
          %1316 = vmatpush1.msra.mxu0 0.0
          %1317 = vmatprep.subr.mxu0 0.0
          %1318 = vmatpush1.msra.mxu0 0.0
          %1319 = vmatprep.subr.mxu0 0.0
          %1320 = vmatpush1.msra.mxu0 0.0
          %1321 = vmatprep.subr.mxu0 0.0
          %1322 = vmatpush1.msra.mxu0 0.0
          %1323 = vmatprep.subr.mxu0 0.0
          %1324 = vmatpush1.msra.mxu0 0.0
          %1325 = vmatprep.subr.mxu0 0.0
          %1326 = vmatpush1.msra.mxu0 0.0
          %1327 = vmatprep.subr.mxu0 0.0
          %1328 = vmatpush1.msra.mxu0 0.0
          %1329 = vmatprep.subr.mxu0 0.0
          %1330 = vmatpush1.msra.mxu0 0.0
          %1331 = vmatprep.subr.mxu0 0.0
          %1332 = vmatpush1.msra.mxu0 0.0
          %1333 = vmatprep.subr.mxu0 0.0
          %1334 = vmatpush1.msra.mxu0 0.0
          %1335 = vmatprep.subr.mxu0 0.0
          %1336 = vmatpush1.msra.mxu0 0.0
          %1337 = vmatprep.subr.mxu0 0.0
          %1338 = vmatpush1.msra.mxu0 0.0
          %1339 = vmatprep.subr.mxu0 0.0
          %1340 = vmatpush1.msra.mxu0 0.0
          %1341 = vmatprep.subr.mxu0 0.0
          %1342 = vmatpush1.msra.mxu0 0.0
          %1343 = vmatprep.subr.mxu0 0.0
          %1344 = vmatpush1.msra.mxu0 0.0
          %1345 = vmatprep.subr.mxu0 0.0
          %1346 = vmatpush1.msra.mxu0 0.0
          %1347 = vmatprep.subr.mxu0 0.0
          %1348 = vmatpush1.msra.mxu0 0.0
          %1349 = vmatprep.subr.mxu0 0.0
          %1350 = vmatpush1.msra.mxu0 0.0
          %1351 = vmatprep.subr.mxu0 0.0
          %1352 = vmatpush1.msra.mxu0 0.0
          %1353 = vmatprep.subr.mxu0 0.0
          %1354 = vmatpush1.msra.mxu0 0.0
          %1355 = vmatprep.subr.mxu0 0.0
          %1356 = vmatpush1.msra.mxu0 0.0
          %1357 = vmatprep.subr.mxu0 0.0
          %1358 = vmatpush1.msra.mxu0 0.0
          %1359 = vmatprep.mubr.f32.mxu0 0.0
          %1360 = vmatmul.mubr.f32.gmra.mrb[0].mxu0 %v1033
          %v1361 = vpop.f32.mrb[0].mxu0
          %v1362 = vadd.f32 %v1293, %v1361
          %v1363 = vpop.f32.mrb[0].mxu0
          %1364 = vdwg.mxu0
          %vm1365 = vcmp.eq.s32.totalorder %v1010, 2
          %vm1366 = vcmp.eq.s32.totalorder %v1011, 2
          %v1369 = vunpack.c.l.s4 1966171168
          %v1370 = vunpack.c.0.s8 %v1369
          %v1371 = vlaneseq
          %v1372 = vshrl.u32 %v1371, 7
          %v1373 = vsub.s32 %v1370, %v1372
          %v1374 = vrot.slane %v1362, %v1373
          %v1375 = vcombine.high %v1374, %v1374
          %v1377 = vunpack.c.l.s4 1966171168
          %v1378 = vunpack.c.0.s8 %v1377
          %v1379 = vlaneseq
          %v1380 = vshrl.u32 %v1379, 7
          %v1381 = vsub.s32 %v1378, %v1380
          %v1382 = vrot.slane %v1374, %v1381
          %v1384 = vunpack.c.l.s4 1966171168
          %v1385 = vunpack.c.0.s8 %v1384
          %v1386 = vlaneseq
          %v1387 = vshrl.u32 %v1386, 7
          %v1388 = vsub.s32 %v1385, %v1387
          %v1389 = vrot.slane %v1375, %v1388
          %v1390 = vlaneseq
          %v1391 = vshrl.u32 %v1390, 7
          %v1392 = vsub.s32 0, %v1391
          %v1393 = vrot.slane %v1382, %v1392
          %v1394 = vlaneseq
          %v1395 = vshrl.u32 %v1394, 7
          %v1396 = vsub.s32 0, %v1395
          %v1397 = vrot.slane %v1389, %v1396
          %v1400 = vsel %vm1365, %v1393, 0.0
          %v1401 = vsel %vm1366, %v1393, 0.0
          %v1402 = vsel %vm1365, %v1397, 0.0
          %v1403 = vsel %vm1366, %v1397, 0.0
          %v1404 = vadd.f32 %v1274, %v1400
          %v1405 = vadd.f32 %v1275, %v1401
          %v1406 = vadd.f32 %v1276, %v1402
          %v1407 = vadd.f32 %v1277, %v1403
          %s1408 = scalar_lea.vmem %s5, 192
          %v1409 = vld [vmem:[%s1408] sm:$0xff]
          %v1410 = vld [vmem:[%s1408 + $0x8] sm:$0xff]
          %v1411 = vld [vmem:[%s1408 + $0x10] sm:$0xff]
          %v1412 = vld [vmem:[%s1408 + $0x18] sm:$0xff]
          %v1413 = vld [vmem:[%s1408 + $0x20] sm:$0xff]
          %v1414 = vld [vmem:[%s1408 + $0x28] sm:$0xff]
          %v1415 = vld [vmem:[%s1408 + $0x30] sm:$0xff]
          %v1416 = vld [vmem:[%s1408 + $0x38] sm:$0xff]
          %s1417 = scalar_lea.vmem %s6, 3
          %v1418 = vld [vmem:[%s1417] sm:$0x1]
          %v1420 = vlaneseq
          %v1421 = vshrl.u32 %v1420, 7
          %v1422 = vsub.s32 0, %v1421
          %v1423 = vrot.slane %v1418, %v1422
          %1425 = vmatprep.subr.mxu0 0.0
          %1426 = vmatpush1.msra.mxu0 %v1409
          %1427 = vmatprep.subr.mxu0 0.0
          %1428 = vmatpush1.msra.mxu0 %v1410
          %1429 = vmatprep.subr.mxu0 0.0
          %1430 = vmatpush1.msra.mxu0 %v1411
          %1431 = vmatprep.subr.mxu0 0.0
          %1432 = vmatpush1.msra.mxu0 %v1412
          %1433 = vmatprep.subr.mxu0 0.0
          %1434 = vmatpush1.msra.mxu0 %v1413
          %1435 = vmatprep.subr.mxu0 0.0
          %1436 = vmatpush1.msra.mxu0 %v1414
          %1437 = vmatprep.subr.mxu0 0.0
          %1438 = vmatpush1.msra.mxu0 %v1415
          %1439 = vmatprep.subr.mxu0 0.0
          %1440 = vmatpush1.msra.mxu0 %v1416
          %1441 = vmatprep.subr.mxu0 0.0
          %1442 = vmatpush1.msra.mxu0 0.0
          %1443 = vmatprep.subr.mxu0 0.0
          %1444 = vmatpush1.msra.mxu0 0.0
          %1445 = vmatprep.subr.mxu0 0.0
          %1446 = vmatpush1.msra.mxu0 0.0
          %1447 = vmatprep.subr.mxu0 0.0
          %1448 = vmatpush1.msra.mxu0 0.0
          %1449 = vmatprep.subr.mxu0 0.0
          %1450 = vmatpush1.msra.mxu0 0.0
          %1451 = vmatprep.subr.mxu0 0.0
          %1452 = vmatpush1.msra.mxu0 0.0
          %1453 = vmatprep.subr.mxu0 0.0
          %1454 = vmatpush1.msra.mxu0 0.0
          %1455 = vmatprep.subr.mxu0 0.0
          %1456 = vmatpush1.msra.mxu0 0.0
          %1457 = vmatprep.subr.mxu0 0.0
          %1458 = vmatpush1.msra.mxu0 0.0
          %1459 = vmatprep.subr.mxu0 0.0
          %1460 = vmatpush1.msra.mxu0 0.0
          %1461 = vmatprep.subr.mxu0 0.0
          %1462 = vmatpush1.msra.mxu0 0.0
          %1463 = vmatprep.subr.mxu0 0.0
          %1464 = vmatpush1.msra.mxu0 0.0
          %1465 = vmatprep.subr.mxu0 0.0
          %1466 = vmatpush1.msra.mxu0 0.0
          %1467 = vmatprep.subr.mxu0 0.0
          %1468 = vmatpush1.msra.mxu0 0.0
          %1469 = vmatprep.subr.mxu0 0.0
          %1470 = vmatpush1.msra.mxu0 0.0
          %1471 = vmatprep.subr.mxu0 0.0
          %1472 = vmatpush1.msra.mxu0 0.0
          %1473 = vmatprep.subr.mxu0 0.0
          %1474 = vmatpush1.msra.mxu0 0.0
          %1475 = vmatprep.subr.mxu0 0.0
          %1476 = vmatpush1.msra.mxu0 0.0
          %1477 = vmatprep.subr.mxu0 0.0
          %1478 = vmatpush1.msra.mxu0 0.0
          %1479 = vmatprep.subr.mxu0 0.0
          %1480 = vmatpush1.msra.mxu0 0.0
          %1481 = vmatprep.subr.mxu0 0.0
          %1482 = vmatpush1.msra.mxu0 0.0
          %1483 = vmatprep.subr.mxu0 0.0
          %1484 = vmatpush1.msra.mxu0 0.0
          %1485 = vmatprep.subr.mxu0 0.0
          %1486 = vmatpush1.msra.mxu0 0.0
          %1487 = vmatprep.subr.mxu0 0.0
          %1488 = vmatpush1.msra.mxu0 0.0
          %1489 = vmatprep.mubr.f32.mxu0 0.0
          %1490 = vmatmul.mubr.f32.gmra.mrb[0].mxu0 %v1033
          %v1491 = vpop.f32.mrb[0].mxu0
          %v1492 = vadd.f32 %v1423, %v1491
          %v1493 = vpop.f32.mrb[0].mxu0
          %1494 = vdwg.mxu0
          %vm1495 = vcmp.eq.s32.totalorder %v1010, 3
          %vm1496 = vcmp.eq.s32.totalorder %v1011, 3
          %v1499 = vunpack.c.l.s4 1966171168
          %v1500 = vunpack.c.0.s8 %v1499
          %v1501 = vlaneseq
          %v1502 = vshrl.u32 %v1501, 7
          %v1503 = vsub.s32 %v1500, %v1502
          %v1504 = vrot.slane %v1492, %v1503
          %v1505 = vcombine.high %v1504, %v1504
          %v1507 = vunpack.c.l.s4 1966171168
          %v1508 = vunpack.c.0.s8 %v1507
          %v1509 = vlaneseq
          %v1510 = vshrl.u32 %v1509, 7
          %v1511 = vsub.s32 %v1508, %v1510
          %v1512 = vrot.slane %v1504, %v1511
          %v1514 = vunpack.c.l.s4 1966171168
          %v1515 = vunpack.c.0.s8 %v1514
          %v1516 = vlaneseq
          %v1517 = vshrl.u32 %v1516, 7
          %v1518 = vsub.s32 %v1515, %v1517
          %v1519 = vrot.slane %v1505, %v1518
          %v1520 = vlaneseq
          %v1521 = vshrl.u32 %v1520, 7
          %v1522 = vsub.s32 0, %v1521
          %v1523 = vrot.slane %v1512, %v1522
          %v1524 = vlaneseq
          %v1525 = vshrl.u32 %v1524, 7
          %v1526 = vsub.s32 0, %v1525
          %v1527 = vrot.slane %v1519, %v1526
          %v1530 = vsel %vm1495, %v1523, 0.0
          %v1531 = vsel %vm1496, %v1523, 0.0
          %v1532 = vsel %vm1495, %v1527, 0.0
          %v1533 = vsel %vm1496, %v1527, 0.0
          %v1534 = vadd.f32 %v1404, %v1530
          %v1535 = vadd.f32 %v1405, %v1531
          %v1536 = vadd.f32 %v1406, %v1532
          %v1537 = vadd.f32 %v1407, %v1533
          %vm1538 = vcmask 261120
          %1539 = vst.msk [vmem:[#allocation2] sm:$0xff] %vm1538, %v1534
          %vm1540 = vcmask 257024
          %1541 = vst.msk [vmem:[#allocation2 + $0x8] sm:$0xf] %vm1540, %v1535
          %1542 = vst.msk [vmem:[#allocation2 + $0x10] sm:$0xff] %vm1538, %v1536
          %1543 = vst.msk [vmem:[#allocation2 + $0x18] sm:$0xf] %vm1540, %v1537
        $region132: #{encode_forward.1} parent=107 // pred_fallthru
          _
        %v1544 = vld [vmem:[%s1] sm:$0xff]
        %v1545 = vld [vmem:[%s1 + $0x8] sm:$0xf]
        %v1546 = vld [vmem:[%s1 + $0x10] sm:$0xff]
        %v1547 = vld [vmem:[%s1 + $0x18] sm:$0xf]
        %v1548 = vld [vmem:[#allocation2] sm:$0xff]
        %v1549 = vld [vmem:[#allocation2 + $0x8] sm:$0xf]
        %v1550 = vld [vmem:[#allocation2 + $0x10] sm:$0xff]
        %v1551 = vld [vmem:[#allocation2 + $0x18] sm:$0xf]
        %v1556 = vcombine.high %v1548, %v1548
        %v1557 = vcombine.high %v1550, %v1550
        %v1560 = vld [vmem:[%s893] sm:$0x1]
        %v1561 = vld [vmem:[%s896] sm:$0x1]
        %v1562 = vcombine.low %v1548, %v1556
        %v1563 = vcombine.low %v1549, %v1550
        %v1564 = vcombine.low %v1557, %v1551
        %vm1568 = vcmask 261120
        %v1569 = vsel %vm1568, %v1562, 0.0
        %1570 = vadd.xlane.f32.xlu0 %v1569
        %v1571 = vpop.xlane.xlu0 %1570
        %v1572 = vsel %vm1568, %v1563, 0.0
        %1573 = vadd.xlane.f32.xlu0 %v1572
        %v1574 = vpop.xlane.xlu0 %1573
        %v1575 = vsel %vm1568, %v1564, 0.0
        %1576 = vadd.xlane.f32.xlu0 %v1575
        %v1577 = vpop.xlane.xlu0 %1576
        %v1578 = vrcp.pop 32.0
        %v1579 = vmul.f32 %v1571, %v1578
        %v1580 = vmul.f32 %v1574, %v1578
        %v1581 = vmul.f32 %v1577, %v1578
        %v1586 = vunpack.c.l.s4 839922192
        %v1587 = vunpack.c.0.s8 %v1586
        %v1588 = vlaneseq
        %v1589 = vshrl.u32 %v1588, 7
        %v1590 = vsub.s32 %v1587, %v1589
        %v1591 = vrot.slane %v1579, %v1590
        %v1593 = vunpack.c.l.s4 1985246804
        %v1594 = vunpack.c.0.s8 %v1593
        %v1595 = vlaneseq
        %v1596 = vshrl.u32 %v1595, 7
        %v1597 = vsub.s32 %v1594, %v1596
        %v1598 = vrot.slane %v1579, %v1597
        %v1600 = vunpack.c.l.s4 839922192
        %v1601 = vunpack.c.0.s8 %v1600
        %v1602 = vlaneseq
        %v1603 = vshrl.u32 %v1602, 7
        %v1604 = vsub.s32 %v1601, %v1603
        %v1605 = vrot.slane %v1580, %v1604
        %v1607 = vunpack.c.l.s4 1985246804
        %v1608 = vunpack.c.0.s8 %v1607
        %v1609 = vlaneseq
        %v1610 = vshrl.u32 %v1609, 7
        %v1611 = vsub.s32 %v1608, %v1610
        %v1612 = vrot.slane %v1580, %v1611
        %v1614 = vunpack.c.l.s4 839922192
        %v1615 = vunpack.c.0.s8 %v1614
        %v1616 = vlaneseq
        %v1617 = vshrl.u32 %v1616, 7
        %v1618 = vsub.s32 %v1615, %v1617
        %v1619 = vrot.slane %v1581, %v1618
        %v1621 = vunpack.c.l.s4 1985246804
        %v1622 = vunpack.c.0.s8 %v1621
        %v1623 = vlaneseq
        %v1624 = vshrl.u32 %v1623, 7
        %v1625 = vsub.s32 %v1622, %v1624
        %v1626 = vrot.slane %v1581, %v1625
        %v1633 = vsub.f32 %v1548, %v1591
        %v1634 = vsub.f32 %v1556, %v1598
        %v1635 = vsub.f32 %v1549, %v1605
        %v1636 = vsub.f32 %v1550, %v1612
        %v1637 = vsub.f32 %v1557, %v1619
        %v1638 = vsub.f32 %v1551, %v1626
        %v1639 = vmul.f32 %v1633, %v1633
        %v1640 = vmul.f32 %v1634, %v1634
        %v1641 = vmul.f32 %v1635, %v1635
        %v1642 = vmul.f32 %v1636, %v1636
        %v1643 = vmul.f32 %v1637, %v1637
        %v1644 = vmul.f32 %v1638, %v1638
        %v1651 = vcombine.low %v1639, %v1640
        %v1652 = vcombine.low %v1641, %v1642
        %v1653 = vcombine.low %v1643, %v1644
        %v1657 = vsel %vm1568, %v1651, 0.0
        %1658 = vadd.xlane.f32.xlu0 %v1657
        %v1659 = vpop.xlane.xlu0 %1658
        %v1660 = vsel %vm1568, %v1652, 0.0
        %1661 = vadd.xlane.f32.xlu0 %v1660
        %v1662 = vpop.xlane.xlu0 %1661
        %v1663 = vsel %vm1568, %v1653, 0.0
        %1664 = vadd.xlane.f32.xlu0 %v1663
        %v1665 = vpop.xlane.xlu0 %1664
        %v1666 = vmul.f32 %v1659, %v1578
        %v1667 = vmul.f32 %v1662, %v1578
        %v1668 = vmul.f32 %v1665, %v1578
        %v1669 = vadd.f32 %v1666, 1e-05
        %v1670 = vadd.f32 %v1667, 1e-05
        %v1671 = vadd.f32 %v1668, 1e-05
        %v1672 = vrsqrt.pop %v1669
        %v1673 = vrsqrt.pop %v1670
        %v1674 = vrsqrt.pop %v1671
        %v1679 = vunpack.c.l.s4 839922192
        %v1680 = vunpack.c.0.s8 %v1679
        %v1681 = vlaneseq
        %v1682 = vshrl.u32 %v1681, 7
        %v1683 = vsub.s32 %v1680, %v1682
        %v1684 = vrot.slane %v1672, %v1683
        %v1686 = vunpack.c.l.s4 1985246804
        %v1687 = vunpack.c.0.s8 %v1686
        %v1688 = vlaneseq
        %v1689 = vshrl.u32 %v1688, 7
        %v1690 = vsub.s32 %v1687, %v1689
        %v1691 = vrot.slane %v1672, %v1690
        %v1693 = vunpack.c.l.s4 839922192
        %v1694 = vunpack.c.0.s8 %v1693
        %v1695 = vlaneseq
        %v1696 = vshrl.u32 %v1695, 7
        %v1697 = vsub.s32 %v1694, %v1696
        %v1698 = vrot.slane %v1673, %v1697
        %v1700 = vunpack.c.l.s4 1985246804
        %v1701 = vunpack.c.0.s8 %v1700
        %v1702 = vlaneseq
        %v1703 = vshrl.u32 %v1702, 7
        %v1704 = vsub.s32 %v1701, %v1703
        %v1705 = vrot.slane %v1673, %v1704
        %v1707 = vunpack.c.l.s4 839922192
        %v1708 = vunpack.c.0.s8 %v1707
        %v1709 = vlaneseq
        %v1710 = vshrl.u32 %v1709, 7
        %v1711 = vsub.s32 %v1708, %v1710
        %v1712 = vrot.slane %v1674, %v1711
        %v1714 = vunpack.c.l.s4 1985246804
        %v1715 = vunpack.c.0.s8 %v1714
        %v1716 = vlaneseq
        %v1717 = vshrl.u32 %v1716, 7
        %v1718 = vsub.s32 %v1715, %v1717
        %v1719 = vrot.slane %v1674, %v1718
        %v1726 = vmul.f32 %v1633, %v1684
        %v1727 = vmul.f32 %v1634, %v1691
        %v1728 = vmul.f32 %v1635, %v1698
        %v1729 = vmul.f32 %v1636, %v1705
        %v1730 = vmul.f32 %v1637, %v1712
        %v1731 = vmul.f32 %v1638, %v1719
        %v1733 = vlaneseq
        %v1734 = vshrl.u32 %v1733, 7
        %v1735 = vsub.s32 0, %v1734
        %v1736 = vrot.slane %v1560, %v1735
        %v1738 = vcombine.high %v1736, %v1736
        %v1740 = vmul.f32 %v1726, %v1736
        %v1741 = vmul.f32 %v1727, %v1738
        %v1742 = vmul.f32 %v1728, %v1736
        %v1743 = vmul.f32 %v1729, %v1738
        %v1744 = vmul.f32 %v1730, %v1736
        %v1745 = vmul.f32 %v1731, %v1738
        %v1747 = vlaneseq
        %v1748 = vshrl.u32 %v1747, 7
        %v1749 = vsub.s32 0, %v1748
        %v1750 = vrot.slane %v1561, %v1749
        %v1752 = vcombine.high %v1750, %v1750
        %v1754 = vadd.f32 %v1740, %v1750
        %v1755 = vadd.f32 %v1741, %v1752
        %v1756 = vadd.f32 %v1742, %v1750
        %v1757 = vadd.f32 %v1743, %v1752
        %v1758 = vadd.f32 %v1744, %v1750
        %v1759 = vadd.f32 %v1745, %v1752
        %v1760 = vld [vmem:[%s901] sm:$0xff]
        %v1761 = vld [vmem:[%s901 + $0x8] sm:$0xff]
        %v1762 = vld [vmem:[%s901 + $0x10] sm:$0xff]
        %v1763 = vld [vmem:[%s901 + $0x18] sm:$0xff]
        %v1764 = vld [vmem:[%s904] sm:$0x1]
        %v1766 = vlaneseq
        %v1767 = vshrl.u32 %v1766, 7
        %v1768 = vsub.s32 0, %v1767
        %v1769 = vrot.slane %v1764, %v1768
        %v1777 = vcombine.low %v1754, %v1755
        %v1778 = vcombine.low %v1756, %v1757
        %v1779 = vcombine.low %v1758, %v1759
        %v1780 = vsel %vm1568, %v1777, 0
        %v1782 = vsel %vm1568, %v1778, 0
        %v1784 = vsel %vm1568, %v1779, 0
        %1786 = vmatprep.subr.mxu0 0.0
        %1787 = vmatpush1.msra.mxu0 %v1760
        %1788 = vmatprep.subr.mxu0 0.0
        %1789 = vmatpush1.msra.mxu0 %v1761
        %1790 = vmatprep.subr.mxu0 0.0
        %1791 = vmatpush1.msra.mxu0 %v1762
        %1792 = vmatprep.subr.mxu0 0.0
        %1793 = vmatpush1.msra.mxu0 %v1763
        %1794 = vmatprep.subr.mxu0 0.0
        %1795 = vmatpush1.msra.mxu0 0.0
        %1796 = vmatprep.subr.mxu0 0.0
        %1797 = vmatpush1.msra.mxu0 0.0
        %1798 = vmatprep.subr.mxu0 0.0
        %1799 = vmatpush1.msra.mxu0 0.0
        %1800 = vmatprep.subr.mxu0 0.0
        %1801 = vmatpush1.msra.mxu0 0.0
        %1802 = vmatprep.subr.mxu0 0.0
        %1803 = vmatpush1.msra.mxu0 0.0
        %1804 = vmatprep.subr.mxu0 0.0
        %1805 = vmatpush1.msra.mxu0 0.0
        %1806 = vmatprep.subr.mxu0 0.0
        %1807 = vmatpush1.msra.mxu0 0.0
        %1808 = vmatprep.subr.mxu0 0.0
        %1809 = vmatpush1.msra.mxu0 0.0
        %1810 = vmatprep.subr.mxu0 0.0
        %1811 = vmatpush1.msra.mxu0 0.0
        %1812 = vmatprep.subr.mxu0 0.0
        %1813 = vmatpush1.msra.mxu0 0.0
        %1814 = vmatprep.subr.mxu0 0.0
        %1815 = vmatpush1.msra.mxu0 0.0
        %1816 = vmatprep.subr.mxu0 0.0
        %1817 = vmatpush1.msra.mxu0 0.0
        %1818 = vmatprep.subr.mxu0 0.0
        %1819 = vmatpush1.msra.mxu0 0.0
        %1820 = vmatprep.subr.mxu0 0.0
        %1821 = vmatpush1.msra.mxu0 0.0
        %1822 = vmatprep.subr.mxu0 0.0
        %1823 = vmatpush1.msra.mxu0 0.0
        %1824 = vmatprep.subr.mxu0 0.0
        %1825 = vmatpush1.msra.mxu0 0.0
        %1826 = vmatprep.subr.mxu0 0.0
        %1827 = vmatpush1.msra.mxu0 0.0
        %1828 = vmatprep.subr.mxu0 0.0
        %1829 = vmatpush1.msra.mxu0 0.0
        %1830 = vmatprep.subr.mxu0 0.0
        %1831 = vmatpush1.msra.mxu0 0.0
        %1832 = vmatprep.subr.mxu0 0.0
        %1833 = vmatpush1.msra.mxu0 0.0
        %1834 = vmatprep.subr.mxu0 0.0
        %1835 = vmatpush1.msra.mxu0 0.0
        %1836 = vmatprep.subr.mxu0 0.0
        %1837 = vmatpush1.msra.mxu0 0.0
        %1838 = vmatprep.subr.mxu0 0.0
        %1839 = vmatpush1.msra.mxu0 0.0
        %1840 = vmatprep.subr.mxu0 0.0
        %1841 = vmatpush1.msra.mxu0 0.0
        %1842 = vmatprep.subr.mxu0 0.0
        %1843 = vmatpush1.msra.mxu0 0.0
        %1844 = vmatprep.subr.mxu0 0.0
        %1845 = vmatpush1.msra.mxu0 0.0
        %1846 = vmatprep.subr.mxu0 0.0
        %1847 = vmatpush1.msra.mxu0 0.0
        %1848 = vmatprep.subr.mxu0 0.0
        %1849 = vmatpush1.msra.mxu0 0.0
        %1850 = vmatprep.mubr.f32.mxu0 0.0
        %1851 = vmatmul.mubr.f32.gmra.mrb[0].mxu0 %v1780
        %v1852 = vpop.f32.mrb[0].mxu0
        %v1853 = vadd.f32 %v1769, %v1852
        %v1854 = vpop.f32.mrb[0].mxu0
        %1855 = vmatprep.mubr.f32.mxu0 0.0
        %1856 = vmatmul.mubr.f32.gmra.mrb[0].mxu0 %v1782
        %v1857 = vpop.f32.mrb[0].mxu0
        %v1858 = vadd.f32 %v1769, %v1857
        %v1859 = vpop.f32.mrb[0].mxu0
        %1860 = vmatprep.mubr.f32.mxu0 0.0
        %1861 = vmatmul.mubr.f32.gmra.mrb[0].mxu0 %v1784
        %v1862 = vpop.f32.mrb[0].mxu0
        %v1863 = vadd.f32 %v1769, %v1862
        %v1864 = vpop.f32.mrb[0].mxu0
        %1865 = vdwg.mxu0
        %v1869 = vcombine.high %v1853, %v1853
        %v1870 = vcombine.high %v1858, %v1858
        %v1871 = vcombine.high %v1863, %v1863
        %v1872 = vcombine.low %v1853, %v1869
        %1873 = vrot.lane.b32.xlu0 %v1872, 96
        %v1874 = vpop.permute.xlu0 %1873
        %1875 = vrot.lane.b32.xlu0 %v1858, 96
        %v1876 = vpop.permute.xlu0 %1875
        %vm1877 = vcmask 64512
        %v1878 = vsel %vm1877, %v1872, 0
        %v1880 = vsel %vm1877, %v1858, 0
        %v1882 = vsel %vm1877, %v1874, 0
        %v1884 = vsel %vm1877, %v1876, 0
        %1886 = vmatprep.subr.mxu0 0.0
        %1887 = vmatpush1.xpose.msra.mxu0 %v1882
        %1888 = vmatprep.subr.mxu0 0.0
        %1889 = vmatpush1.xpose.msra.mxu0 %v1884
        %1890 = vmatprep.subr.mxu0 0.0
        %1891 = vmatpush1.xpose.msra.mxu0 0.0
        %1892 = vmatprep.subr.mxu0 0.0
        %1893 = vmatpush1.xpose.msra.mxu0 0.0
        %1894 = vmatprep.subr.mxu0 0.0
        %1895 = vmatpush1.xpose.msra.mxu0 0.0
        %1896 = vmatprep.subr.mxu0 0.0
        %1897 = vmatpush1.xpose.msra.mxu0 0.0
        %1898 = vmatprep.subr.mxu0 0.0
        %1899 = vmatpush1.xpose.msra.mxu0 0.0
        %1900 = vmatprep.subr.mxu0 0.0
        %1901 = vmatpush1.xpose.msra.mxu0 0.0
        %1902 = vmatprep.subr.mxu0 0.0
        %1903 = vmatpush1.xpose.msra.mxu0 0.0
        %1904 = vmatprep.subr.mxu0 0.0
        %1905 = vmatpush1.xpose.msra.mxu0 0.0
        %1906 = vmatprep.subr.mxu0 0.0
        %1907 = vmatpush1.xpose.msra.mxu0 0.0
        %1908 = vmatprep.subr.mxu0 0.0
        %1909 = vmatpush1.xpose.msra.mxu0 0.0
        %1910 = vmatprep.subr.mxu0 0.0
        %1911 = vmatpush1.xpose.msra.mxu0 0.0
        %1912 = vmatprep.subr.mxu0 0.0
        %1913 = vmatpush1.xpose.msra.mxu0 0.0
        %1914 = vmatprep.subr.mxu0 0.0
        %1915 = vmatpush1.xpose.msra.mxu0 0.0
        %1916 = vmatprep.subr.mxu0 0.0
        %1917 = vmatpush1.xpose.msra.mxu0 0.0
        %1918 = vmatprep.subr.mxu0 0.0
        %1919 = vmatpush1.xpose.msra.mxu0 0.0
        %1920 = vmatprep.subr.mxu0 0.0
        %1921 = vmatpush1.xpose.msra.mxu0 0.0
        %1922 = vmatprep.subr.mxu0 0.0
        %1923 = vmatpush1.xpose.msra.mxu0 0.0
        %1924 = vmatprep.subr.mxu0 0.0
        %1925 = vmatpush1.xpose.msra.mxu0 0.0
        %1926 = vmatprep.subr.mxu0 0.0
        %1927 = vmatpush1.xpose.msra.mxu0 0.0
        %1928 = vmatprep.subr.mxu0 0.0
        %1929 = vmatpush1.xpose.msra.mxu0 0.0
        %1930 = vmatprep.subr.mxu0 0.0
        %1931 = vmatpush1.xpose.msra.mxu0 0.0
        %1932 = vmatprep.subr.mxu0 0.0
        %1933 = vmatpush1.xpose.msra.mxu0 0.0
        %1934 = vmatprep.subr.mxu0 0.0
        %1935 = vmatpush1.xpose.msra.mxu0 0.0
        %1936 = vmatprep.subr.mxu0 0.0
        %1937 = vmatpush1.xpose.msra.mxu0 0.0
        %1938 = vmatprep.subr.mxu0 0.0
        %1939 = vmatpush1.xpose.msra.mxu0 0.0
        %1940 = vmatprep.subr.mxu0 0.0
        %1941 = vmatpush1.xpose.msra.mxu0 0.0
        %1942 = vmatprep.subr.mxu0 0.0
        %1943 = vmatpush1.xpose.msra.mxu0 0.0
        %1944 = vmatprep.subr.mxu0 0.0
        %1945 = vmatpush1.xpose.msra.mxu0 0.0
        %1946 = vmatprep.subr.mxu0 0.0
        %1947 = vmatpush1.xpose.msra.mxu0 0.0
        %1948 = vmatprep.subr.mxu0 0.0
        %1949 = vmatpush1.xpose.msra.mxu0 0.0
        %1950 = vmatprep.mubr.f32.mxu0 0.0
        %1951 = vmatmul.mubr.f32.gmra.mrb[0].mxu0 %v1878
        %v1952 = vpop.f32.mrb[0].mxu0
        %v1953 = vadd.f32 0.0, %v1952
        %v1954 = vpop.f32.mrb[0].mxu0
        %1955 = vmatprep.mubr.f32.mxu0 0.0
        %1956 = vmatmul.mubr.f32.gmra.mrb[0].mxu0 %v1880
        %v1957 = vpop.f32.mrb[0].mxu0
        %v1958 = vadd.f32 0.0, %v1957
        %v1959 = vpop.f32.mrb[0].mxu0
        %1960 = vdwg.mxu0
        %v1961 = vcombine.low %v1870, %v1863
        %1962 = vrot.lane.b32.xlu0 %v1961, 96
        %v1963 = vpop.permute.xlu0 %1962
        %1964 = vrot.lane.b32.xlu0 %v1871, 96
        %v1965 = vpop.permute.xlu0 %1964
        %v1966 = vsel %vm1877, %v1961, 0
        %v1968 = vsel %vm1877, %v1871, 0
        %v1970 = vsel %vm1877, %v1963, 0
        %v1972 = vsel %vm1877, %v1965, 0
        %1974 = vmatprep.subr.mxu0 0.0
        %1975 = vmatpush1.xpose.msra.mxu0 %v1970
        %1976 = vmatprep.subr.mxu0 0.0
        %1977 = vmatpush1.xpose.msra.mxu0 %v1972
        %1978 = vmatprep.subr.mxu0 0.0
        %1979 = vmatpush1.xpose.msra.mxu0 0.0
        %1980 = vmatprep.subr.mxu0 0.0
        %1981 = vmatpush1.xpose.msra.mxu0 0.0
        %1982 = vmatprep.subr.mxu0 0.0
        %1983 = vmatpush1.xpose.msra.mxu0 0.0
        %1984 = vmatprep.subr.mxu0 0.0
        %1985 = vmatpush1.xpose.msra.mxu0 0.0
        %1986 = vmatprep.subr.mxu0 0.0
        %1987 = vmatpush1.xpose.msra.mxu0 0.0
        %1988 = vmatprep.subr.mxu0 0.0
        %1989 = vmatpush1.xpose.msra.mxu0 0.0
        %1990 = vmatprep.subr.mxu0 0.0
        %1991 = vmatpush1.xpose.msra.mxu0 0.0
        %1992 = vmatprep.subr.mxu0 0.0
        %1993 = vmatpush1.xpose.msra.mxu0 0.0
        %1994 = vmatprep.subr.mxu0 0.0
        %1995 = vmatpush1.xpose.msra.mxu0 0.0
        %1996 = vmatprep.subr.mxu0 0.0
        %1997 = vmatpush1.xpose.msra.mxu0 0.0
        %1998 = vmatprep.subr.mxu0 0.0
        %1999 = vmatpush1.xpose.msra.mxu0 0.0
        %2000 = vmatprep.subr.mxu0 0.0
        %2001 = vmatpush1.xpose.msra.mxu0 0.0
        %2002 = vmatprep.subr.mxu0 0.0
        %2003 = vmatpush1.xpose.msra.mxu0 0.0
        %2004 = vmatprep.subr.mxu0 0.0
        %2005 = vmatpush1.xpose.msra.mxu0 0.0
        %2006 = vmatprep.subr.mxu0 0.0
        %2007 = vmatpush1.xpose.msra.mxu0 0.0
        %2008 = vmatprep.subr.mxu0 0.0
        %2009 = vmatpush1.xpose.msra.mxu0 0.0
        %2010 = vmatprep.subr.mxu0 0.0
        %2011 = vmatpush1.xpose.msra.mxu0 0.0
        %2012 = vmatprep.subr.mxu0 0.0
        %2013 = vmatpush1.xpose.msra.mxu0 0.0
        %2014 = vmatprep.subr.mxu0 0.0
        %2015 = vmatpush1.xpose.msra.mxu0 0.0
        %2016 = vmatprep.subr.mxu0 0.0
        %2017 = vmatpush1.xpose.msra.mxu0 0.0
        %2018 = vmatprep.subr.mxu0 0.0
        %2019 = vmatpush1.xpose.msra.mxu0 0.0
        %2020 = vmatprep.subr.mxu0 0.0
        %2021 = vmatpush1.xpose.msra.mxu0 0.0
        %2022 = vmatprep.subr.mxu0 0.0
        %2023 = vmatpush1.xpose.msra.mxu0 0.0
        %2024 = vmatprep.subr.mxu0 0.0
        %2025 = vmatpush1.xpose.msra.mxu0 0.0
        %2026 = vmatprep.subr.mxu0 0.0
        %2027 = vmatpush1.xpose.msra.mxu0 0.0
        %2028 = vmatprep.subr.mxu0 0.0
        %2029 = vmatpush1.xpose.msra.mxu0 0.0
        %2030 = vmatprep.subr.mxu0 0.0
        %2031 = vmatpush1.xpose.msra.mxu0 0.0
        %2032 = vmatprep.subr.mxu0 0.0
        %2033 = vmatpush1.xpose.msra.mxu0 0.0
        %2034 = vmatprep.subr.mxu0 0.0
        %2035 = vmatpush1.xpose.msra.mxu0 0.0
        %2036 = vmatprep.subr.mxu0 0.0
        %2037 = vmatpush1.xpose.msra.mxu0 0.0
        %2038 = vmatprep.mubr.f32.mxu0 0.0
        %2039 = vmatmul.mubr.f32.gmra.mrb[0].mxu0 %v1966
        %v2040 = vpop.f32.mrb[0].mxu0
        %v2041 = vadd.f32 0.0, %v2040
        %v2042 = vpop.f32.mrb[0].mxu0
        %2043 = vmatprep.mubr.f32.mxu0 0.0
        %2044 = vmatmul.mubr.f32.gmra.mrb[0].mxu0 %v1968
        %v2045 = vpop.f32.mrb[0].mxu0
        %v2046 = vadd.f32 0.0, %v2045
        %v2047 = vpop.f32.mrb[0].mxu0
        %2048 = vdwg.mxu0
        %v2049 = vmul.f32 %v1953, 0.35355338
        %v2050 = vmul.f32 %v1958, 0.35355338
        %v2051 = vmul.f32 %v2041, 0.35355338
        %v2052 = vmul.f32 %v2046, 0.35355338
        %v2053 = vadd.f32 %v2049, %v1544
        %v2054 = vadd.f32 %v2050, %v1545
        %v2055 = vadd.f32 %v2051, %v1546
        %v2056 = vadd.f32 %v2052, %v1547
        %vm2057 = vcmask 97280
        %v2058 = vsel %vm2057, %v2053, -inf
        %2059 = vmax.xlane.f32.xlu0 %v2058
        %v2060 = vpop.xlane.xlu0 %2059
        %vm2061 = vcmask 93184
        %v2062 = vsel %vm2061, %v2054, -inf
        %2063 = vmax.xlane.f32.xlu0 %v2062
        %v2064 = vpop.xlane.xlu0 %2063
        %v2065 = vsel %vm2057, %v2055, -inf
        %2066 = vmax.xlane.f32.xlu0 %v2065
        %v2067 = vpop.xlane.xlu0 %2066
        %v2068 = vsel %vm2061, %v2056, -inf
        %2069 = vmax.xlane.f32.xlu0 %v2068
        %v2070 = vpop.xlane.xlu0 %2069
        %v2071 = vsub.f32 %v2053, %v2060
        %v2072 = vsub.f32 %v2054, %v2064
        %v2073 = vsub.f32 %v2055, %v2067
        %v2074 = vsub.f32 %v2056, %v2070
        %v2075 = vmul.f32 %v2071, 1.442695
        %v2076 = vpow.pop %v2075
        %v2077 = vmul.f32 %v2072, 1.442695
        %v2078 = vpow.pop %v2077
        %v2079 = vmul.f32 %v2073, 1.442695
        %v2080 = vpow.pop %v2079
        %v2081 = vmul.f32 %v2074, 1.442695
        %v2082 = vpow.pop %v2081
        %v2083 = vsel %vm2057, %v2076, 0.0
        %2084 = vadd.xlane.f32.xlu0 %v2083
        %v2085 = vpop.xlane.xlu0 %2084
        %v2086 = vsel %vm2061, %v2078, 0.0
        %2087 = vadd.xlane.f32.xlu0 %v2086
        %v2088 = vpop.xlane.xlu0 %2087
        %v2089 = vsel %vm2057, %v2080, 0.0
        %2090 = vadd.xlane.f32.xlu0 %v2089
        %v2091 = vpop.xlane.xlu0 %2090
        %v2092 = vsel %vm2061, %v2082, 0.0
        %2093 = vadd.xlane.f32.xlu0 %v2092
        %v2094 = vpop.xlane.xlu0 %2093
        %v2095 = vrcp.pop %v2085
        %v2096 = vmul.f32 %v2076, %v2095
        %v2097 = vrcp.pop %v2088
        %v2098 = vmul.f32 %v2078, %v2097
        %v2099 = vrcp.pop %v2091
        %v2100 = vmul.f32 %v2080, %v2099
        %v2101 = vrcp.pop %v2094
        %v2102 = vmul.f32 %v2082, %v2101
        %2103 = vrot.lane.b32.xlu0 %v1872, 64
        %v2104 = vpop.permute.xlu0 %2103
        %2105 = vrot.lane.b32.xlu0 %v1858, 64
        %v2106 = vpop.permute.xlu0 %2105
        %v2109 = vsel %vm2057, %v2096, 0
        %v2112 = vsel %vm2057, %v2098, 0
        %vm2114 = vcmask 1043456
        %v2115 = vsel %vm2114, %v2106, 0
        %2117 = vmatprep.subr.mxu0 0.0
        %2118 = vmatpush1.msra.mxu0 %v2104
        %2119 = vmatprep.subr.mxu0 0.0
        %2120 = vmatpush1.msra.mxu0 %v2115
        %2121 = vmatprep.subr.mxu0 0.0
        %2122 = vmatpush1.msra.mxu0 0.0
        %2123 = vmatprep.subr.mxu0 0.0
        %2124 = vmatpush1.msra.mxu0 0.0
        %2125 = vmatprep.subr.mxu0 0.0
        %2126 = vmatpush1.msra.mxu0 0.0
        %2127 = vmatprep.subr.mxu0 0.0
        %2128 = vmatpush1.msra.mxu0 0.0
        %2129 = vmatprep.subr.mxu0 0.0
        %2130 = vmatpush1.msra.mxu0 0.0
        %2131 = vmatprep.subr.mxu0 0.0
        %2132 = vmatpush1.msra.mxu0 0.0
        %2133 = vmatprep.subr.mxu0 0.0
        %2134 = vmatpush1.msra.mxu0 0.0
        %2135 = vmatprep.subr.mxu0 0.0
        %2136 = vmatpush1.msra.mxu0 0.0
        %2137 = vmatprep.subr.mxu0 0.0
        %2138 = vmatpush1.msra.mxu0 0.0
        %2139 = vmatprep.subr.mxu0 0.0
        %2140 = vmatpush1.msra.mxu0 0.0
        %2141 = vmatprep.subr.mxu0 0.0
        %2142 = vmatpush1.msra.mxu0 0.0
        %2143 = vmatprep.subr.mxu0 0.0
        %2144 = vmatpush1.msra.mxu0 0.0
        %2145 = vmatprep.subr.mxu0 0.0
        %2146 = vmatpush1.msra.mxu0 0.0
        %2147 = vmatprep.subr.mxu0 0.0
        %2148 = vmatpush1.msra.mxu0 0.0
        %2149 = vmatprep.subr.mxu0 0.0
        %2150 = vmatpush1.msra.mxu0 0.0
        %2151 = vmatprep.subr.mxu0 0.0
        %2152 = vmatpush1.msra.mxu0 0.0
        %2153 = vmatprep.subr.mxu0 0.0
        %2154 = vmatpush1.msra.mxu0 0.0
        %2155 = vmatprep.subr.mxu0 0.0
        %2156 = vmatpush1.msra.mxu0 0.0
        %2157 = vmatprep.subr.mxu0 0.0
        %2158 = vmatpush1.msra.mxu0 0.0
        %2159 = vmatprep.subr.mxu0 0.0
        %2160 = vmatpush1.msra.mxu0 0.0
        %2161 = vmatprep.subr.mxu0 0.0
        %2162 = vmatpush1.msra.mxu0 0.0
        %2163 = vmatprep.subr.mxu0 0.0
        %2164 = vmatpush1.msra.mxu0 0.0
        %2165 = vmatprep.subr.mxu0 0.0
        %2166 = vmatpush1.msra.mxu0 0.0
        %2167 = vmatprep.subr.mxu0 0.0
        %2168 = vmatpush1.msra.mxu0 0.0
        %2169 = vmatprep.subr.mxu0 0.0
        %2170 = vmatpush1.msra.mxu0 0.0
        %2171 = vmatprep.subr.mxu0 0.0
        %2172 = vmatpush1.msra.mxu0 0.0
        %2173 = vmatprep.subr.mxu0 0.0
        %2174 = vmatpush1.msra.mxu0 0.0
        %2175 = vmatprep.subr.mxu0 0.0
        %2176 = vmatpush1.msra.mxu0 0.0
        %2177 = vmatprep.subr.mxu0 0.0
        %2178 = vmatpush1.msra.mxu0 0.0
        %2179 = vmatprep.subr.mxu0 0.0
        %2180 = vmatpush1.msra.mxu0 0.0
        %2181 = vmatprep.mubr.f32.mxu0 0.0
        %2182 = vmatmul.mubr.f32.gmra.mrb[0].mxu0 %v2109
        %v2183 = vpop.f32.mrb[0].mxu0
        %v2184 = vadd.f32 0.0, %v2183
        %v2185 = vpop.f32.mrb[0].mxu0
        %2186 = vmatprep.mubr.f32.mxu0 0.0
        %2187 = vmatmul.mubr.f32.gmra.mrb[0].mxu0 %v2112
        %v2188 = vpop.f32.mrb[0].mxu0
        %v2189 = vadd.f32 0.0, %v2188
        %v2190 = vpop.f32.mrb[0].mxu0
        %2191 = vdwg.mxu0
        %2192 = vrot.lane.b32.xlu0 %v1961, 64
        %v2193 = vpop.permute.xlu0 %2192
        %2194 = vrot.lane.b32.xlu0 %v1871, 64
        %v2195 = vpop.permute.xlu0 %2194
        %v2198 = vsel %vm2057, %v2100, 0
        %v2201 = vsel %vm2057, %v2102, 0
        %v2203 = vsel %vm2114, %v2195, 0
        %2205 = vmatprep.subr.mxu0 0.0
        %2206 = vmatpush1.msra.mxu0 %v2193
        %2207 = vmatprep.subr.mxu0 0.0
        %2208 = vmatpush1.msra.mxu0 %v2203
        %2209 = vmatprep.subr.mxu0 0.0
        %2210 = vmatpush1.msra.mxu0 0.0
        %2211 = vmatprep.subr.mxu0 0.0
        %2212 = vmatpush1.msra.mxu0 0.0
        %2213 = vmatprep.subr.mxu0 0.0
        %2214 = vmatpush1.msra.mxu0 0.0
        %2215 = vmatprep.subr.mxu0 0.0
        %2216 = vmatpush1.msra.mxu0 0.0
        %2217 = vmatprep.subr.mxu0 0.0
        %2218 = vmatpush1.msra.mxu0 0.0
        %2219 = vmatprep.subr.mxu0 0.0
        %2220 = vmatpush1.msra.mxu0 0.0
        %2221 = vmatprep.subr.mxu0 0.0
        %2222 = vmatpush1.msra.mxu0 0.0
        %2223 = vmatprep.subr.mxu0 0.0
        %2224 = vmatpush1.msra.mxu0 0.0
        %2225 = vmatprep.subr.mxu0 0.0
        %2226 = vmatpush1.msra.mxu0 0.0
        %2227 = vmatprep.subr.mxu0 0.0
        %2228 = vmatpush1.msra.mxu0 0.0
        %2229 = vmatprep.subr.mxu0 0.0
        %2230 = vmatpush1.msra.mxu0 0.0
        %2231 = vmatprep.subr.mxu0 0.0
        %2232 = vmatpush1.msra.mxu0 0.0
        %2233 = vmatprep.subr.mxu0 0.0
        %2234 = vmatpush1.msra.mxu0 0.0
        %2235 = vmatprep.subr.mxu0 0.0
        %2236 = vmatpush1.msra.mxu0 0.0
        %2237 = vmatprep.subr.mxu0 0.0
        %2238 = vmatpush1.msra.mxu0 0.0
        %2239 = vmatprep.subr.mxu0 0.0
        %2240 = vmatpush1.msra.mxu0 0.0
        %2241 = vmatprep.subr.mxu0 0.0
        %2242 = vmatpush1.msra.mxu0 0.0
        %2243 = vmatprep.subr.mxu0 0.0
        %2244 = vmatpush1.msra.mxu0 0.0
        %2245 = vmatprep.subr.mxu0 0.0
        %2246 = vmatpush1.msra.mxu0 0.0
        %2247 = vmatprep.subr.mxu0 0.0
        %2248 = vmatpush1.msra.mxu0 0.0
        %2249 = vmatprep.subr.mxu0 0.0
        %2250 = vmatpush1.msra.mxu0 0.0
        %2251 = vmatprep.subr.mxu0 0.0
        %2252 = vmatpush1.msra.mxu0 0.0
        %2253 = vmatprep.subr.mxu0 0.0
        %2254 = vmatpush1.msra.mxu0 0.0
        %2255 = vmatprep.subr.mxu0 0.0
        %2256 = vmatpush1.msra.mxu0 0.0
        %2257 = vmatprep.subr.mxu0 0.0
        %2258 = vmatpush1.msra.mxu0 0.0
        %2259 = vmatprep.subr.mxu0 0.0
        %2260 = vmatpush1.msra.mxu0 0.0
        %2261 = vmatprep.subr.mxu0 0.0
        %2262 = vmatpush1.msra.mxu0 0.0
        %2263 = vmatprep.subr.mxu0 0.0
        %2264 = vmatpush1.msra.mxu0 0.0
        %2265 = vmatprep.subr.mxu0 0.0
        %2266 = vmatpush1.msra.mxu0 0.0
        %2267 = vmatprep.subr.mxu0 0.0
        %2268 = vmatpush1.msra.mxu0 0.0
        %2269 = vmatprep.mubr.f32.mxu0 0.0
        %2270 = vmatmul.mubr.f32.gmra.mrb[0].mxu0 %v2198
        %v2271 = vpop.f32.mrb[0].mxu0
        %v2272 = vadd.f32 0.0, %v2271
        %v2273 = vpop.f32.mrb[0].mxu0
        %2274 = vmatprep.mubr.f32.mxu0 0.0
        %2275 = vmatmul.mubr.f32.gmra.mrb[0].mxu0 %v2201
        %v2276 = vpop.f32.mrb[0].mxu0
        %v2277 = vadd.f32 0.0, %v2276
        %v2278 = vpop.f32.mrb[0].mxu0
        %2279 = vdwg.mxu0
        %2280 = vrot.lane.b32.xlu0 %v1872, 120
        %v2281 = vpop.permute.xlu0 %2280
        %2282 = vrot.lane.b32.xlu0 %v1858, 120
        %v2283 = vpop.permute.xlu0 %2282
        %2284 = vrot.lane.b32.xlu0 %v1872, 88
        %v2285 = vpop.permute.xlu0 %2284
        %2286 = vrot.lane.b32.xlu0 %v1858, 88
        %v2287 = vpop.permute.xlu0 %2286
        %v2288 = vsel %vm1877, %v2281, 0
        %v2290 = vsel %vm1877, %v2283, 0
        %v2292 = vsel %vm1877, %v2285, 0
        %v2294 = vsel %vm1877, %v2287, 0
        %2296 = vmatprep.subr.mxu0 0.0
        %2297 = vmatpush1.xpose.msra.mxu0 %v2292
        %2298 = vmatprep.subr.mxu0 0.0
        %2299 = vmatpush1.xpose.msra.mxu0 %v2294
        %2300 = vmatprep.subr.mxu0 0.0
        %2301 = vmatpush1.xpose.msra.mxu0 0.0
        %2302 = vmatprep.subr.mxu0 0.0
        %2303 = vmatpush1.xpose.msra.mxu0 0.0
        %2304 = vmatprep.subr.mxu0 0.0
        %2305 = vmatpush1.xpose.msra.mxu0 0.0
        %2306 = vmatprep.subr.mxu0 0.0
        %2307 = vmatpush1.xpose.msra.mxu0 0.0
        %2308 = vmatprep.subr.mxu0 0.0
        %2309 = vmatpush1.xpose.msra.mxu0 0.0
        %2310 = vmatprep.subr.mxu0 0.0
        %2311 = vmatpush1.xpose.msra.mxu0 0.0
        %2312 = vmatprep.subr.mxu0 0.0
        %2313 = vmatpush1.xpose.msra.mxu0 0.0
        %2314 = vmatprep.subr.mxu0 0.0
        %2315 = vmatpush1.xpose.msra.mxu0 0.0
        %2316 = vmatprep.subr.mxu0 0.0
        %2317 = vmatpush1.xpose.msra.mxu0 0.0
        %2318 = vmatprep.subr.mxu0 0.0
        %2319 = vmatpush1.xpose.msra.mxu0 0.0
        %2320 = vmatprep.subr.mxu0 0.0
        %2321 = vmatpush1.xpose.msra.mxu0 0.0
        %2322 = vmatprep.subr.mxu0 0.0
        %2323 = vmatpush1.xpose.msra.mxu0 0.0
        %2324 = vmatprep.subr.mxu0 0.0
        %2325 = vmatpush1.xpose.msra.mxu0 0.0
        %2326 = vmatprep.subr.mxu0 0.0
        %2327 = vmatpush1.xpose.msra.mxu0 0.0
        %2328 = vmatprep.subr.mxu0 0.0
        %2329 = vmatpush1.xpose.msra.mxu0 0.0
        %2330 = vmatprep.subr.mxu0 0.0
        %2331 = vmatpush1.xpose.msra.mxu0 0.0
        %2332 = vmatprep.subr.mxu0 0.0
        %2333 = vmatpush1.xpose.msra.mxu0 0.0
        %2334 = vmatprep.subr.mxu0 0.0
        %2335 = vmatpush1.xpose.msra.mxu0 0.0
        %2336 = vmatprep.subr.mxu0 0.0
        %2337 = vmatpush1.xpose.msra.mxu0 0.0
        %2338 = vmatprep.subr.mxu0 0.0
        %2339 = vmatpush1.xpose.msra.mxu0 0.0
        %2340 = vmatprep.subr.mxu0 0.0
        %2341 = vmatpush1.xpose.msra.mxu0 0.0
        %2342 = vmatprep.subr.mxu0 0.0
        %2343 = vmatpush1.xpose.msra.mxu0 0.0
        %2344 = vmatprep.subr.mxu0 0.0
        %2345 = vmatpush1.xpose.msra.mxu0 0.0
        %2346 = vmatprep.subr.mxu0 0.0
        %2347 = vmatpush1.xpose.msra.mxu0 0.0
        %2348 = vmatprep.subr.mxu0 0.0
        %2349 = vmatpush1.xpose.msra.mxu0 0.0
        %2350 = vmatprep.subr.mxu0 0.0
        %2351 = vmatpush1.xpose.msra.mxu0 0.0
        %2352 = vmatprep.subr.mxu0 0.0
        %2353 = vmatpush1.xpose.msra.mxu0 0.0
        %2354 = vmatprep.subr.mxu0 0.0
        %2355 = vmatpush1.xpose.msra.mxu0 0.0
        %2356 = vmatprep.subr.mxu0 0.0
        %2357 = vmatpush1.xpose.msra.mxu0 0.0
        %2358 = vmatprep.subr.mxu0 0.0
        %2359 = vmatpush1.xpose.msra.mxu0 0.0
        %2360 = vmatprep.mubr.f32.mxu0 0.0
        %2361 = vmatmul.mubr.f32.gmra.mrb[0].mxu0 %v2288
        %v2362 = vpop.f32.mrb[0].mxu0
        %v2363 = vadd.f32 0.0, %v2362
        %v2364 = vpop.f32.mrb[0].mxu0
        %2365 = vmatprep.mubr.f32.mxu0 0.0
        %2366 = vmatmul.mubr.f32.gmra.mrb[0].mxu0 %v2290
        %v2367 = vpop.f32.mrb[0].mxu0
        %v2368 = vadd.f32 0.0, %v2367
        %v2369 = vpop.f32.mrb[0].mxu0
        %2370 = vdwg.mxu0
        %2371 = vrot.lane.b32.xlu0 %v1961, 120
        %v2372 = vpop.permute.xlu0 %2371
        %2373 = vrot.lane.b32.xlu0 %v1871, 120
        %v2374 = vpop.permute.xlu0 %2373
        %2375 = vrot.lane.b32.xlu0 %v1961, 88
        %v2376 = vpop.permute.xlu0 %2375
        %2377 = vrot.lane.b32.xlu0 %v1871, 88
        %v2378 = vpop.permute.xlu0 %2377
        %v2379 = vsel %vm1877, %v2372, 0
        %v2381 = vsel %vm1877, %v2374, 0
        %v2383 = vsel %vm1877, %v2376, 0
        %v2385 = vsel %vm1877, %v2378, 0
        %2387 = vmatprep.subr.mxu0 0.0
        %2388 = vmatpush1.xpose.msra.mxu0 %v2383
        %2389 = vmatprep.subr.mxu0 0.0
        %2390 = vmatpush1.xpose.msra.mxu0 %v2385
        %2391 = vmatprep.subr.mxu0 0.0
        %2392 = vmatpush1.xpose.msra.mxu0 0.0
        %2393 = vmatprep.subr.mxu0 0.0
        %2394 = vmatpush1.xpose.msra.mxu0 0.0
        %2395 = vmatprep.subr.mxu0 0.0
        %2396 = vmatpush1.xpose.msra.mxu0 0.0
        %2397 = vmatprep.subr.mxu0 0.0
        %2398 = vmatpush1.xpose.msra.mxu0 0.0
        %2399 = vmatprep.subr.mxu0 0.0
        %2400 = vmatpush1.xpose.msra.mxu0 0.0
        %2401 = vmatprep.subr.mxu0 0.0
        %2402 = vmatpush1.xpose.msra.mxu0 0.0
        %2403 = vmatprep.subr.mxu0 0.0
        %2404 = vmatpush1.xpose.msra.mxu0 0.0
        %2405 = vmatprep.subr.mxu0 0.0
        %2406 = vmatpush1.xpose.msra.mxu0 0.0
        %2407 = vmatprep.subr.mxu0 0.0
        %2408 = vmatpush1.xpose.msra.mxu0 0.0
        %2409 = vmatprep.subr.mxu0 0.0
        %2410 = vmatpush1.xpose.msra.mxu0 0.0
        %2411 = vmatprep.subr.mxu0 0.0
        %2412 = vmatpush1.xpose.msra.mxu0 0.0
        %2413 = vmatprep.subr.mxu0 0.0
        %2414 = vmatpush1.xpose.msra.mxu0 0.0
        %2415 = vmatprep.subr.mxu0 0.0
        %2416 = vmatpush1.xpose.msra.mxu0 0.0
        %2417 = vmatprep.subr.mxu0 0.0
        %2418 = vmatpush1.xpose.msra.mxu0 0.0
        %2419 = vmatprep.subr.mxu0 0.0
        %2420 = vmatpush1.xpose.msra.mxu0 0.0
        %2421 = vmatprep.subr.mxu0 0.0
        %2422 = vmatpush1.xpose.msra.mxu0 0.0
        %2423 = vmatprep.subr.mxu0 0.0
        %2424 = vmatpush1.xpose.msra.mxu0 0.0
        %2425 = vmatprep.subr.mxu0 0.0
        %2426 = vmatpush1.xpose.msra.mxu0 0.0
        %2427 = vmatprep.subr.mxu0 0.0
        %2428 = vmatpush1.xpose.msra.mxu0 0.0
        %2429 = vmatprep.subr.mxu0 0.0
        %2430 = vmatpush1.xpose.msra.mxu0 0.0
        %2431 = vmatprep.subr.mxu0 0.0
        %2432 = vmatpush1.xpose.msra.mxu0 0.0
        %2433 = vmatprep.subr.mxu0 0.0
        %2434 = vmatpush1.xpose.msra.mxu0 0.0
        %2435 = vmatprep.subr.mxu0 0.0
        %2436 = vmatpush1.xpose.msra.mxu0 0.0
        %2437 = vmatprep.subr.mxu0 0.0
        %2438 = vmatpush1.xpose.msra.mxu0 0.0
        %2439 = vmatprep.subr.mxu0 0.0
        %2440 = vmatpush1.xpose.msra.mxu0 0.0
        %2441 = vmatprep.subr.mxu0 0.0
        %2442 = vmatpush1.xpose.msra.mxu0 0.0
        %2443 = vmatprep.subr.mxu0 0.0
        %2444 = vmatpush1.xpose.msra.mxu0 0.0
        %2445 = vmatprep.subr.mxu0 0.0
        %2446 = vmatpush1.xpose.msra.mxu0 0.0
        %2447 = vmatprep.subr.mxu0 0.0
        %2448 = vmatpush1.xpose.msra.mxu0 0.0
        %2449 = vmatprep.subr.mxu0 0.0
        %2450 = vmatpush1.xpose.msra.mxu0 0.0
        %2451 = vmatprep.mubr.f32.mxu0 0.0
        %2452 = vmatmul.mubr.f32.gmra.mrb[0].mxu0 %v2379
        %v2453 = vpop.f32.mrb[0].mxu0
        %v2454 = vadd.f32 0.0, %v2453
        %v2455 = vpop.f32.mrb[0].mxu0
        %2456 = vmatprep.mubr.f32.mxu0 0.0
        %2457 = vmatmul.mubr.f32.gmra.mrb[0].mxu0 %v2381
        %v2458 = vpop.f32.mrb[0].mxu0
        %v2459 = vadd.f32 0.0, %v2458
        %v2460 = vpop.f32.mrb[0].mxu0
        %2461 = vdwg.mxu0
        %v2462 = vmul.f32 %v2363, 0.35355338
        %v2463 = vmul.f32 %v2368, 0.35355338
        %v2464 = vmul.f32 %v2454, 0.35355338
        %v2465 = vmul.f32 %v2459, 0.35355338
        %v2466 = vadd.f32 %v2462, %v1544
        %v2467 = vadd.f32 %v2463, %v1545
        %v2468 = vadd.f32 %v2464, %v1546
        %v2469 = vadd.f32 %v2465, %v1547
        %v2470 = vsel %vm2057, %v2466, -inf
        %2471 = vmax.xlane.f32.xlu0 %v2470
        %v2472 = vpop.xlane.xlu0 %2471
        %v2473 = vsel %vm2061, %v2467, -inf
        %2474 = vmax.xlane.f32.xlu0 %v2473
        %v2475 = vpop.xlane.xlu0 %2474
        %v2476 = vsel %vm2057, %v2468, -inf
        %2477 = vmax.xlane.f32.xlu0 %v2476
        %v2478 = vpop.xlane.xlu0 %2477
        %v2479 = vsel %vm2061, %v2469, -inf
        %2480 = vmax.xlane.f32.xlu0 %v2479
        %v2481 = vpop.xlane.xlu0 %2480
        %v2482 = vsub.f32 %v2466, %v2472
        %v2483 = vsub.f32 %v2467, %v2475
        %v2484 = vsub.f32 %v2468, %v2478
        %v2485 = vsub.f32 %v2469, %v2481
        %v2486 = vmul.f32 %v2482, 1.442695
        %v2487 = vpow.pop %v2486
        %v2488 = vmul.f32 %v2483, 1.442695
        %v2489 = vpow.pop %v2488
        %v2490 = vmul.f32 %v2484, 1.442695
        %v2491 = vpow.pop %v2490
        %v2492 = vmul.f32 %v2485, 1.442695
        %v2493 = vpow.pop %v2492
        %v2494 = vsel %vm2057, %v2487, 0.0
        %2495 = vadd.xlane.f32.xlu0 %v2494
        %v2496 = vpop.xlane.xlu0 %2495
        %v2497 = vsel %vm2061, %v2489, 0.0
        %2498 = vadd.xlane.f32.xlu0 %v2497
        %v2499 = vpop.xlane.xlu0 %2498
        %v2500 = vsel %vm2057, %v2491, 0.0
        %2501 = vadd.xlane.f32.xlu0 %v2500
        %v2502 = vpop.xlane.xlu0 %2501
        %v2503 = vsel %vm2061, %v2493, 0.0
        %2504 = vadd.xlane.f32.xlu0 %v2503
        %v2505 = vpop.xlane.xlu0 %2504
        %v2506 = vrcp.pop %v2496
        %v2507 = vmul.f32 %v2487, %v2506
        %v2508 = vrcp.pop %v2499
        %v2509 = vmul.f32 %v2489, %v2508
        %v2510 = vrcp.pop %v2502
        %v2511 = vmul.f32 %v2491, %v2510
        %v2512 = vrcp.pop %v2505
        %v2513 = vmul.f32 %v2493, %v2512
        %2514 = vrot.lane.b32.xlu0 %v1872, 56
        %v2515 = vpop.permute.xlu0 %2514
        %2516 = vrot.lane.b32.xlu0 %v1858, 56
        %v2517 = vpop.permute.xlu0 %2516
        %v2520 = vsel %vm2057, %v2507, 0
        %v2523 = vsel %vm2057, %v2509, 0
        %v2525 = vsel %vm2114, %v2517, 0
        %2527 = vmatprep.subr.mxu0 0.0
        %2528 = vmatpush1.msra.mxu0 %v2515
        %2529 = vmatprep.subr.mxu0 0.0
        %2530 = vmatpush1.msra.mxu0 %v2525
        %2531 = vmatprep.subr.mxu0 0.0
        %2532 = vmatpush1.msra.mxu0 0.0
        %2533 = vmatprep.subr.mxu0 0.0
        %2534 = vmatpush1.msra.mxu0 0.0
        %2535 = vmatprep.subr.mxu0 0.0
        %2536 = vmatpush1.msra.mxu0 0.0
        %2537 = vmatprep.subr.mxu0 0.0
        %2538 = vmatpush1.msra.mxu0 0.0
        %2539 = vmatprep.subr.mxu0 0.0
        %2540 = vmatpush1.msra.mxu0 0.0
        %2541 = vmatprep.subr.mxu0 0.0
        %2542 = vmatpush1.msra.mxu0 0.0
        %2543 = vmatprep.subr.mxu0 0.0
        %2544 = vmatpush1.msra.mxu0 0.0
        %2545 = vmatprep.subr.mxu0 0.0
        %2546 = vmatpush1.msra.mxu0 0.0
        %2547 = vmatprep.subr.mxu0 0.0
        %2548 = vmatpush1.msra.mxu0 0.0
        %2549 = vmatprep.subr.mxu0 0.0
        %2550 = vmatpush1.msra.mxu0 0.0
        %2551 = vmatprep.subr.mxu0 0.0
        %2552 = vmatpush1.msra.mxu0 0.0
        %2553 = vmatprep.subr.mxu0 0.0
        %2554 = vmatpush1.msra.mxu0 0.0
        %2555 = vmatprep.subr.mxu0 0.0
        %2556 = vmatpush1.msra.mxu0 0.0
        %2557 = vmatprep.subr.mxu0 0.0
        %2558 = vmatpush1.msra.mxu0 0.0
        %2559 = vmatprep.subr.mxu0 0.0
        %2560 = vmatpush1.msra.mxu0 0.0
        %2561 = vmatprep.subr.mxu0 0.0
        %2562 = vmatpush1.msra.mxu0 0.0
        %2563 = vmatprep.subr.mxu0 0.0
        %2564 = vmatpush1.msra.mxu0 0.0
        %2565 = vmatprep.subr.mxu0 0.0
        %2566 = vmatpush1.msra.mxu0 0.0
        %2567 = vmatprep.subr.mxu0 0.0
        %2568 = vmatpush1.msra.mxu0 0.0
        %2569 = vmatprep.subr.mxu0 0.0
        %2570 = vmatpush1.msra.mxu0 0.0
        %2571 = vmatprep.subr.mxu0 0.0
        %2572 = vmatpush1.msra.mxu0 0.0
        %2573 = vmatprep.subr.mxu0 0.0
        %2574 = vmatpush1.msra.mxu0 0.0
        %2575 = vmatprep.subr.mxu0 0.0
        %2576 = vmatpush1.msra.mxu0 0.0
        %2577 = vmatprep.subr.mxu0 0.0
        %2578 = vmatpush1.msra.mxu0 0.0
        %2579 = vmatprep.subr.mxu0 0.0
        %2580 = vmatpush1.msra.mxu0 0.0
        %2581 = vmatprep.subr.mxu0 0.0
        %2582 = vmatpush1.msra.mxu0 0.0
        %2583 = vmatprep.subr.mxu0 0.0
        %2584 = vmatpush1.msra.mxu0 0.0
        %2585 = vmatprep.subr.mxu0 0.0
        %2586 = vmatpush1.msra.mxu0 0.0
        %2587 = vmatprep.subr.mxu0 0.0
        %2588 = vmatpush1.msra.mxu0 0.0
        %2589 = vmatprep.subr.mxu0 0.0
        %2590 = vmatpush1.msra.mxu0 0.0
        %2591 = vmatprep.mubr.f32.mxu0 0.0
        %2592 = vmatmul.mubr.f32.gmra.mrb[0].mxu0 %v2520
        %v2593 = vpop.f32.mrb[0].mxu0
        %v2594 = vadd.f32 0.0, %v2593
        %v2595 = vpop.f32.mrb[0].mxu0
        %2596 = vmatprep.mubr.f32.mxu0 0.0
        %2597 = vmatmul.mubr.f32.gmra.mrb[0].mxu0 %v2523
        %v2598 = vpop.f32.mrb[0].mxu0
        %v2599 = vadd.f32 0.0, %v2598
        %v2600 = vpop.f32.mrb[0].mxu0
        %2601 = vdwg.mxu0
        %2602 = vrot.lane.b32.xlu0 %v1961, 56
        %v2603 = vpop.permute.xlu0 %2602
        %2604 = vrot.lane.b32.xlu0 %v1871, 56
        %v2605 = vpop.permute.xlu0 %2604
        %v2608 = vsel %vm2057, %v2511, 0
        %v2611 = vsel %vm2057, %v2513, 0
        %v2613 = vsel %vm2114, %v2605, 0
        %2615 = vmatprep.subr.mxu0 0.0
        %2616 = vmatpush1.msra.mxu0 %v2603
        %2617 = vmatprep.subr.mxu0 0.0
        %2618 = vmatpush1.msra.mxu0 %v2613
        %2619 = vmatprep.subr.mxu0 0.0
        %2620 = vmatpush1.msra.mxu0 0.0
        %2621 = vmatprep.subr.mxu0 0.0
        %2622 = vmatpush1.msra.mxu0 0.0
        %2623 = vmatprep.subr.mxu0 0.0
        %2624 = vmatpush1.msra.mxu0 0.0
        %2625 = vmatprep.subr.mxu0 0.0
        %2626 = vmatpush1.msra.mxu0 0.0
        %2627 = vmatprep.subr.mxu0 0.0
        %2628 = vmatpush1.msra.mxu0 0.0
        %2629 = vmatprep.subr.mxu0 0.0
        %2630 = vmatpush1.msra.mxu0 0.0
        %2631 = vmatprep.subr.mxu0 0.0
        %2632 = vmatpush1.msra.mxu0 0.0
        %2633 = vmatprep.subr.mxu0 0.0
        %2634 = vmatpush1.msra.mxu0 0.0
        %2635 = vmatprep.subr.mxu0 0.0
        %2636 = vmatpush1.msra.mxu0 0.0
        %2637 = vmatprep.subr.mxu0 0.0
        %2638 = vmatpush1.msra.mxu0 0.0
        %2639 = vmatprep.subr.mxu0 0.0
        %2640 = vmatpush1.msra.mxu0 0.0
        %2641 = vmatprep.subr.mxu0 0.0
        %2642 = vmatpush1.msra.mxu0 0.0
        %2643 = vmatprep.subr.mxu0 0.0
        %2644 = vmatpush1.msra.mxu0 0.0
        %2645 = vmatprep.subr.mxu0 0.0
        %2646 = vmatpush1.msra.mxu0 0.0
        %2647 = vmatprep.subr.mxu0 0.0
        %2648 = vmatpush1.msra.mxu0 0.0
        %2649 = vmatprep.subr.mxu0 0.0
        %2650 = vmatpush1.msra.mxu0 0.0
        %2651 = vmatprep.subr.mxu0 0.0
        %2652 = vmatpush1.msra.mxu0 0.0
        %2653 = vmatprep.subr.mxu0 0.0
        %2654 = vmatpush1.msra.mxu0 0.0
        %2655 = vmatprep.subr.mxu0 0.0
        %2656 = vmatpush1.msra.mxu0 0.0
        %2657 = vmatprep.subr.mxu0 0.0
        %2658 = vmatpush1.msra.mxu0 0.0
        %2659 = vmatprep.subr.mxu0 0.0
        %2660 = vmatpush1.msra.mxu0 0.0
        %2661 = vmatprep.subr.mxu0 0.0
        %2662 = vmatpush1.msra.mxu0 0.0
        %2663 = vmatprep.subr.mxu0 0.0
        %2664 = vmatpush1.msra.mxu0 0.0
        %2665 = vmatprep.subr.mxu0 0.0
        %2666 = vmatpush1.msra.mxu0 0.0
        %2667 = vmatprep.subr.mxu0 0.0
        %2668 = vmatpush1.msra.mxu0 0.0
        %2669 = vmatprep.subr.mxu0 0.0
        %2670 = vmatpush1.msra.mxu0 0.0
        %2671 = vmatprep.subr.mxu0 0.0
        %2672 = vmatpush1.msra.mxu0 0.0
        %2673 = vmatprep.subr.mxu0 0.0
        %2674 = vmatpush1.msra.mxu0 0.0
        %2675 = vmatprep.subr.mxu0 0.0
        %2676 = vmatpush1.msra.mxu0 0.0
        %2677 = vmatprep.subr.mxu0 0.0
        %2678 = vmatpush1.msra.mxu0 0.0
        %2679 = vmatprep.mubr.f32.mxu0 0.0
        %2680 = vmatmul.mubr.f32.gmra.mrb[0].mxu0 %v2608
        %v2681 = vpop.f32.mrb[0].mxu0
        %v2682 = vadd.f32 0.0, %v2681
        %v2683 = vpop.f32.mrb[0].mxu0
        %2684 = vmatprep.mubr.f32.mxu0 0.0
        %2685 = vmatmul.mubr.f32.gmra.mrb[0].mxu0 %v2611
        %v2686 = vpop.f32.mrb[0].mxu0
        %v2687 = vadd.f32 0.0, %v2686
        %v2688 = vpop.f32.mrb[0].mxu0
        %2689 = vdwg.mxu0
        %2690 = vrot.lane.b32.xlu0 %v1872, 112
        %v2691 = vpop.permute.xlu0 %2690
        %2692 = vrot.lane.b32.xlu0 %v1858, 112
        %v2693 = vpop.permute.xlu0 %2692
        %2694 = vrot.lane.b32.xlu0 %v1872, 80
        %v2695 = vpop.permute.xlu0 %2694
        %2696 = vrot.lane.b32.xlu0 %v1858, 80
        %v2697 = vpop.permute.xlu0 %2696
        %v2698 = vsel %vm1877, %v2691, 0
        %v2700 = vsel %vm1877, %v2693, 0
        %v2702 = vsel %vm1877, %v2695, 0
        %v2704 = vsel %vm1877, %v2697, 0
        %2706 = vmatprep.subr.mxu0 0.0
        %2707 = vmatpush1.xpose.msra.mxu0 %v2702
        %2708 = vmatprep.subr.mxu0 0.0
        %2709 = vmatpush1.xpose.msra.mxu0 %v2704
        %2710 = vmatprep.subr.mxu0 0.0
        %2711 = vmatpush1.xpose.msra.mxu0 0.0
        %2712 = vmatprep.subr.mxu0 0.0
        %2713 = vmatpush1.xpose.msra.mxu0 0.0
        %2714 = vmatprep.subr.mxu0 0.0
        %2715 = vmatpush1.xpose.msra.mxu0 0.0
        %2716 = vmatprep.subr.mxu0 0.0
        %2717 = vmatpush1.xpose.msra.mxu0 0.0
        %2718 = vmatprep.subr.mxu0 0.0
        %2719 = vmatpush1.xpose.msra.mxu0 0.0
        %2720 = vmatprep.subr.mxu0 0.0
        %2721 = vmatpush1.xpose.msra.mxu0 0.0
        %2722 = vmatprep.subr.mxu0 0.0
        %2723 = vmatpush1.xpose.msra.mxu0 0.0
        %2724 = vmatprep.subr.mxu0 0.0
        %2725 = vmatpush1.xpose.msra.mxu0 0.0
        %2726 = vmatprep.subr.mxu0 0.0
        %2727 = vmatpush1.xpose.msra.mxu0 0.0
        %2728 = vmatprep.subr.mxu0 0.0
        %2729 = vmatpush1.xpose.msra.mxu0 0.0
        %2730 = vmatprep.subr.mxu0 0.0
        %2731 = vmatpush1.xpose.msra.mxu0 0.0
        %2732 = vmatprep.subr.mxu0 0.0
        %2733 = vmatpush1.xpose.msra.mxu0 0.0
        %2734 = vmatprep.subr.mxu0 0.0
        %2735 = vmatpush1.xpose.msra.mxu0 0.0
        %2736 = vmatprep.subr.mxu0 0.0
        %2737 = vmatpush1.xpose.msra.mxu0 0.0
        %2738 = vmatprep.subr.mxu0 0.0
        %2739 = vmatpush1.xpose.msra.mxu0 0.0
        %2740 = vmatprep.subr.mxu0 0.0
        %2741 = vmatpush1.xpose.msra.mxu0 0.0
        %2742 = vmatprep.subr.mxu0 0.0
        %2743 = vmatpush1.xpose.msra.mxu0 0.0
        %2744 = vmatprep.subr.mxu0 0.0
        %2745 = vmatpush1.xpose.msra.mxu0 0.0
        %2746 = vmatprep.subr.mxu0 0.0
        %2747 = vmatpush1.xpose.msra.mxu0 0.0
        %2748 = vmatprep.subr.mxu0 0.0
        %2749 = vmatpush1.xpose.msra.mxu0 0.0
        %2750 = vmatprep.subr.mxu0 0.0
        %2751 = vmatpush1.xpose.msra.mxu0 0.0
        %2752 = vmatprep.subr.mxu0 0.0
        %2753 = vmatpush1.xpose.msra.mxu0 0.0
        %2754 = vmatprep.subr.mxu0 0.0
        %2755 = vmatpush1.xpose.msra.mxu0 0.0
        %2756 = vmatprep.subr.mxu0 0.0
        %2757 = vmatpush1.xpose.msra.mxu0 0.0
        %2758 = vmatprep.subr.mxu0 0.0
        %2759 = vmatpush1.xpose.msra.mxu0 0.0
        %2760 = vmatprep.subr.mxu0 0.0
        %2761 = vmatpush1.xpose.msra.mxu0 0.0
        %2762 = vmatprep.subr.mxu0 0.0
        %2763 = vmatpush1.xpose.msra.mxu0 0.0
        %2764 = vmatprep.subr.mxu0 0.0
        %2765 = vmatpush1.xpose.msra.mxu0 0.0
        %2766 = vmatprep.subr.mxu0 0.0
        %2767 = vmatpush1.xpose.msra.mxu0 0.0
        %2768 = vmatprep.subr.mxu0 0.0
        %2769 = vmatpush1.xpose.msra.mxu0 0.0
        %2770 = vmatprep.mubr.f32.mxu0 0.0
        %2771 = vmatmul.mubr.f32.gmra.mrb[0].mxu0 %v2698
        %v2772 = vpop.f32.mrb[0].mxu0
        %v2773 = vadd.f32 0.0, %v2772
        %v2774 = vpop.f32.mrb[0].mxu0
        %2775 = vmatprep.mubr.f32.mxu0 0.0
        %2776 = vmatmul.mubr.f32.gmra.mrb[0].mxu0 %v2700
        %v2777 = vpop.f32.mrb[0].mxu0
        %v2778 = vadd.f32 0.0, %v2777
        %v2779 = vpop.f32.mrb[0].mxu0
        %2780 = vdwg.mxu0
        %2781 = vrot.lane.b32.xlu0 %v1961, 112
        %v2782 = vpop.permute.xlu0 %2781
        %2783 = vrot.lane.b32.xlu0 %v1871, 112
        %v2784 = vpop.permute.xlu0 %2783
        %2785 = vrot.lane.b32.xlu0 %v1961, 80
        %v2786 = vpop.permute.xlu0 %2785
        %2787 = vrot.lane.b32.xlu0 %v1871, 80
        %v2788 = vpop.permute.xlu0 %2787
        %v2789 = vsel %vm1877, %v2782, 0
        %v2791 = vsel %vm1877, %v2784, 0
        %v2793 = vsel %vm1877, %v2786, 0
        %v2795 = vsel %vm1877, %v2788, 0
        %2797 = vmatprep.subr.mxu0 0.0
        %2798 = vmatpush1.xpose.msra.mxu0 %v2793
        %2799 = vmatprep.subr.mxu0 0.0
        %2800 = vmatpush1.xpose.msra.mxu0 %v2795
        %2801 = vmatprep.subr.mxu0 0.0
        %2802 = vmatpush1.xpose.msra.mxu0 0.0
        %2803 = vmatprep.subr.mxu0 0.0
        %2804 = vmatpush1.xpose.msra.mxu0 0.0
        %2805 = vmatprep.subr.mxu0 0.0
        %2806 = vmatpush1.xpose.msra.mxu0 0.0
        %2807 = vmatprep.subr.mxu0 0.0
        %2808 = vmatpush1.xpose.msra.mxu0 0.0
        %2809 = vmatprep.subr.mxu0 0.0
        %2810 = vmatpush1.xpose.msra.mxu0 0.0
        %2811 = vmatprep.subr.mxu0 0.0
        %2812 = vmatpush1.xpose.msra.mxu0 0.0
        %2813 = vmatprep.subr.mxu0 0.0
        %2814 = vmatpush1.xpose.msra.mxu0 0.0
        %2815 = vmatprep.subr.mxu0 0.0
        %2816 = vmatpush1.xpose.msra.mxu0 0.0
        %2817 = vmatprep.subr.mxu0 0.0
        %2818 = vmatpush1.xpose.msra.mxu0 0.0
        %2819 = vmatprep.subr.mxu0 0.0
        %2820 = vmatpush1.xpose.msra.mxu0 0.0
        %2821 = vmatprep.subr.mxu0 0.0
        %2822 = vmatpush1.xpose.msra.mxu0 0.0
        %2823 = vmatprep.subr.mxu0 0.0
        %2824 = vmatpush1.xpose.msra.mxu0 0.0
        %2825 = vmatprep.subr.mxu0 0.0
        %2826 = vmatpush1.xpose.msra.mxu0 0.0
        %2827 = vmatprep.subr.mxu0 0.0
        %2828 = vmatpush1.xpose.msra.mxu0 0.0
        %2829 = vmatprep.subr.mxu0 0.0
        %2830 = vmatpush1.xpose.msra.mxu0 0.0
        %2831 = vmatprep.subr.mxu0 0.0
        %2832 = vmatpush1.xpose.msra.mxu0 0.0
        %2833 = vmatprep.subr.mxu0 0.0
        %2834 = vmatpush1.xpose.msra.mxu0 0.0
        %2835 = vmatprep.subr.mxu0 0.0
        %2836 = vmatpush1.xpose.msra.mxu0 0.0
        %2837 = vmatprep.subr.mxu0 0.0
        %2838 = vmatpush1.xpose.msra.mxu0 0.0
        %2839 = vmatprep.subr.mxu0 0.0
        %2840 = vmatpush1.xpose.msra.mxu0 0.0
        %2841 = vmatprep.subr.mxu0 0.0
        %2842 = vmatpush1.xpose.msra.mxu0 0.0
        %2843 = vmatprep.subr.mxu0 0.0
        %2844 = vmatpush1.xpose.msra.mxu0 0.0
        %2845 = vmatprep.subr.mxu0 0.0
        %2846 = vmatpush1.xpose.msra.mxu0 0.0
        %2847 = vmatprep.subr.mxu0 0.0
        %2848 = vmatpush1.xpose.msra.mxu0 0.0
        %2849 = vmatprep.subr.mxu0 0.0
        %2850 = vmatpush1.xpose.msra.mxu0 0.0
        %2851 = vmatprep.subr.mxu0 0.0
        %2852 = vmatpush1.xpose.msra.mxu0 0.0
        %2853 = vmatprep.subr.mxu0 0.0
        %2854 = vmatpush1.xpose.msra.mxu0 0.0
        %2855 = vmatprep.subr.mxu0 0.0
        %2856 = vmatpush1.xpose.msra.mxu0 0.0
        %2857 = vmatprep.subr.mxu0 0.0
        %2858 = vmatpush1.xpose.msra.mxu0 0.0
        %2859 = vmatprep.subr.mxu0 0.0
        %2860 = vmatpush1.xpose.msra.mxu0 0.0
        %2861 = vmatprep.mubr.f32.mxu0 0.0
        %2862 = vmatmul.mubr.f32.gmra.mrb[0].mxu0 %v2789
        %v2863 = vpop.f32.mrb[0].mxu0
        %v2864 = vadd.f32 0.0, %v2863
        %v2865 = vpop.f32.mrb[0].mxu0
        %2866 = vmatprep.mubr.f32.mxu0 0.0
        %2867 = vmatmul.mubr.f32.gmra.mrb[0].mxu0 %v2791
        %v2868 = vpop.f32.mrb[0].mxu0
        %v2869 = vadd.f32 0.0, %v2868
        %v2870 = vpop.f32.mrb[0].mxu0
        %2871 = vdwg.mxu0
        %v2872 = vmul.f32 %v2773, 0.35355338
        %v2873 = vmul.f32 %v2778, 0.35355338
        %v2874 = vmul.f32 %v2864, 0.35355338
        %v2875 = vmul.f32 %v2869, 0.35355338
        %v2876 = vadd.f32 %v2872, %v1544
        %v2877 = vadd.f32 %v2873, %v1545
        %v2878 = vadd.f32 %v2874, %v1546
        %v2879 = vadd.f32 %v2875, %v1547
        %v2880 = vsel %vm2057, %v2876, -inf
        %2881 = vmax.xlane.f32.xlu0 %v2880
        %v2882 = vpop.xlane.xlu0 %2881
        %v2883 = vsel %vm2061, %v2877, -inf
        %2884 = vmax.xlane.f32.xlu0 %v2883
        %v2885 = vpop.xlane.xlu0 %2884
        %v2886 = vsel %vm2057, %v2878, -inf
        %2887 = vmax.xlane.f32.xlu0 %v2886
        %v2888 = vpop.xlane.xlu0 %2887
        %v2889 = vsel %vm2061, %v2879, -inf
        %2890 = vmax.xlane.f32.xlu0 %v2889
        %v2891 = vpop.xlane.xlu0 %2890
        %v2892 = vsub.f32 %v2876, %v2882
        %v2893 = vsub.f32 %v2877, %v2885
        %v2894 = vsub.f32 %v2878, %v2888
        %v2895 = vsub.f32 %v2879, %v2891
        %v2896 = vmul.f32 %v2892, 1.442695
        %v2897 = vpow.pop %v2896
        %v2898 = vmul.f32 %v2893, 1.442695
        %v2899 = vpow.pop %v2898
        %v2900 = vmul.f32 %v2894, 1.442695
        %v2901 = vpow.pop %v2900
        %v2902 = vmul.f32 %v2895, 1.442695
        %v2903 = vpow.pop %v2902
        %v2904 = vsel %vm2057, %v2897, 0.0
        %2905 = vadd.xlane.f32.xlu0 %v2904
        %v2906 = vpop.xlane.xlu0 %2905
        %v2907 = vsel %vm2061, %v2899, 0.0
        %2908 = vadd.xlane.f32.xlu0 %v2907
        %v2909 = vpop.xlane.xlu0 %2908
        %v2910 = vsel %vm2057, %v2901, 0.0
        %2911 = vadd.xlane.f32.xlu0 %v2910
        %v2912 = vpop.xlane.xlu0 %2911
        %v2913 = vsel %vm2061, %v2903, 0.0
        %2914 = vadd.xlane.f32.xlu0 %v2913
        %v2915 = vpop.xlane.xlu0 %2914
        %v2916 = vrcp.pop %v2906
        %v2917 = vmul.f32 %v2897, %v2916
        %v2918 = vrcp.pop %v2909
        %v2919 = vmul.f32 %v2899, %v2918
        %v2920 = vrcp.pop %v2912
        %v2921 = vmul.f32 %v2901, %v2920
        %v2922 = vrcp.pop %v2915
        %v2923 = vmul.f32 %v2903, %v2922
        %2924 = vrot.lane.b32.xlu0 %v1872, 48
        %v2925 = vpop.permute.xlu0 %2924
        %2926 = vrot.lane.b32.xlu0 %v1858, 48
        %v2927 = vpop.permute.xlu0 %2926
        %v2930 = vsel %vm2057, %v2917, 0
        %v2933 = vsel %vm2057, %v2919, 0
        %v2935 = vsel %vm2114, %v2927, 0
        %2937 = vmatprep.subr.mxu0 0.0
        %2938 = vmatpush1.msra.mxu0 %v2925
        %2939 = vmatprep.subr.mxu0 0.0
        %2940 = vmatpush1.msra.mxu0 %v2935
        %2941 = vmatprep.subr.mxu0 0.0
        %2942 = vmatpush1.msra.mxu0 0.0
        %2943 = vmatprep.subr.mxu0 0.0
        %2944 = vmatpush1.msra.mxu0 0.0
        %2945 = vmatprep.subr.mxu0 0.0
        %2946 = vmatpush1.msra.mxu0 0.0
        %2947 = vmatprep.subr.mxu0 0.0
        %2948 = vmatpush1.msra.mxu0 0.0
        %2949 = vmatprep.subr.mxu0 0.0
        %2950 = vmatpush1.msra.mxu0 0.0
        %2951 = vmatprep.subr.mxu0 0.0
        %2952 = vmatpush1.msra.mxu0 0.0
        %2953 = vmatprep.subr.mxu0 0.0
        %2954 = vmatpush1.msra.mxu0 0.0
        %2955 = vmatprep.subr.mxu0 0.0
        %2956 = vmatpush1.msra.mxu0 0.0
        %2957 = vmatprep.subr.mxu0 0.0
        %2958 = vmatpush1.msra.mxu0 0.0
        %2959 = vmatprep.subr.mxu0 0.0
        %2960 = vmatpush1.msra.mxu0 0.0
        %2961 = vmatprep.subr.mxu0 0.0
        %2962 = vmatpush1.msra.mxu0 0.0
        %2963 = vmatprep.subr.mxu0 0.0
        %2964 = vmatpush1.msra.mxu0 0.0
        %2965 = vmatprep.subr.mxu0 0.0
        %2966 = vmatpush1.msra.mxu0 0.0
        %2967 = vmatprep.subr.mxu0 0.0
        %2968 = vmatpush1.msra.mxu0 0.0
        %2969 = vmatprep.subr.mxu0 0.0
        %2970 = vmatpush1.msra.mxu0 0.0
        %2971 = vmatprep.subr.mxu0 0.0
        %2972 = vmatpush1.msra.mxu0 0.0
        %2973 = vmatprep.subr.mxu0 0.0
        %2974 = vmatpush1.msra.mxu0 0.0
        %2975 = vmatprep.subr.mxu0 0.0
        %2976 = vmatpush1.msra.mxu0 0.0
        %2977 = vmatprep.subr.mxu0 0.0
        %2978 = vmatpush1.msra.mxu0 0.0
        %2979 = vmatprep.subr.mxu0 0.0
        %2980 = vmatpush1.msra.mxu0 0.0
        %2981 = vmatprep.subr.mxu0 0.0
        %2982 = vmatpush1.msra.mxu0 0.0
        %2983 = vmatprep.subr.mxu0 0.0
        %2984 = vmatpush1.msra.mxu0 0.0
        %2985 = vmatprep.subr.mxu0 0.0
        %2986 = vmatpush1.msra.mxu0 0.0
        %2987 = vmatprep.subr.mxu0 0.0
        %2988 = vmatpush1.msra.mxu0 0.0
        %2989 = vmatprep.subr.mxu0 0.0
        %2990 = vmatpush1.msra.mxu0 0.0
        %2991 = vmatprep.subr.mxu0 0.0
        %2992 = vmatpush1.msra.mxu0 0.0
        %2993 = vmatprep.subr.mxu0 0.0
        %2994 = vmatpush1.msra.mxu0 0.0
        %2995 = vmatprep.subr.mxu0 0.0
        %2996 = vmatpush1.msra.mxu0 0.0
        %2997 = vmatprep.subr.mxu0 0.0
        %2998 = vmatpush1.msra.mxu0 0.0
        %2999 = vmatprep.subr.mxu0 0.0
        %3000 = vmatpush1.msra.mxu0 0.0
        %3001 = vmatprep.mubr.f32.mxu0 0.0
        %3002 = vmatmul.mubr.f32.gmra.mrb[0].mxu0 %v2930
        %v3003 = vpop.f32.mrb[0].mxu0
        %v3004 = vadd.f32 0.0, %v3003
        %v3005 = vpop.f32.mrb[0].mxu0
        %3006 = vmatprep.mubr.f32.mxu0 0.0
        %3007 = vmatmul.mubr.f32.gmra.mrb[0].mxu0 %v2933
        %v3008 = vpop.f32.mrb[0].mxu0
        %v3009 = vadd.f32 0.0, %v3008
        %v3010 = vpop.f32.mrb[0].mxu0
        %3011 = vdwg.mxu0
        %3012 = vrot.lane.b32.xlu0 %v1961, 48
        %v3013 = vpop.permute.xlu0 %3012
        %3014 = vrot.lane.b32.xlu0 %v1871, 48
        %v3015 = vpop.permute.xlu0 %3014
        %v3018 = vsel %vm2057, %v2921, 0
        %v3021 = vsel %vm2057, %v2923, 0
        %v3023 = vsel %vm2114, %v3015, 0
        %3025 = vmatprep.subr.mxu0 0.0
        %3026 = vmatpush1.msra.mxu0 %v3013
        %3027 = vmatprep.subr.mxu0 0.0
        %3028 = vmatpush1.msra.mxu0 %v3023
        %3029 = vmatprep.subr.mxu0 0.0
        %3030 = vmatpush1.msra.mxu0 0.0
        %3031 = vmatprep.subr.mxu0 0.0
        %3032 = vmatpush1.msra.mxu0 0.0
        %3033 = vmatprep.subr.mxu0 0.0
        %3034 = vmatpush1.msra.mxu0 0.0
        %3035 = vmatprep.subr.mxu0 0.0
        %3036 = vmatpush1.msra.mxu0 0.0
        %3037 = vmatprep.subr.mxu0 0.0
        %3038 = vmatpush1.msra.mxu0 0.0
        %3039 = vmatprep.subr.mxu0 0.0
        %3040 = vmatpush1.msra.mxu0 0.0
        %3041 = vmatprep.subr.mxu0 0.0
        %3042 = vmatpush1.msra.mxu0 0.0
        %3043 = vmatprep.subr.mxu0 0.0
        %3044 = vmatpush1.msra.mxu0 0.0
        %3045 = vmatprep.subr.mxu0 0.0
        %3046 = vmatpush1.msra.mxu0 0.0
        %3047 = vmatprep.subr.mxu0 0.0
        %3048 = vmatpush1.msra.mxu0 0.0
        %3049 = vmatprep.subr.mxu0 0.0
        %3050 = vmatpush1.msra.mxu0 0.0
        %3051 = vmatprep.subr.mxu0 0.0
        %3052 = vmatpush1.msra.mxu0 0.0
        %3053 = vmatprep.subr.mxu0 0.0
        %3054 = vmatpush1.msra.mxu0 0.0
        %3055 = vmatprep.subr.mxu0 0.0
        %3056 = vmatpush1.msra.mxu0 0.0
        %3057 = vmatprep.subr.mxu0 0.0
        %3058 = vmatpush1.msra.mxu0 0.0
        %3059 = vmatprep.subr.mxu0 0.0
        %3060 = vmatpush1.msra.mxu0 0.0
        %3061 = vmatprep.subr.mxu0 0.0
        %3062 = vmatpush1.msra.mxu0 0.0
        %3063 = vmatprep.subr.mxu0 0.0
        %3064 = vmatpush1.msra.mxu0 0.0
        %3065 = vmatprep.subr.mxu0 0.0
        %3066 = vmatpush1.msra.mxu0 0.0
        %3067 = vmatprep.subr.mxu0 0.0
        %3068 = vmatpush1.msra.mxu0 0.0
        %3069 = vmatprep.subr.mxu0 0.0
        %3070 = vmatpush1.msra.mxu0 0.0
        %3071 = vmatprep.subr.mxu0 0.0
        %3072 = vmatpush1.msra.mxu0 0.0
        %3073 = vmatprep.subr.mxu0 0.0
        %3074 = vmatpush1.msra.mxu0 0.0
        %3075 = vmatprep.subr.mxu0 0.0
        %3076 = vmatpush1.msra.mxu0 0.0
        %3077 = vmatprep.subr.mxu0 0.0
        %3078 = vmatpush1.msra.mxu0 0.0
        %3079 = vmatprep.subr.mxu0 0.0
        %3080 = vmatpush1.msra.mxu0 0.0
        %3081 = vmatprep.subr.mxu0 0.0
        %3082 = vmatpush1.msra.mxu0 0.0
        %3083 = vmatprep.subr.mxu0 0.0
        %3084 = vmatpush1.msra.mxu0 0.0
        %3085 = vmatprep.subr.mxu0 0.0
        %3086 = vmatpush1.msra.mxu0 0.0
        %3087 = vmatprep.subr.mxu0 0.0
        %3088 = vmatpush1.msra.mxu0 0.0
        %3089 = vmatprep.mubr.f32.mxu0 0.0
        %3090 = vmatmul.mubr.f32.gmra.mrb[0].mxu0 %v3018
        %v3091 = vpop.f32.mrb[0].mxu0
        %v3092 = vadd.f32 0.0, %v3091
        %v3093 = vpop.f32.mrb[0].mxu0
        %3094 = vmatprep.mubr.f32.mxu0 0.0
        %3095 = vmatmul.mubr.f32.gmra.mrb[0].mxu0 %v3021
        %v3096 = vpop.f32.mrb[0].mxu0
        %v3097 = vadd.f32 0.0, %v3096
        %v3098 = vpop.f32.mrb[0].mxu0
        %3099 = vdwg.mxu0
        %3100 = vrot.lane.b32.xlu0 %v1872, 104
        %v3101 = vpop.permute.xlu0 %3100
        %3102 = vrot.lane.b32.xlu0 %v1858, 104
        %v3103 = vpop.permute.xlu0 %3102
        %3104 = vrot.lane.b32.xlu0 %v1872, 72
        %v3105 = vpop.permute.xlu0 %3104
        %3106 = vrot.lane.b32.xlu0 %v1858, 72
        %v3107 = vpop.permute.xlu0 %3106
        %v3108 = vsel %vm1877, %v3101, 0
        %v3110 = vsel %vm1877, %v3103, 0
        %v3112 = vsel %vm1877, %v3105, 0
        %v3114 = vsel %vm1877, %v3107, 0
        %3116 = vmatprep.subr.mxu0 0.0
        %3117 = vmatpush1.xpose.msra.mxu0 %v3112
        %3118 = vmatprep.subr.mxu0 0.0
        %3119 = vmatpush1.xpose.msra.mxu0 %v3114
        %3120 = vmatprep.subr.mxu0 0.0
        %3121 = vmatpush1.xpose.msra.mxu0 0.0
        %3122 = vmatprep.subr.mxu0 0.0
        %3123 = vmatpush1.xpose.msra.mxu0 0.0
        %3124 = vmatprep.subr.mxu0 0.0
        %3125 = vmatpush1.xpose.msra.mxu0 0.0
        %3126 = vmatprep.subr.mxu0 0.0
        %3127 = vmatpush1.xpose.msra.mxu0 0.0
        %3128 = vmatprep.subr.mxu0 0.0
        %3129 = vmatpush1.xpose.msra.mxu0 0.0
        %3130 = vmatprep.subr.mxu0 0.0
        %3131 = vmatpush1.xpose.msra.mxu0 0.0
        %3132 = vmatprep.subr.mxu0 0.0
        %3133 = vmatpush1.xpose.msra.mxu0 0.0
        %3134 = vmatprep.subr.mxu0 0.0
        %3135 = vmatpush1.xpose.msra.mxu0 0.0
        %3136 = vmatprep.subr.mxu0 0.0
        %3137 = vmatpush1.xpose.msra.mxu0 0.0
        %3138 = vmatprep.subr.mxu0 0.0
        %3139 = vmatpush1.xpose.msra.mxu0 0.0
        %3140 = vmatprep.subr.mxu0 0.0
        %3141 = vmatpush1.xpose.msra.mxu0 0.0
        %3142 = vmatprep.subr.mxu0 0.0
        %3143 = vmatpush1.xpose.msra.mxu0 0.0
        %3144 = vmatprep.subr.mxu0 0.0
        %3145 = vmatpush1.xpose.msra.mxu0 0.0
        %3146 = vmatprep.subr.mxu0 0.0
        %3147 = vmatpush1.xpose.msra.mxu0 0.0
        %3148 = vmatprep.subr.mxu0 0.0
        %3149 = vmatpush1.xpose.msra.mxu0 0.0
        %3150 = vmatprep.subr.mxu0 0.0
        %3151 = vmatpush1.xpose.msra.mxu0 0.0
        %3152 = vmatprep.subr.mxu0 0.0
        %3153 = vmatpush1.xpose.msra.mxu0 0.0
        %3154 = vmatprep.subr.mxu0 0.0
        %3155 = vmatpush1.xpose.msra.mxu0 0.0
        %3156 = vmatprep.subr.mxu0 0.0
        %3157 = vmatpush1.xpose.msra.mxu0 0.0
        %3158 = vmatprep.subr.mxu0 0.0
        %3159 = vmatpush1.xpose.msra.mxu0 0.0
        %3160 = vmatprep.subr.mxu0 0.0
        %3161 = vmatpush1.xpose.msra.mxu0 0.0
        %3162 = vmatprep.subr.mxu0 0.0
        %3163 = vmatpush1.xpose.msra.mxu0 0.0
        %3164 = vmatprep.subr.mxu0 0.0
        %3165 = vmatpush1.xpose.msra.mxu0 0.0
        %3166 = vmatprep.subr.mxu0 0.0
        %3167 = vmatpush1.xpose.msra.mxu0 0.0
        %3168 = vmatprep.subr.mxu0 0.0
        %3169 = vmatpush1.xpose.msra.mxu0 0.0
        %3170 = vmatprep.subr.mxu0 0.0
        %3171 = vmatpush1.xpose.msra.mxu0 0.0
        %3172 = vmatprep.subr.mxu0 0.0
        %3173 = vmatpush1.xpose.msra.mxu0 0.0
        %3174 = vmatprep.subr.mxu0 0.0
        %3175 = vmatpush1.xpose.msra.mxu0 0.0
        %3176 = vmatprep.subr.mxu0 0.0
        %3177 = vmatpush1.xpose.msra.mxu0 0.0
        %3178 = vmatprep.subr.mxu0 0.0
        %3179 = vmatpush1.xpose.msra.mxu0 0.0
        %3180 = vmatprep.mubr.f32.mxu0 0.0
        %3181 = vmatmul.mubr.f32.gmra.mrb[0].mxu0 %v3108
        %v3182 = vpop.f32.mrb[0].mxu0
        %v3183 = vadd.f32 0.0, %v3182
        %v3184 = vpop.f32.mrb[0].mxu0
        %3185 = vmatprep.mubr.f32.mxu0 0.0
        %3186 = vmatmul.mubr.f32.gmra.mrb[0].mxu0 %v3110
        %v3187 = vpop.f32.mrb[0].mxu0
        %v3188 = vadd.f32 0.0, %v3187
        %v3189 = vpop.f32.mrb[0].mxu0
        %3190 = vdwg.mxu0
        %3191 = vrot.lane.b32.xlu0 %v1961, 104
        %v3192 = vpop.permute.xlu0 %3191
        %3193 = vrot.lane.b32.xlu0 %v1871, 104
        %v3194 = vpop.permute.xlu0 %3193
        %3195 = vrot.lane.b32.xlu0 %v1961, 72
        %v3196 = vpop.permute.xlu0 %3195
        %3197 = vrot.lane.b32.xlu0 %v1871, 72
        %v3198 = vpop.permute.xlu0 %3197
        %v3199 = vsel %vm1877, %v3192, 0
        %v3201 = vsel %vm1877, %v3194, 0
        %v3203 = vsel %vm1877, %v3196, 0
        %v3205 = vsel %vm1877, %v3198, 0
        %3207 = vmatprep.subr.mxu0 0.0
        %3208 = vmatpush1.xpose.msra.mxu0 %v3203
        %3209 = vmatprep.subr.mxu0 0.0
        %3210 = vmatpush1.xpose.msra.mxu0 %v3205
        %3211 = vmatprep.subr.mxu0 0.0
        %3212 = vmatpush1.xpose.msra.mxu0 0.0
        %3213 = vmatprep.subr.mxu0 0.0
        %3214 = vmatpush1.xpose.msra.mxu0 0.0
        %3215 = vmatprep.subr.mxu0 0.0
        %3216 = vmatpush1.xpose.msra.mxu0 0.0
        %3217 = vmatprep.subr.mxu0 0.0
        %3218 = vmatpush1.xpose.msra.mxu0 0.0
        %3219 = vmatprep.subr.mxu0 0.0
        %3220 = vmatpush1.xpose.msra.mxu0 0.0
        %3221 = vmatprep.subr.mxu0 0.0
        %3222 = vmatpush1.xpose.msra.mxu0 0.0
        %3223 = vmatprep.subr.mxu0 0.0
        %3224 = vmatpush1.xpose.msra.mxu0 0.0
        %3225 = vmatprep.subr.mxu0 0.0
        %3226 = vmatpush1.xpose.msra.mxu0 0.0
        %3227 = vmatprep.subr.mxu0 0.0
        %3228 = vmatpush1.xpose.msra.mxu0 0.0
        %3229 = vmatprep.subr.mxu0 0.0
        %3230 = vmatpush1.xpose.msra.mxu0 0.0
        %3231 = vmatprep.subr.mxu0 0.0
        %3232 = vmatpush1.xpose.msra.mxu0 0.0
        %3233 = vmatprep.subr.mxu0 0.0
        %3234 = vmatpush1.xpose.msra.mxu0 0.0
        %3235 = vmatprep.subr.mxu0 0.0
        %3236 = vmatpush1.xpose.msra.mxu0 0.0
        %3237 = vmatprep.subr.mxu0 0.0
        %3238 = vmatpush1.xpose.msra.mxu0 0.0
        %3239 = vmatprep.subr.mxu0 0.0
        %3240 = vmatpush1.xpose.msra.mxu0 0.0
        %3241 = vmatprep.subr.mxu0 0.0
        %3242 = vmatpush1.xpose.msra.mxu0 0.0
        %3243 = vmatprep.subr.mxu0 0.0
        %3244 = vmatpush1.xpose.msra.mxu0 0.0
        %3245 = vmatprep.subr.mxu0 0.0
        %3246 = vmatpush1.xpose.msra.mxu0 0.0
        %3247 = vmatprep.subr.mxu0 0.0
        %3248 = vmatpush1.xpose.msra.mxu0 0.0
        %3249 = vmatprep.subr.mxu0 0.0
        %3250 = vmatpush1.xpose.msra.mxu0 0.0
        %3251 = vmatprep.subr.mxu0 0.0
        %3252 = vmatpush1.xpose.msra.mxu0 0.0
        %3253 = vmatprep.subr.mxu0 0.0
        %3254 = vmatpush1.xpose.msra.mxu0 0.0
        %3255 = vmatprep.subr.mxu0 0.0
        %3256 = vmatpush1.xpose.msra.mxu0 0.0
        %3257 = vmatprep.subr.mxu0 0.0
        %3258 = vmatpush1.xpose.msra.mxu0 0.0
        %3259 = vmatprep.subr.mxu0 0.0
        %3260 = vmatpush1.xpose.msra.mxu0 0.0
        %3261 = vmatprep.subr.mxu0 0.0
        %3262 = vmatpush1.xpose.msra.mxu0 0.0
        %3263 = vmatprep.subr.mxu0 0.0
        %3264 = vmatpush1.xpose.msra.mxu0 0.0
        %3265 = vmatprep.subr.mxu0 0.0
        %3266 = vmatpush1.xpose.msra.mxu0 0.0
        %3267 = vmatprep.subr.mxu0 0.0
        %3268 = vmatpush1.xpose.msra.mxu0 0.0
        %3269 = vmatprep.subr.mxu0 0.0
        %3270 = vmatpush1.xpose.msra.mxu0 0.0
        %3271 = vmatprep.mubr.f32.mxu0 0.0
        %3272 = vmatmul.mubr.f32.gmra.mrb[0].mxu0 %v3199
        %v3273 = vpop.f32.mrb[0].mxu0
        %v3274 = vadd.f32 0.0, %v3273
        %v3275 = vpop.f32.mrb[0].mxu0
        %3276 = vmatprep.mubr.f32.mxu0 0.0
        %3277 = vmatmul.mubr.f32.gmra.mrb[0].mxu0 %v3201
        %v3278 = vpop.f32.mrb[0].mxu0
        %v3279 = vadd.f32 0.0, %v3278
        %v3280 = vpop.f32.mrb[0].mxu0
        %3281 = vdwg.mxu0
        %v3282 = vmul.f32 %v3183, 0.35355338
        %v3283 = vmul.f32 %v3188, 0.35355338
        %v3284 = vmul.f32 %v3274, 0.35355338
        %v3285 = vmul.f32 %v3279, 0.35355338
        %v3286 = vadd.f32 %v3282, %v1544
        %v3287 = vadd.f32 %v3283, %v1545
        %v3288 = vadd.f32 %v3284, %v1546
        %v3289 = vadd.f32 %v3285, %v1547
        %v3290 = vsel %vm2057, %v3286, -inf
        %3291 = vmax.xlane.f32.xlu0 %v3290
        %v3292 = vpop.xlane.xlu0 %3291
        %v3293 = vsel %vm2061, %v3287, -inf
        %3294 = vmax.xlane.f32.xlu0 %v3293
        %v3295 = vpop.xlane.xlu0 %3294
        %v3296 = vsel %vm2057, %v3288, -inf
        %3297 = vmax.xlane.f32.xlu0 %v3296
        %v3298 = vpop.xlane.xlu0 %3297
        %v3299 = vsel %vm2061, %v3289, -inf
        %3300 = vmax.xlane.f32.xlu0 %v3299
        %v3301 = vpop.xlane.xlu0 %3300
        %v3302 = vsub.f32 %v3286, %v3292
        %v3303 = vsub.f32 %v3287, %v3295
        %v3304 = vsub.f32 %v3288, %v3298
        %v3305 = vsub.f32 %v3289, %v3301
        %v3306 = vmul.f32 %v3302, 1.442695
        %v3307 = vpow.pop %v3306
        %v3308 = vmul.f32 %v3303, 1.442695
        %v3309 = vpow.pop %v3308
        %v3310 = vmul.f32 %v3304, 1.442695
        %v3311 = vpow.pop %v3310
        %v3312 = vmul.f32 %v3305, 1.442695
        %v3313 = vpow.pop %v3312
        %v3314 = vsel %vm2057, %v3307, 0.0
        %3315 = vadd.xlane.f32.xlu0 %v3314
        %v3316 = vpop.xlane.xlu0 %3315
        %v3317 = vsel %vm2061, %v3309, 0.0
        %3318 = vadd.xlane.f32.xlu0 %v3317
        %v3319 = vpop.xlane.xlu0 %3318
        %v3320 = vsel %vm2057, %v3311, 0.0
        %3321 = vadd.xlane.f32.xlu0 %v3320
        %v3322 = vpop.xlane.xlu0 %3321
        %v3323 = vsel %vm2061, %v3313, 0.0
        %3324 = vadd.xlane.f32.xlu0 %v3323
        %v3325 = vpop.xlane.xlu0 %3324
        %v3326 = vrcp.pop %v3316
        %v3327 = vmul.f32 %v3307, %v3326
        %v3328 = vrcp.pop %v3319
        %v3329 = vmul.f32 %v3309, %v3328
        %v3330 = vrcp.pop %v3322
        %v3331 = vmul.f32 %v3311, %v3330
        %v3332 = vrcp.pop %v3325
        %v3333 = vmul.f32 %v3313, %v3332
        %3334 = vrot.lane.b32.xlu0 %v1872, 40
        %v3335 = vpop.permute.xlu0 %3334
        %3336 = vrot.lane.b32.xlu0 %v1858, 40
        %v3337 = vpop.permute.xlu0 %3336
        %v3340 = vsel %vm2057, %v3327, 0
        %v3343 = vsel %vm2057, %v3329, 0
        %v3345 = vsel %vm2114, %v3337, 0
        %3347 = vmatprep.subr.mxu0 0.0
        %3348 = vmatpush1.msra.mxu0 %v3335
        %3349 = vmatprep.subr.mxu0 0.0
        %3350 = vmatpush1.msra.mxu0 %v3345
        %3351 = vmatprep.subr.mxu0 0.0
        %3352 = vmatpush1.msra.mxu0 0.0
        %3353 = vmatprep.subr.mxu0 0.0
        %3354 = vmatpush1.msra.mxu0 0.0
        %3355 = vmatprep.subr.mxu0 0.0
        %3356 = vmatpush1.msra.mxu0 0.0
        %3357 = vmatprep.subr.mxu0 0.0
        %3358 = vmatpush1.msra.mxu0 0.0
        %3359 = vmatprep.subr.mxu0 0.0
        %3360 = vmatpush1.msra.mxu0 0.0
        %3361 = vmatprep.subr.mxu0 0.0
        %3362 = vmatpush1.msra.mxu0 0.0
        %3363 = vmatprep.subr.mxu0 0.0
        %3364 = vmatpush1.msra.mxu0 0.0
        %3365 = vmatprep.subr.mxu0 0.0
        %3366 = vmatpush1.msra.mxu0 0.0
        %3367 = vmatprep.subr.mxu0 0.0
        %3368 = vmatpush1.msra.mxu0 0.0
        %3369 = vmatprep.subr.mxu0 0.0
        %3370 = vmatpush1.msra.mxu0 0.0
        %3371 = vmatprep.subr.mxu0 0.0
        %3372 = vmatpush1.msra.mxu0 0.0
        %3373 = vmatprep.subr.mxu0 0.0
        %3374 = vmatpush1.msra.mxu0 0.0
        %3375 = vmatprep.subr.mxu0 0.0
        %3376 = vmatpush1.msra.mxu0 0.0
        %3377 = vmatprep.subr.mxu0 0.0
        %3378 = vmatpush1.msra.mxu0 0.0
        %3379 = vmatprep.subr.mxu0 0.0
        %3380 = vmatpush1.msra.mxu0 0.0
        %3381 = vmatprep.subr.mxu0 0.0
        %3382 = vmatpush1.msra.mxu0 0.0
        %3383 = vmatprep.subr.mxu0 0.0
        %3384 = vmatpush1.msra.mxu0 0.0
        %3385 = vmatprep.subr.mxu0 0.0
        %3386 = vmatpush1.msra.mxu0 0.0
        %3387 = vmatprep.subr.mxu0 0.0
        %3388 = vmatpush1.msra.mxu0 0.0
        %3389 = vmatprep.subr.mxu0 0.0
        %3390 = vmatpush1.msra.mxu0 0.0
        %3391 = vmatprep.subr.mxu0 0.0
        %3392 = vmatpush1.msra.mxu0 0.0
        %3393 = vmatprep.subr.mxu0 0.0
        %3394 = vmatpush1.msra.mxu0 0.0
        %3395 = vmatprep.subr.mxu0 0.0
        %3396 = vmatpush1.msra.mxu0 0.0
        %3397 = vmatprep.subr.mxu0 0.0
        %3398 = vmatpush1.msra.mxu0 0.0
        %3399 = vmatprep.subr.mxu0 0.0
        %3400 = vmatpush1.msra.mxu0 0.0
        %3401 = vmatprep.subr.mxu0 0.0
        %3402 = vmatpush1.msra.mxu0 0.0
        %3403 = vmatprep.subr.mxu0 0.0
        %3404 = vmatpush1.msra.mxu0 0.0
        %3405 = vmatprep.subr.mxu0 0.0
        %3406 = vmatpush1.msra.mxu0 0.0
        %3407 = vmatprep.subr.mxu0 0.0
        %3408 = vmatpush1.msra.mxu0 0.0
        %3409 = vmatprep.subr.mxu0 0.0
        %3410 = vmatpush1.msra.mxu0 0.0
        %3411 = vmatprep.mubr.f32.mxu0 0.0
        %3412 = vmatmul.mubr.f32.gmra.mrb[0].mxu0 %v3340
        %v3413 = vpop.f32.mrb[0].mxu0
        %v3414 = vadd.f32 0.0, %v3413
        %v3415 = vpop.f32.mrb[0].mxu0
        %3416 = vmatprep.mubr.f32.mxu0 0.0
        %3417 = vmatmul.mubr.f32.gmra.mrb[0].mxu0 %v3343
        %v3418 = vpop.f32.mrb[0].mxu0
        %v3419 = vadd.f32 0.0, %v3418
        %v3420 = vpop.f32.mrb[0].mxu0
        %3421 = vdwg.mxu0
        %3422 = vrot.lane.b32.xlu0 %v1961, 40
        %v3423 = vpop.permute.xlu0 %3422
        %3424 = vrot.lane.b32.xlu0 %v1871, 40
        %v3425 = vpop.permute.xlu0 %3424
        %v3428 = vsel %vm2057, %v3331, 0
        %v3431 = vsel %vm2057, %v3333, 0
        %v3433 = vsel %vm2114, %v3425, 0
        %3435 = vmatprep.subr.mxu0 0.0
        %3436 = vmatpush1.msra.mxu0 %v3423
        %3437 = vmatprep.subr.mxu0 0.0
        %3438 = vmatpush1.msra.mxu0 %v3433
        %3439 = vmatprep.subr.mxu0 0.0
        %3440 = vmatpush1.msra.mxu0 0.0
        %3441 = vmatprep.subr.mxu0 0.0
        %3442 = vmatpush1.msra.mxu0 0.0
        %3443 = vmatprep.subr.mxu0 0.0
        %3444 = vmatpush1.msra.mxu0 0.0
        %3445 = vmatprep.subr.mxu0 0.0
        %3446 = vmatpush1.msra.mxu0 0.0
        %3447 = vmatprep.subr.mxu0 0.0
        %3448 = vmatpush1.msra.mxu0 0.0
        %3449 = vmatprep.subr.mxu0 0.0
        %3450 = vmatpush1.msra.mxu0 0.0
        %3451 = vmatprep.subr.mxu0 0.0
        %3452 = vmatpush1.msra.mxu0 0.0
        %3453 = vmatprep.subr.mxu0 0.0
        %3454 = vmatpush1.msra.mxu0 0.0
        %3455 = vmatprep.subr.mxu0 0.0
        %3456 = vmatpush1.msra.mxu0 0.0
        %3457 = vmatprep.subr.mxu0 0.0
        %3458 = vmatpush1.msra.mxu0 0.0
        %3459 = vmatprep.subr.mxu0 0.0
        %3460 = vmatpush1.msra.mxu0 0.0
        %3461 = vmatprep.subr.mxu0 0.0
        %3462 = vmatpush1.msra.mxu0 0.0
        %3463 = vmatprep.subr.mxu0 0.0
        %3464 = vmatpush1.msra.mxu0 0.0
        %3465 = vmatprep.subr.mxu0 0.0
        %3466 = vmatpush1.msra.mxu0 0.0
        %3467 = vmatprep.subr.mxu0 0.0
        %3468 = vmatpush1.msra.mxu0 0.0
        %3469 = vmatprep.subr.mxu0 0.0
        %3470 = vmatpush1.msra.mxu0 0.0
        %3471 = vmatprep.subr.mxu0 0.0
        %3472 = vmatpush1.msra.mxu0 0.0
        %3473 = vmatprep.subr.mxu0 0.0
        %3474 = vmatpush1.msra.mxu0 0.0
        %3475 = vmatprep.subr.mxu0 0.0
        %3476 = vmatpush1.msra.mxu0 0.0
        %3477 = vmatprep.subr.mxu0 0.0
        %3478 = vmatpush1.msra.mxu0 0.0
        %3479 = vmatprep.subr.mxu0 0.0
        %3480 = vmatpush1.msra.mxu0 0.0
        %3481 = vmatprep.subr.mxu0 0.0
        %3482 = vmatpush1.msra.mxu0 0.0
        %3483 = vmatprep.subr.mxu0 0.0
        %3484 = vmatpush1.msra.mxu0 0.0
        %3485 = vmatprep.subr.mxu0 0.0
        %3486 = vmatpush1.msra.mxu0 0.0
        %3487 = vmatprep.subr.mxu0 0.0
        %3488 = vmatpush1.msra.mxu0 0.0
        %3489 = vmatprep.subr.mxu0 0.0
        %3490 = vmatpush1.msra.mxu0 0.0
        %3491 = vmatprep.subr.mxu0 0.0
        %3492 = vmatpush1.msra.mxu0 0.0
        %3493 = vmatprep.subr.mxu0 0.0
        %3494 = vmatpush1.msra.mxu0 0.0
        %3495 = vmatprep.subr.mxu0 0.0
        %3496 = vmatpush1.msra.mxu0 0.0
        %3497 = vmatprep.subr.mxu0 0.0
        %3498 = vmatpush1.msra.mxu0 0.0
        %3499 = vmatprep.mubr.f32.mxu0 0.0
        %3500 = vmatmul.mubr.f32.gmra.mrb[0].mxu0 %v3428
        %v3501 = vpop.f32.mrb[0].mxu0
        %v3502 = vadd.f32 0.0, %v3501
        %v3503 = vpop.f32.mrb[0].mxu0
        %3504 = vmatprep.mubr.f32.mxu0 0.0
        %3505 = vmatmul.mubr.f32.gmra.mrb[0].mxu0 %v3431
        %v3506 = vpop.f32.mrb[0].mxu0
        %v3507 = vadd.f32 0.0, %v3506
        %v3508 = vpop.f32.mrb[0].mxu0
        %3509 = vdwg.mxu0
        %3514 = vrot.lane.b32.xlu0 %v2594, 8
        %v3515 = vpop.permute.xlu0 %3514
        %3516 = vrot.lane.b32.xlu0 %v2599, 8
        %v3517 = vpop.permute.xlu0 %3516
        %3518 = vrot.lane.b32.xlu0 %v2682, 8
        %v3519 = vpop.permute.xlu0 %3518
        %3520 = vrot.lane.b32.xlu0 %v2687, 8
        %v3521 = vpop.permute.xlu0 %3520
        %3530 = vrot.lane.b32.xlu0 %v3004, 16
        %v3531 = vpop.permute.xlu0 %3530
        %3532 = vrot.lane.b32.xlu0 %v3009, 16
        %v3533 = vpop.permute.xlu0 %3532
        %3534 = vrot.lane.b32.xlu0 %v3092, 16
        %v3535 = vpop.permute.xlu0 %3534
        %3536 = vrot.lane.b32.xlu0 %v3097, 16
        %v3537 = vpop.permute.xlu0 %3536
        %3546 = vrot.lane.b32.xlu0 %v3414, 24
        %v3547 = vpop.permute.xlu0 %3546
        %3548 = vrot.lane.b32.xlu0 %v3419, 24
        %v3549 = vpop.permute.xlu0 %3548
        %3550 = vrot.lane.b32.xlu0 %v3502, 24
        %v3551 = vpop.permute.xlu0 %3550
        %3552 = vrot.lane.b32.xlu0 %v3507, 24
        %v3553 = vpop.permute.xlu0 %3552
        %v3558 = vsel %vm1877, %v2184, %v3515
        %v3559 = vsel %vm1877, %v2189, %v3517
        %v3560 = vsel %vm1877, %v2272, %v3519
        %v3561 = vsel %vm1877, %v2277, %v3521
        %vm3562 = vcmask 130048
        %v3563 = vsel %vm3562, %v3558, %v3531
        %v3564 = vsel %vm3562, %v3559, %v3533
        %v3565 = vsel %vm3562, %v3560, %v3535
        %v3566 = vsel %vm3562, %v3561, %v3537
        %vm3567 = vcmask 195584
        %v3568 = vsel %vm3567, %v3563, %v3547
        %v3569 = vsel %vm3567, %v3564, %v3549
        %v3570 = vsel %vm3567, %v3565, %v3551
        %v3571 = vsel %vm3567, %v3566, %v3553
        %v3576 = vcombine.high %v3568, %v3568
        %v3577 = vcombine.high %v3570, %v3570
        %v3578 = vld [vmem:[%s778] sm:$0xff]
        %v3579 = vld [vmem:[%s778 + $0x8] sm:$0xff]
        %v3580 = vld [vmem:[%s778 + $0x10] sm:$0xff]
        %v3581 = vld [vmem:[%s778 + $0x18] sm:$0xff]
        %v3582 = vcombine.low %v3568, %v3576
        %v3583 = vcombine.low %v3569, %v3570
        %v3584 = vcombine.low %v3577, %v3571
        %v3585 = vsel %vm1568, %v3582, 0
        %v3587 = vsel %vm1568, %v3583, 0
        %v3589 = vsel %vm1568, %v3584, 0
        %3591 = vmatprep.subr.mxu0 0.0
        %3592 = vmatpush1.msra.mxu0 %v3578
        %3593 = vmatprep.subr.mxu0 0.0
        %3594 = vmatpush1.msra.mxu0 %v3579
        %3595 = vmatprep.subr.mxu0 0.0
        %3596 = vmatpush1.msra.mxu0 %v3580
        %3597 = vmatprep.subr.mxu0 0.0
        %3598 = vmatpush1.msra.mxu0 %v3581
        %3599 = vmatprep.subr.mxu0 0.0
        %3600 = vmatpush1.msra.mxu0 0.0
        %3601 = vmatprep.subr.mxu0 0.0
        %3602 = vmatpush1.msra.mxu0 0.0
        %3603 = vmatprep.subr.mxu0 0.0
        %3604 = vmatpush1.msra.mxu0 0.0
        %3605 = vmatprep.subr.mxu0 0.0
        %3606 = vmatpush1.msra.mxu0 0.0
        %3607 = vmatprep.subr.mxu0 0.0
        %3608 = vmatpush1.msra.mxu0 0.0
        %3609 = vmatprep.subr.mxu0 0.0
        %3610 = vmatpush1.msra.mxu0 0.0
        %3611 = vmatprep.subr.mxu0 0.0
        %3612 = vmatpush1.msra.mxu0 0.0
        %3613 = vmatprep.subr.mxu0 0.0
        %3614 = vmatpush1.msra.mxu0 0.0
        %3615 = vmatprep.subr.mxu0 0.0
        %3616 = vmatpush1.msra.mxu0 0.0
        %3617 = vmatprep.subr.mxu0 0.0
        %3618 = vmatpush1.msra.mxu0 0.0
        %3619 = vmatprep.subr.mxu0 0.0
        %3620 = vmatpush1.msra.mxu0 0.0
        %3621 = vmatprep.subr.mxu0 0.0
        %3622 = vmatpush1.msra.mxu0 0.0
        %3623 = vmatprep.subr.mxu0 0.0
        %3624 = vmatpush1.msra.mxu0 0.0
        %3625 = vmatprep.subr.mxu0 0.0
        %3626 = vmatpush1.msra.mxu0 0.0
        %3627 = vmatprep.subr.mxu0 0.0
        %3628 = vmatpush1.msra.mxu0 0.0
        %3629 = vmatprep.subr.mxu0 0.0
        %3630 = vmatpush1.msra.mxu0 0.0
        %3631 = vmatprep.subr.mxu0 0.0
        %3632 = vmatpush1.msra.mxu0 0.0
        %3633 = vmatprep.subr.mxu0 0.0
        %3634 = vmatpush1.msra.mxu0 0.0
        %3635 = vmatprep.subr.mxu0 0.0
        %3636 = vmatpush1.msra.mxu0 0.0
        %3637 = vmatprep.subr.mxu0 0.0
        %3638 = vmatpush1.msra.mxu0 0.0
        %3639 = vmatprep.subr.mxu0 0.0
        %3640 = vmatpush1.msra.mxu0 0.0
        %3641 = vmatprep.subr.mxu0 0.0
        %3642 = vmatpush1.msra.mxu0 0.0
        %3643 = vmatprep.subr.mxu0 0.0
        %3644 = vmatpush1.msra.mxu0 0.0
        %3645 = vmatprep.subr.mxu0 0.0
        %3646 = vmatpush1.msra.mxu0 0.0
        %3647 = vmatprep.subr.mxu0 0.0
        %3648 = vmatpush1.msra.mxu0 0.0
        %3649 = vmatprep.subr.mxu0 0.0
        %3650 = vmatpush1.msra.mxu0 0.0
        %3651 = vmatprep.subr.mxu0 0.0
        %3652 = vmatpush1.msra.mxu0 0.0
        %3653 = vmatprep.subr.mxu0 0.0
        %3654 = vmatpush1.msra.mxu0 0.0
        %3655 = vmatprep.mubr.f32.mxu0 0.0
        %3656 = vmatmul.mubr.f32.gmra.mrb[0].mxu0 %v3585
        %v3657 = vpop.f32.mrb[0].mxu0
        %v3658 = vadd.f32 0.0, %v3657
        %v3659 = vpop.f32.mrb[0].mxu0
        %3660 = vmatprep.mubr.f32.mxu0 0.0
        %3661 = vmatmul.mubr.f32.gmra.mrb[0].mxu0 %v3587
        %v3662 = vpop.f32.mrb[0].mxu0
        %v3663 = vadd.f32 0.0, %v3662
        %v3664 = vpop.f32.mrb[0].mxu0
        %3665 = vmatprep.mubr.f32.mxu0 0.0
        %3666 = vmatmul.mubr.f32.gmra.mrb[0].mxu0 %v3589
        %v3667 = vpop.f32.mrb[0].mxu0
        %v3668 = vadd.f32 0.0, %v3667
        %v3669 = vpop.f32.mrb[0].mxu0
        %3670 = vdwg.mxu0
        %v3674 = vcombine.high %v3658, %v3658
        %v3675 = vcombine.high %v3663, %v3663
        %v3676 = vcombine.high %v3668, %v3668
        %v3680 = vadd.f32 %v1548, %v3658
        %v3681 = vadd.f32 %v1556, %v3674
        %v3682 = vadd.f32 %v1549, %v3663
        %v3683 = vadd.f32 %v1550, %v3675
        %v3684 = vadd.f32 %v1557, %v3668
        %v3685 = vadd.f32 %v1551, %v3676
        %v3686 = vld [vmem:[%s907] sm:$0x1]
        %v3688 = vlaneseq
        %v3689 = vshrl.u32 %v3688, 7
        %v3690 = vsub.s32 0, %v3689
        %v3691 = vrot.slane %v3686, %v3690
        %v3693 = vcombine.high %v3691, %v3691
        %v3695 = vadd.f32 %v3680, %v3691
        %v3696 = vadd.f32 %v3681, %v3693
        %v3697 = vadd.f32 %v3682, %v3691
        %v3698 = vadd.f32 %v3683, %v3693
        %v3699 = vadd.f32 %v3684, %v3691
        %v3700 = vadd.f32 %v3685, %v3693
        %v3701 = vld [vmem:[%s910] sm:$0x1]
        %v3702 = vld [vmem:[%s913] sm:$0x1]
        %v3709 = vcombine.low %v3695, %v3696
        %v3710 = vcombine.low %v3697, %v3698
        %v3711 = vcombine.low %v3699, %v3700
        %v3715 = vsel %vm1568, %v3709, 0.0
        %3716 = vadd.xlane.f32.xlu0 %v3715
        %v3717 = vpop.xlane.xlu0 %3716
        %v3718 = vsel %vm1568, %v3710, 0.0
        %3719 = vadd.xlane.f32.xlu0 %v3718
        %v3720 = vpop.xlane.xlu0 %3719
        %v3721 = vsel %vm1568, %v3711, 0.0
        %3722 = vadd.xlane.f32.xlu0 %v3721
        %v3723 = vpop.xlane.xlu0 %3722
        %v3724 = vmul.f32 %v3717, %v1578
        %v3725 = vmul.f32 %v3720, %v1578
        %v3726 = vmul.f32 %v3723, %v1578
        %v3731 = vunpack.c.l.s4 839922192
        %v3732 = vunpack.c.0.s8 %v3731
        %v3733 = vlaneseq
        %v3734 = vshrl.u32 %v3733, 7
        %v3735 = vsub.s32 %v3732, %v3734
        %v3736 = vrot.slane %v3724, %v3735
        %v3738 = vunpack.c.l.s4 1985246804
        %v3739 = vunpack.c.0.s8 %v3738
        %v3740 = vlaneseq
        %v3741 = vshrl.u32 %v3740, 7
        %v3742 = vsub.s32 %v3739, %v3741
        %v3743 = vrot.slane %v3724, %v3742
        %v3745 = vunpack.c.l.s4 839922192
        %v3746 = vunpack.c.0.s8 %v3745
        %v3747 = vlaneseq
        %v3748 = vshrl.u32 %v3747, 7
        %v3749 = vsub.s32 %v3746, %v3748
        %v3750 = vrot.slane %v3725, %v3749
        %v3752 = vunpack.c.l.s4 1985246804
        %v3753 = vunpack.c.0.s8 %v3752
        %v3754 = vlaneseq
        %v3755 = vshrl.u32 %v3754, 7
        %v3756 = vsub.s32 %v3753, %v3755
        %v3757 = vrot.slane %v3725, %v3756
        %v3759 = vunpack.c.l.s4 839922192
        %v3760 = vunpack.c.0.s8 %v3759
        %v3761 = vlaneseq
        %v3762 = vshrl.u32 %v3761, 7
        %v3763 = vsub.s32 %v3760, %v3762
        %v3764 = vrot.slane %v3726, %v3763
        %v3766 = vunpack.c.l.s4 1985246804
        %v3767 = vunpack.c.0.s8 %v3766
        %v3768 = vlaneseq
        %v3769 = vshrl.u32 %v3768, 7
        %v3770 = vsub.s32 %v3767, %v3769
        %v3771 = vrot.slane %v3726, %v3770
        %v3778 = vsub.f32 %v3695, %v3736
        %v3779 = vsub.f32 %v3696, %v3743
        %v3780 = vsub.f32 %v3697, %v3750
        %v3781 = vsub.f32 %v3698, %v3757
        %v3782 = vsub.f32 %v3699, %v3764
        %v3783 = vsub.f32 %v3700, %v3771
        %v3784 = vmul.f32 %v3778, %v3778
        %v3785 = vmul.f32 %v3779, %v3779
        %v3786 = vmul.f32 %v3780, %v3780
        %v3787 = vmul.f32 %v3781, %v3781
        %v3788 = vmul.f32 %v3782, %v3782
        %v3789 = vmul.f32 %v3783, %v3783
        %v3796 = vcombine.low %v3784, %v3785
        %v3797 = vcombine.low %v3786, %v3787
        %v3798 = vcombine.low %v3788, %v3789
        %v3802 = vsel %vm1568, %v3796, 0.0
        %3803 = vadd.xlane.f32.xlu0 %v3802
        %v3804 = vpop.xlane.xlu0 %3803
        %v3805 = vsel %vm1568, %v3797, 0.0
        %3806 = vadd.xlane.f32.xlu0 %v3805
        %v3807 = vpop.xlane.xlu0 %3806
        %v3808 = vsel %vm1568, %v3798, 0.0
        %3809 = vadd.xlane.f32.xlu0 %v3808
        %v3810 = vpop.xlane.xlu0 %3809
        %v3811 = vmul.f32 %v3804, %v1578
        %v3812 = vmul.f32 %v3807, %v1578
        %v3813 = vmul.f32 %v3810, %v1578
        %v3814 = vadd.f32 %v3811, 1e-05
        %v3815 = vadd.f32 %v3812, 1e-05
        %v3816 = vadd.f32 %v3813, 1e-05
        %v3817 = vrsqrt.pop %v3814
        %v3818 = vrsqrt.pop %v3815
        %v3819 = vrsqrt.pop %v3816
        %v3824 = vunpack.c.l.s4 839922192
        %v3825 = vunpack.c.0.s8 %v3824
        %v3826 = vlaneseq
        %v3827 = vshrl.u32 %v3826, 7
        %v3828 = vsub.s32 %v3825, %v3827
        %v3829 = vrot.slane %v3817, %v3828
        %v3831 = vunpack.c.l.s4 1985246804
        %v3832 = vunpack.c.0.s8 %v3831
        %v3833 = vlaneseq
        %v3834 = vshrl.u32 %v3833, 7
        %v3835 = vsub.s32 %v3832, %v3834
        %v3836 = vrot.slane %v3817, %v3835
        %v3838 = vunpack.c.l.s4 839922192
        %v3839 = vunpack.c.0.s8 %v3838
        %v3840 = vlaneseq
        %v3841 = vshrl.u32 %v3840, 7
        %v3842 = vsub.s32 %v3839, %v3841
        %v3843 = vrot.slane %v3818, %v3842
        %v3845 = vunpack.c.l.s4 1985246804
        %v3846 = vunpack.c.0.s8 %v3845
        %v3847 = vlaneseq
        %v3848 = vshrl.u32 %v3847, 7
        %v3849 = vsub.s32 %v3846, %v3848
        %v3850 = vrot.slane %v3818, %v3849
        %v3852 = vunpack.c.l.s4 839922192
        %v3853 = vunpack.c.0.s8 %v3852
        %v3854 = vlaneseq
        %v3855 = vshrl.u32 %v3854, 7
        %v3856 = vsub.s32 %v3853, %v3855
        %v3857 = vrot.slane %v3819, %v3856
        %v3859 = vunpack.c.l.s4 1985246804
        %v3860 = vunpack.c.0.s8 %v3859
        %v3861 = vlaneseq
        %v3862 = vshrl.u32 %v3861, 7
        %v3863 = vsub.s32 %v3860, %v3862
        %v3864 = vrot.slane %v3819, %v3863
        %v3871 = vmul.f32 %v3778, %v3829
        %v3872 = vmul.f32 %v3779, %v3836
        %v3873 = vmul.f32 %v3780, %v3843
        %v3874 = vmul.f32 %v3781, %v3850
        %v3875 = vmul.f32 %v3782, %v3857
        %v3876 = vmul.f32 %v3783, %v3864
        %v3878 = vlaneseq
        %v3879 = vshrl.u32 %v3878, 7
        %v3880 = vsub.s32 0, %v3879
        %v3881 = vrot.slane %v3701, %v3880
        %v3883 = vcombine.high %v3881, %v3881
        %v3885 = vmul.f32 %v3871, %v3881
        %v3886 = vmul.f32 %v3872, %v3883
        %v3887 = vmul.f32 %v3873, %v3881
        %v3888 = vmul.f32 %v3874, %v3883
        %v3889 = vmul.f32 %v3875, %v3881
        %v3890 = vmul.f32 %v3876, %v3883
        %v3892 = vlaneseq
        %v3893 = vshrl.u32 %v3892, 7
        %v3894 = vsub.s32 0, %v3893
        %v3895 = vrot.slane %v3702, %v3894
        %v3897 = vcombine.high %v3895, %v3895
        %v3899 = vadd.f32 %v3885, %v3895
        %v3900 = vadd.f32 %v3886, %v3897
        %v3901 = vadd.f32 %v3887, %v3895
        %v3902 = vadd.f32 %v3888, %v3897
        %v3903 = vadd.f32 %v3889, %v3895
        %v3904 = vadd.f32 %v3890, %v3897
        %v3905 = vld [vmem:[%s787] sm:$0xff]
        %v3906 = vld [vmem:[%s787 + $0x8] sm:$0xff]
        %v3907 = vld [vmem:[%s787 + $0x10] sm:$0xff]
        %v3908 = vld [vmem:[%s787 + $0x18] sm:$0xff]
        %v3909 = vld [vmem:[%s916] sm:$0x1]
        %v3911 = vlaneseq
        %v3912 = vshrl.u32 %v3911, 7
        %v3913 = vsub.s32 0, %v3912
        %v3914 = vrot.slane %v3909, %v3913
        %v3922 = vcombine.low %v3899, %v3900
        %v3923 = vcombine.low %v3901, %v3902
        %v3924 = vcombine.low %v3903, %v3904
        %v3925 = vsel %vm1568, %v3922, 0
        %v3927 = vsel %vm1568, %v3923, 0
        %v3929 = vsel %vm1568, %v3924, 0
        %3931 = vmatprep.subr.mxu0 0.0
        %3932 = vmatpush1.msra.mxu0 %v3905
        %3933 = vmatprep.subr.mxu0 0.0
        %3934 = vmatpush1.msra.mxu0 %v3906
        %3935 = vmatprep.subr.mxu0 0.0
        %3936 = vmatpush1.msra.mxu0 %v3907
        %3937 = vmatprep.subr.mxu0 0.0
        %3938 = vmatpush1.msra.mxu0 %v3908
        %3939 = vmatprep.subr.mxu0 0.0
        %3940 = vmatpush1.msra.mxu0 0.0
        %3941 = vmatprep.subr.mxu0 0.0
        %3942 = vmatpush1.msra.mxu0 0.0
        %3943 = vmatprep.subr.mxu0 0.0
        %3944 = vmatpush1.msra.mxu0 0.0
        %3945 = vmatprep.subr.mxu0 0.0
        %3946 = vmatpush1.msra.mxu0 0.0
        %3947 = vmatprep.subr.mxu0 0.0
        %3948 = vmatpush1.msra.mxu0 0.0
        %3949 = vmatprep.subr.mxu0 0.0
        %3950 = vmatpush1.msra.mxu0 0.0
        %3951 = vmatprep.subr.mxu0 0.0
        %3952 = vmatpush1.msra.mxu0 0.0
        %3953 = vmatprep.subr.mxu0 0.0
        %3954 = vmatpush1.msra.mxu0 0.0
        %3955 = vmatprep.subr.mxu0 0.0
        %3956 = vmatpush1.msra.mxu0 0.0
        %3957 = vmatprep.subr.mxu0 0.0
        %3958 = vmatpush1.msra.mxu0 0.0
        %3959 = vmatprep.subr.mxu0 0.0
        %3960 = vmatpush1.msra.mxu0 0.0
        %3961 = vmatprep.subr.mxu0 0.0
        %3962 = vmatpush1.msra.mxu0 0.0
        %3963 = vmatprep.subr.mxu0 0.0
        %3964 = vmatpush1.msra.mxu0 0.0
        %3965 = vmatprep.subr.mxu0 0.0
        %3966 = vmatpush1.msra.mxu0 0.0
        %3967 = vmatprep.subr.mxu0 0.0
        %3968 = vmatpush1.msra.mxu0 0.0
        %3969 = vmatprep.subr.mxu0 0.0
        %3970 = vmatpush1.msra.mxu0 0.0
        %3971 = vmatprep.subr.mxu0 0.0
        %3972 = vmatpush1.msra.mxu0 0.0
        %3973 = vmatprep.subr.mxu0 0.0
        %3974 = vmatpush1.msra.mxu0 0.0
        %3975 = vmatprep.subr.mxu0 0.0
        %3976 = vmatpush1.msra.mxu0 0.0
        %3977 = vmatprep.subr.mxu0 0.0
        %3978 = vmatpush1.msra.mxu0 0.0
        %3979 = vmatprep.subr.mxu0 0.0
        %3980 = vmatpush1.msra.mxu0 0.0
        %3981 = vmatprep.subr.mxu0 0.0
        %3982 = vmatpush1.msra.mxu0 0.0
        %3983 = vmatprep.subr.mxu0 0.0
        %3984 = vmatpush1.msra.mxu0 0.0
        %3985 = vmatprep.subr.mxu0 0.0
        %3986 = vmatpush1.msra.mxu0 0.0
        %3987 = vmatprep.subr.mxu0 0.0
        %3988 = vmatpush1.msra.mxu0 0.0
        %3989 = vmatprep.subr.mxu0 0.0
        %3990 = vmatpush1.msra.mxu0 0.0
        %3991 = vmatprep.subr.mxu0 0.0
        %3992 = vmatpush1.msra.mxu0 0.0
        %3993 = vmatprep.subr.mxu0 0.0
        %3994 = vmatpush1.msra.mxu0 0.0
        %3995 = vmatprep.mubr.f32.mxu0 0.0
        %3996 = vmatmul.mubr.f32.gmra.mrb[0].mxu0 %v3925
        %v3997 = vpop.f32.mrb[0].mxu0
        %v3998 = vadd.f32 %v3914, %v3997
        %v3999 = vpop.f32.mrb[0].mxu0
        %4000 = vmatprep.mubr.f32.mxu0 0.0
        %4001 = vmatmul.mubr.f32.gmra.mrb[0].mxu0 %v3927
        %v4002 = vpop.f32.mrb[0].mxu0
        %v4003 = vadd.f32 %v3914, %v4002
        %v4004 = vpop.f32.mrb[0].mxu0
        %4005 = vmatprep.mubr.f32.mxu0 0.0
        %4006 = vmatmul.mubr.f32.gmra.mrb[0].mxu0 %v3929
        %v4007 = vpop.f32.mrb[0].mxu0
        %v4008 = vadd.f32 %v3914, %v4007
        %v4009 = vpop.f32.mrb[0].mxu0
        %4010 = vdwg.mxu0
        %v4011 = vmul.f32 %v3998, %v3998
        %v4012 = vmul.f32 %v4003, %v4003
        %v4013 = vmul.f32 %v4008, %v4008
        %v4014 = vmul.f32 %v3998, %v4011
        %v4015 = vmul.f32 %v4003, %v4012
        %v4016 = vmul.f32 %v4008, %v4013
        %v4017 = vmul.f32 %v4014, 0.044715
        %v4018 = vmul.f32 %v4015, 0.044715
        %v4019 = vmul.f32 %v4016, 0.044715
        %v4020 = vadd.f32 %v3998, %v4017
        %v4021 = vadd.f32 %v4003, %v4018
        %v4022 = vadd.f32 %v4008, %v4019
        %v4023 = vmul.f32 %v4020, 0.7978846
        %v4024 = vmul.f32 %v4021, 0.7978846
        %v4025 = vmul.f32 %v4022, 0.7978846
        %v4026 = vtanh.pop %v4023
        %v4027 = vtanh.pop %v4024
        %v4028 = vtanh.pop %v4025
        %v4029 = vadd.f32 %v4026, 1.0
        %v4030 = vadd.f32 %v4027, 1.0
        %v4031 = vadd.f32 %v4028, 1.0
        %v4032 = vmul.f32 %v4029, 0.5
        %v4033 = vmul.f32 %v4030, 0.5
        %v4034 = vmul.f32 %v4031, 0.5
        %v4035 = vmul.f32 %v3998, %v4032
        %v4036 = vmul.f32 %v4003, %v4033
        %v4037 = vmul.f32 %v4008, %v4034
        %v4038 = vld [vmem:[%s796] sm:$0xff]
        %v4039 = vld [vmem:[%s796 + $0x8] sm:$0xff]
        %v4040 = vld [vmem:[%s796 + $0x10] sm:$0xff]
        %v4041 = vld [vmem:[%s796 + $0x18] sm:$0xff]
        %v4042 = vld [vmem:[%s796 + $0x20] sm:$0xff]
        %v4043 = vld [vmem:[%s796 + $0x28] sm:$0xff]
        %v4044 = vld [vmem:[%s796 + $0x30] sm:$0xff]
        %v4045 = vld [vmem:[%s796 + $0x38] sm:$0xff]
        %v4046 = vld [vmem:[%s796 + $0x40] sm:$0xff]
        %v4047 = vld [vmem:[%s796 + $0x48] sm:$0xff]
        %v4048 = vld [vmem:[%s796 + $0x50] sm:$0xff]
        %v4049 = vld [vmem:[%s796 + $0x58] sm:$0xff]
        %v4050 = vld [vmem:[%s796 + $0x60] sm:$0xff]
        %v4051 = vld [vmem:[%s796 + $0x68] sm:$0xff]
        %v4052 = vld [vmem:[%s796 + $0x70] sm:$0xff]
        %v4053 = vld [vmem:[%s796 + $0x78] sm:$0xff]
        %4054 = vmatprep.subr.mxu0 0.0
        %4055 = vmatpush1.msra.mxu0 %v4038
        %4056 = vmatprep.subr.mxu0 0.0
        %4057 = vmatpush1.msra.mxu0 %v4039
        %4058 = vmatprep.subr.mxu0 0.0
        %4059 = vmatpush1.msra.mxu0 %v4040
        %4060 = vmatprep.subr.mxu0 0.0
        %4061 = vmatpush1.msra.mxu0 %v4041
        %4062 = vmatprep.subr.mxu0 0.0
        %4063 = vmatpush1.msra.mxu0 %v4042
        %4064 = vmatprep.subr.mxu0 0.0
        %4065 = vmatpush1.msra.mxu0 %v4043
        %4066 = vmatprep.subr.mxu0 0.0
        %4067 = vmatpush1.msra.mxu0 %v4044
        %4068 = vmatprep.subr.mxu0 0.0
        %4069 = vmatpush1.msra.mxu0 %v4045
        %4070 = vmatprep.subr.mxu0 0.0
        %4071 = vmatpush1.msra.mxu0 %v4046
        %4072 = vmatprep.subr.mxu0 0.0
        %4073 = vmatpush1.msra.mxu0 %v4047
        %4074 = vmatprep.subr.mxu0 0.0
        %4075 = vmatpush1.msra.mxu0 %v4048
        %4076 = vmatprep.subr.mxu0 0.0
        %4077 = vmatpush1.msra.mxu0 %v4049
        %4078 = vmatprep.subr.mxu0 0.0
        %4079 = vmatpush1.msra.mxu0 %v4050
        %4080 = vmatprep.subr.mxu0 0.0
        %4081 = vmatpush1.msra.mxu0 %v4051
        %4082 = vmatprep.subr.mxu0 0.0
        %4083 = vmatpush1.msra.mxu0 %v4052
        %4084 = vmatprep.subr.mxu0 0.0
        %4085 = vmatpush1.msra.mxu0 %v4053
        %4086 = vmatprep.subr.mxu0 0.0
        %4087 = vmatpush1.msra.mxu0 0.0
        %4088 = vmatprep.subr.mxu0 0.0
        %4089 = vmatpush1.msra.mxu0 0.0
        %4090 = vmatprep.subr.mxu0 0.0
        %4091 = vmatpush1.msra.mxu0 0.0
        %4092 = vmatprep.subr.mxu0 0.0
        %4093 = vmatpush1.msra.mxu0 0.0
        %4094 = vmatprep.subr.mxu0 0.0
        %4095 = vmatpush1.msra.mxu0 0.0
        %4096 = vmatprep.subr.mxu0 0.0
        %4097 = vmatpush1.msra.mxu0 0.0
        %4098 = vmatprep.subr.mxu0 0.0
        %4099 = vmatpush1.msra.mxu0 0.0
        %4100 = vmatprep.subr.mxu0 0.0
        %4101 = vmatpush1.msra.mxu0 0.0
        %4102 = vmatprep.subr.mxu0 0.0
        %4103 = vmatpush1.msra.mxu0 0.0
        %4104 = vmatprep.subr.mxu0 0.0
        %4105 = vmatpush1.msra.mxu0 0.0
        %4106 = vmatprep.subr.mxu0 0.0
        %4107 = vmatpush1.msra.mxu0 0.0
        %4108 = vmatprep.subr.mxu0 0.0
        %4109 = vmatpush1.msra.mxu0 0.0
        %4110 = vmatprep.subr.mxu0 0.0
        %4111 = vmatpush1.msra.mxu0 0.0
        %4112 = vmatprep.subr.mxu0 0.0
        %4113 = vmatpush1.msra.mxu0 0.0
        %4114 = vmatprep.subr.mxu0 0.0
        %4115 = vmatpush1.msra.mxu0 0.0
        %4116 = vmatprep.subr.mxu0 0.0
        %4117 = vmatpush1.msra.mxu0 0.0
        %4118 = vmatprep.mubr.f32.mxu0 0.0
        %4119 = vmatmul.mubr.f32.gmra.mrb[0].mxu0 %v4035
        %v4120 = vpop.f32.mrb[0].mxu0
        %v4121 = vadd.f32 0.0, %v4120
        %v4122 = vpop.f32.mrb[0].mxu0
        %4123 = vmatprep.mubr.f32.mxu0 0.0
        %4124 = vmatmul.mubr.f32.gmra.mrb[0].mxu0 %v4036
        %v4125 = vpop.f32.mrb[0].mxu0
        %v4126 = vadd.f32 0.0, %v4125
        %v4127 = vpop.f32.mrb[0].mxu0
        %4128 = vmatprep.mubr.f32.mxu0 0.0
        %4129 = vmatmul.mubr.f32.gmra.mrb[0].mxu0 %v4037
        %v4130 = vpop.f32.mrb[0].mxu0
        %v4131 = vadd.f32 0.0, %v4130
        %v4132 = vpop.f32.mrb[0].mxu0
        %4133 = vdwg.mxu0
        %v4137 = vcombine.high %v4121, %v4121
        %v4138 = vcombine.high %v4126, %v4126
        %v4139 = vcombine.high %v4131, %v4131
        %v4143 = vadd.f32 %v3695, %v4121
        %v4144 = vadd.f32 %v3696, %v4137
        %v4145 = vadd.f32 %v3697, %v4126
        %v4146 = vadd.f32 %v3698, %v4138
        %v4147 = vadd.f32 %v3699, %v4131
        %v4148 = vadd.f32 %v3700, %v4139
        %v4149 = vld [vmem:[%s919] sm:$0x1]
        %v4151 = vlaneseq
        %v4152 = vshrl.u32 %v4151, 7
        %v4153 = vsub.s32 0, %v4152
        %v4154 = vrot.slane %v4149, %v4153
        %v4156 = vcombine.high %v4154, %v4154
        %v4158 = vadd.f32 %v4143, %v4154
        %v4159 = vadd.f32 %v4144, %v4156
        %v4160 = vadd.f32 %v4145, %v4154
        %v4161 = vadd.f32 %v4146, %v4156
        %v4162 = vadd.f32 %v4147, %v4154
        %v4163 = vadd.f32 %v4148, %v4156
        %v4170 = vcombine.low %v4158, %v4159
        %v4171 = vcombine.low %v4161, %v4162
        %4174 = vst.msk [vmem:[#allocation2] sm:$0xff] %vm1568, %v4170
        %vm4175 = vcmask 257024
        %4176 = vst.msk [vmem:[#allocation2 + $0x8] sm:$0xf] %vm4175, %v4160
        %4177 = vst.msk [vmem:[#allocation2 + $0x10] sm:$0xff] %vm1568, %v4171
        %4178 = vst.msk [vmem:[#allocation2 + $0x18] sm:$0xf] %vm4175, %v4163
        %p4179 = scmp.eq.s32.totalorder %s35, 1
        // Predicated region
        $region133: #{encode_forward.1} parent=107 // pred_check
          %p4180 = pneg %p4179
        $region134: #{encode_forward.1} parent=107 // pred_check_branch
          %4182 = sbr.rel (%p4180) target = $region136
        $region135: #{encode_forward.1} parent=107 // pred_region
          %v4183 = vld [vmem:[%s19] sm:$0x1]
          %v4184 = vld [vmem:[%s20] sm:$0x1]
          %v4185 = vcombine.low %v4160, %v4161
          %v4186 = vcombine.low %v4162, %v4163
          %v4189 = vsel %vm1568, %v4170, 0.0
          %4190 = vadd.xlane.f32.xlu0 %v4189
          %v4191 = vpop.xlane.xlu0 %4190
          %v4192 = vsel %vm1568, %v4185, 0.0
          %4193 = vadd.xlane.f32.xlu0 %v4192
          %v4194 = vpop.xlane.xlu0 %4193
          %v4195 = vsel %vm1568, %v4186, 0.0
          %4196 = vadd.xlane.f32.xlu0 %v4195
          %v4197 = vpop.xlane.xlu0 %4196
          %v4198 = vmul.f32 %v4191, %v1578
          %v4199 = vmul.f32 %v4194, %v1578
          %v4200 = vmul.f32 %v4197, %v1578
          %v4205 = vunpack.c.l.s4 839922192
          %v4206 = vunpack.c.0.s8 %v4205
          %v4207 = vlaneseq
          %v4208 = vshrl.u32 %v4207, 7
          %v4209 = vsub.s32 %v4206, %v4208
          %v4210 = vrot.slane %v4198, %v4209
          %v4212 = vunpack.c.l.s4 1985246804
          %v4213 = vunpack.c.0.s8 %v4212
          %v4214 = vlaneseq
          %v4215 = vshrl.u32 %v4214, 7
          %v4216 = vsub.s32 %v4213, %v4215
          %v4217 = vrot.slane %v4198, %v4216
          %v4219 = vunpack.c.l.s4 839922192
          %v4220 = vunpack.c.0.s8 %v4219
          %v4221 = vlaneseq
          %v4222 = vshrl.u32 %v4221, 7
          %v4223 = vsub.s32 %v4220, %v4222
          %v4224 = vrot.slane %v4199, %v4223
          %v4226 = vunpack.c.l.s4 1985246804
          %v4227 = vunpack.c.0.s8 %v4226
          %v4228 = vlaneseq
          %v4229 = vshrl.u32 %v4228, 7
          %v4230 = vsub.s32 %v4227, %v4229
          %v4231 = vrot.slane %v4199, %v4230
          %v4233 = vunpack.c.l.s4 839922192
          %v4234 = vunpack.c.0.s8 %v4233
          %v4235 = vlaneseq
          %v4236 = vshrl.u32 %v4235, 7
          %v4237 = vsub.s32 %v4234, %v4236
          %v4238 = vrot.slane %v4200, %v4237
          %v4240 = vunpack.c.l.s4 1985246804
          %v4241 = vunpack.c.0.s8 %v4240
          %v4242 = vlaneseq
          %v4243 = vshrl.u32 %v4242, 7
          %v4244 = vsub.s32 %v4241, %v4243
          %v4245 = vrot.slane %v4200, %v4244
          %v4252 = vsub.f32 %v4158, %v4210
          %v4253 = vsub.f32 %v4159, %v4217
          %v4254 = vsub.f32 %v4160, %v4224
          %v4255 = vsub.f32 %v4161, %v4231
          %v4256 = vsub.f32 %v4162, %v4238
          %v4257 = vsub.f32 %v4163, %v4245
          %v4258 = vmul.f32 %v4252, %v4252
          %v4259 = vmul.f32 %v4253, %v4253
          %v4260 = vmul.f32 %v4254, %v4254
          %v4261 = vmul.f32 %v4255, %v4255
          %v4262 = vmul.f32 %v4256, %v4256
          %v4263 = vmul.f32 %v4257, %v4257
          %v4270 = vcombine.low %v4258, %v4259
          %v4271 = vcombine.low %v4260, %v4261
          %v4272 = vcombine.low %v4262, %v4263
          %v4276 = vsel %vm1568, %v4270, 0.0
          %4277 = vadd.xlane.f32.xlu0 %v4276
          %v4278 = vpop.xlane.xlu0 %4277
          %v4279 = vsel %vm1568, %v4271, 0.0
          %4280 = vadd.xlane.f32.xlu0 %v4279
          %v4281 = vpop.xlane.xlu0 %4280
          %v4282 = vsel %vm1568, %v4272, 0.0
          %4283 = vadd.xlane.f32.xlu0 %v4282
          %v4284 = vpop.xlane.xlu0 %4283
          %v4285 = vmul.f32 %v4278, %v1578
          %v4286 = vmul.f32 %v4281, %v1578
          %v4287 = vmul.f32 %v4284, %v1578
          %v4288 = vadd.f32 %v4285, 1e-05
          %v4289 = vadd.f32 %v4286, 1e-05
          %v4290 = vadd.f32 %v4287, 1e-05
          %v4291 = vrsqrt.pop %v4288
          %v4292 = vrsqrt.pop %v4289
          %v4293 = vrsqrt.pop %v4290
          %v4298 = vunpack.c.l.s4 839922192
          %v4299 = vunpack.c.0.s8 %v4298
          %v4300 = vlaneseq
          %v4301 = vshrl.u32 %v4300, 7
          %v4302 = vsub.s32 %v4299, %v4301
          %v4303 = vrot.slane %v4291, %v4302
          %v4305 = vunpack.c.l.s4 1985246804
          %v4306 = vunpack.c.0.s8 %v4305
          %v4307 = vlaneseq
          %v4308 = vshrl.u32 %v4307, 7
          %v4309 = vsub.s32 %v4306, %v4308
          %v4310 = vrot.slane %v4291, %v4309
          %v4312 = vunpack.c.l.s4 839922192
          %v4313 = vunpack.c.0.s8 %v4312
          %v4314 = vlaneseq
          %v4315 = vshrl.u32 %v4314, 7
          %v4316 = vsub.s32 %v4313, %v4315
          %v4317 = vrot.slane %v4292, %v4316
          %v4319 = vunpack.c.l.s4 1985246804
          %v4320 = vunpack.c.0.s8 %v4319
          %v4321 = vlaneseq
          %v4322 = vshrl.u32 %v4321, 7
          %v4323 = vsub.s32 %v4320, %v4322
          %v4324 = vrot.slane %v4292, %v4323
          %v4326 = vunpack.c.l.s4 839922192
          %v4327 = vunpack.c.0.s8 %v4326
          %v4328 = vlaneseq
          %v4329 = vshrl.u32 %v4328, 7
          %v4330 = vsub.s32 %v4327, %v4329
          %v4331 = vrot.slane %v4293, %v4330
          %v4333 = vunpack.c.l.s4 1985246804
          %v4334 = vunpack.c.0.s8 %v4333
          %v4335 = vlaneseq
          %v4336 = vshrl.u32 %v4335, 7
          %v4337 = vsub.s32 %v4334, %v4336
          %v4338 = vrot.slane %v4293, %v4337
          %v4345 = vmul.f32 %v4252, %v4303
          %v4346 = vmul.f32 %v4253, %v4310
          %v4347 = vmul.f32 %v4254, %v4317
          %v4348 = vmul.f32 %v4255, %v4324
          %v4349 = vmul.f32 %v4256, %v4331
          %v4350 = vmul.f32 %v4257, %v4338
          %v4352 = vlaneseq
          %v4353 = vshrl.u32 %v4352, 7
          %v4354 = vsub.s32 0, %v4353
          %v4355 = vrot.slane %v4183, %v4354
          %v4357 = vcombine.high %v4355, %v4355
          %v4359 = vmul.f32 %v4345, %v4355
          %v4360 = vmul.f32 %v4346, %v4357
          %v4361 = vmul.f32 %v4347, %v4355
          %v4362 = vmul.f32 %v4348, %v4357
          %v4363 = vmul.f32 %v4349, %v4355
          %v4364 = vmul.f32 %v4350, %v4357
          %v4366 = vlaneseq
          %v4367 = vshrl.u32 %v4366, 7
          %v4368 = vsub.s32 0, %v4367
          %v4369 = vrot.slane %v4184, %v4368
          %v4371 = vcombine.high %v4369, %v4369
          %v4373 = vadd.f32 %v4359, %v4369
          %v4374 = vadd.f32 %v4360, %v4371
          %v4375 = vadd.f32 %v4361, %v4369
          %v4376 = vadd.f32 %v4362, %v4371
          %v4377 = vadd.f32 %v4363, %v4369
          %v4378 = vadd.f32 %v4364, %v4371
          %v4379 = vld [vmem:[%s21] sm:$0xff]
          %v4380 = vld [vmem:[%s21 + $0x8] sm:$0xff]
          %v4381 = vld [vmem:[%s21 + $0x10] sm:$0xff]
          %v4382 = vld [vmem:[%s21 + $0x18] sm:$0xff]
          %v4389 = vcombine.low %v4373, %v4374
          %v4390 = vcombine.low %v4375, %v4376
          %v4391 = vcombine.low %v4377, %v4378
          %v4392 = vsel %vm1568, %v4389, 0
          %v4394 = vsel %vm1568, %v4390, 0
          %v4396 = vsel %vm1568, %v4391, 0
          %4398 = vmatprep.subr.mxu0 0.0
          %4399 = vmatpush1.msra.mxu0 %v4379
          %4400 = vmatprep.subr.mxu0 0.0
          %4401 = vmatpush1.msra.mxu0 %v4380
          %4402 = vmatprep.subr.mxu0 0.0
          %4403 = vmatpush1.msra.mxu0 %v4381
          %4404 = vmatprep.subr.mxu0 0.0
          %4405 = vmatpush1.msra.mxu0 %v4382
          %4406 = vmatprep.subr.mxu0 0.0
          %4407 = vmatpush1.msra.mxu0 0.0
          %4408 = vmatprep.subr.mxu0 0.0
          %4409 = vmatpush1.msra.mxu0 0.0
          %4410 = vmatprep.subr.mxu0 0.0
          %4411 = vmatpush1.msra.mxu0 0.0
          %4412 = vmatprep.subr.mxu0 0.0
          %4413 = vmatpush1.msra.mxu0 0.0
          %4414 = vmatprep.subr.mxu0 0.0
          %4415 = vmatpush1.msra.mxu0 0.0
          %4416 = vmatprep.subr.mxu0 0.0
          %4417 = vmatpush1.msra.mxu0 0.0
          %4418 = vmatprep.subr.mxu0 0.0
          %4419 = vmatpush1.msra.mxu0 0.0
          %4420 = vmatprep.subr.mxu0 0.0
          %4421 = vmatpush1.msra.mxu0 0.0
          %4422 = vmatprep.subr.mxu0 0.0
          %4423 = vmatpush1.msra.mxu0 0.0
          %4424 = vmatprep.subr.mxu0 0.0
          %4425 = vmatpush1.msra.mxu0 0.0
          %4426 = vmatprep.subr.mxu0 0.0
          %4427 = vmatpush1.msra.mxu0 0.0
          %4428 = vmatprep.subr.mxu0 0.0
          %4429 = vmatpush1.msra.mxu0 0.0
          %4430 = vmatprep.subr.mxu0 0.0
          %4431 = vmatpush1.msra.mxu0 0.0
          %4432 = vmatprep.subr.mxu0 0.0
          %4433 = vmatpush1.msra.mxu0 0.0
          %4434 = vmatprep.subr.mxu0 0.0
          %4435 = vmatpush1.msra.mxu0 0.0
          %4436 = vmatprep.subr.mxu0 0.0
          %4437 = vmatpush1.msra.mxu0 0.0
          %4438 = vmatprep.subr.mxu0 0.0
          %4439 = vmatpush1.msra.mxu0 0.0
          %4440 = vmatprep.subr.mxu0 0.0
          %4441 = vmatpush1.msra.mxu0 0.0
          %4442 = vmatprep.subr.mxu0 0.0
          %4443 = vmatpush1.msra.mxu0 0.0
          %4444 = vmatprep.subr.mxu0 0.0
          %4445 = vmatpush1.msra.mxu0 0.0
          %4446 = vmatprep.subr.mxu0 0.0
          %4447 = vmatpush1.msra.mxu0 0.0
          %4448 = vmatprep.subr.mxu0 0.0
          %4449 = vmatpush1.msra.mxu0 0.0
          %4450 = vmatprep.subr.mxu0 0.0
          %4451 = vmatpush1.msra.mxu0 0.0
          %4452 = vmatprep.subr.mxu0 0.0
          %4453 = vmatpush1.msra.mxu0 0.0
          %4454 = vmatprep.subr.mxu0 0.0
          %4455 = vmatpush1.msra.mxu0 0.0
          %4456 = vmatprep.subr.mxu0 0.0
          %4457 = vmatpush1.msra.mxu0 0.0
          %4458 = vmatprep.subr.mxu0 0.0
          %4459 = vmatpush1.msra.mxu0 0.0
          %4460 = vmatprep.subr.mxu0 0.0
          %4461 = vmatpush1.msra.mxu0 0.0
          %4462 = vmatprep.mubr.f32.mxu0 0.0
          %4463 = vmatmul.mubr.f32.gmra.mrb[0].mxu0 %v4392
          %v4464 = vpop.f32.mrb[0].mxu0
          %v4465 = vadd.f32 0.0, %v4464
          %v4466 = vpop.f32.mrb[0].mxu0
          %4467 = vmatprep.mubr.f32.mxu0 0.0
          %4468 = vmatmul.mubr.f32.gmra.mrb[0].mxu0 %v4394
          %v4469 = vpop.f32.mrb[0].mxu0
          %v4470 = vadd.f32 0.0, %v4469
          %v4471 = vpop.f32.mrb[0].mxu0
          %4472 = vmatprep.mubr.f32.mxu0 0.0
          %4473 = vmatmul.mubr.f32.gmra.mrb[0].mxu0 %v4396
          %v4474 = vpop.f32.mrb[0].mxu0
          %v4475 = vadd.f32 0.0, %v4474
          %v4476 = vpop.f32.mrb[0].mxu0
          %4477 = vdwg.mxu0
          %v4481 = vcombine.high %v4465, %v4465
          %v4482 = vcombine.high %v4470, %v4470
          %v4483 = vcombine.high %v4475, %v4475
          %v4485 = vcombine.low %v4465, %v4481
          %v4486 = vcombine.low %v4482, %v4475
          %4489 = vst [vmem:[%s22] sm:$0xff] %v4485
          %4490 = vst [vmem:[%s22 + $0x8] sm:$0xf] %v4470
          %4491 = vst [vmem:[%s22 + $0x10] sm:$0xff] %v4486
          %4492 = vst [vmem:[%s22 + $0x18] sm:$0xf] %v4483
        $region136: #{encode_forward.1} parent=107 // pred_fallthru
          _
        // Predicated region
        $region137: #{encode_forward.1} parent=107 // pred_check
          %p4493 = pneg %p570
        $region138: #{encode_forward.1} parent=107 // pred_check_branch
          %4495 = sbr.rel (%p4493) target = $region140
        $region139: #{encode_forward.1} parent=107 // pred_region
          _
        $region140: #{encode_forward.1} parent=107 // pred_fallthru
          _
        // Predicated region
        $region141: #{encode_forward.1} parent=107 // pred_check
          %p4496 = pneg %p570
        $region142: #{encode_forward.1} parent=107 // pred_check_branch
          %4498 = sbr.rel (%p4496) target = $region144
        $region143: #{encode_forward.1} parent=107 // pred_region
          _
        $region144: #{encode_forward.1} parent=107 // pred_fallthru
          _
      $region108: #{encode_forward.1} parent=5 // pred_fallthru
        _
      %p4499 = scmp.le.s32.totalorder 2, %s30
      // Predicated region
      $region145: #{encode_forward.1} parent=5 // pred_check
        %p4500 = pneg %p4499
      $region146: #{encode_forward.1} parent=5 // pred_check_branch
        %4502 = sbr.rel (%p4500) target = $region148
      $region147: #{encode_forward.1} parent=5 // pred_region
        %s4503 = ssub.s32 %s30, 2
      $region148: #{encode_forward.1} parent=5 // pred_fallthru
        _
    $region6: #{encode_forward.1} parent=1 // loop_footer
      %s34 = sadd.s32 1, %s30
    $region7: #{encode_forward.1} parent=1 // loop_footer_branch
      %29 = sbr.rel target = $region3
    $region8: #{encode_forward.1} parent=1 // loop_exit
      _
    %4504 = vsyncpa [#allocation4], 1
    %s4505 = scalar_lea.sflag [#allocation4], 1
    %4506 = vsyncpa %s4505, 1
    %4507 = vsyncpa [#allocation6], 1

</llo_original>
